<compile_context>
chip_gen: v7x
topology: tpu7x:2x2x1
jax: 0.10.0
libtpu: 0.0.40
codegen_flags: <defaults>
</compile_context>

<pallas_src>
import functools

import jax
import jax.numpy as jnp
from jax import lax
from jax.experimental import pallas as pl
from jax.experimental.pallas import tpu as pltpu

CIN = 1472
HID = 256
NCLS = 21
OUT_HW = 224
MAX_TILE_HW = 1024          # pixel-tile cap; f32 x tile at 1024 is ~5.75 MiB
MLP_VMEM_LIMIT = 48 << 20   # > v5e's 16 MiB default scope, < v7x's 64 MiB phys


# ---------------------------------------------------------------------------
# Kernel 1: fused normalization + 1x1-conv MLP, channel-first.
# Per (batch, pixel-tile):
#   logits = W3 @ relu(W2 @ relu(W1 @ (x*inv_std) + b1') + b2) + b3
# x streams in f32, is scaled in f32, then cast to bf16 for the MXU;
# accumulation is f32.
# ---------------------------------------------------------------------------
def _mlp_kernel(x_ref, inv_std_ref, w1_ref, b1_ref, w2_ref, b2_ref,
                w3_ref, b3_ref, o_ref):
    # Normalize in f32 (mean folded into b1), then cast to bf16 for the MXU.
    xb = (x_ref[0] * inv_std_ref[...]).astype(jnp.bfloat16)           # (CIN, thw)
    h1 = jnp.dot(w1_ref[...], xb, preferred_element_type=jnp.float32) + b1_ref[...]
    h1 = jnp.maximum(h1, 0.0).astype(jnp.bfloat16)                    # (HID, thw)
    h2 = jnp.dot(w2_ref[...], h1, preferred_element_type=jnp.float32) + b2_ref[...]
    h2 = jnp.maximum(h2, 0.0).astype(jnp.bfloat16)                    # (HID, thw)
    o = jnp.dot(w3_ref[...], h2, preferred_element_type=jnp.float32) + b3_ref[...]
    o_ref[0] = o.astype(o_ref.dtype)                                  # (NCLS, thw)


def _run_mlp(x3, inv_std, w1, b1, w2, b2, w3, b3, *, tile_hw):
    B, C, HW = x3.shape
    grid = (B, pl.cdiv(HW, tile_hw))           # ragged final tile is masked
    # Constant-index operands: resident in VMEM, single-buffered.
    resident = functools.partial(pl.BlockSpec,
                                 index_map=lambda b, j: (0, 0),
                                 pipeline_mode=pl.Buffered(1))
    return pl.pallas_call(
        _mlp_kernel,
        out_shape=jax.ShapeDtypeStruct((B, NCLS, HW), jnp.float32),
        grid_spec=pltpu.PrefetchScalarGridSpec(
            num_scalar_prefetch=0,
            grid=grid,
            in_specs=[
                pl.BlockSpec((1, C, tile_hw), lambda b, j: (b, 0, j)),
                resident((C, 1)),
                resident((HID, C)),
                resident((HID, 1)),
                resident((HID, HID)),
                resident((HID, 1)),
                resident((NCLS, HID)),
                resident((NCLS, 1)),
            ],
            out_specs=pl.BlockSpec((1, NCLS, tile_hw), lambda b, j: (b, 0, j)),
        ),
        compiler_params=pltpu.CompilerParams(
            dimension_semantics=("parallel", "parallel"),
            vmem_limit_bytes=MLP_VMEM_LIMIT),
    )(x3, inv_std, w1, b1, w2, b2, w3, b3)


# ---------------------------------------------------------------------------
# Kernel 2: bilinear upsample (align_corners=True).
# Grid = (B, NCLS // G).  Per step, for a group of G classes:
#   t   = L_(G*H, W) @ A_w^T                -> (G*H, 224)      (width pass)
#   out = (I_G ⊗ A_h)_(G*224, G*H) @ t      -> (G*224, 224)    (height pass)
# Both passes are single MXU matmuls; no per-class loop, no in-kernel reshape.
# ---------------------------------------------------------------------------
def _upsample_kernel(x_ref, awt_ref, khbd_ref, o_ref):
    t = jnp.dot(x_ref[0], awt_ref[...], preferred_element_type=jnp.float32)
    o = jnp.dot(khbd_ref[...], t, preferred_element_type=jnp.float32)
    o_ref[0] = o.astype(o_ref.dtype)


def _run_upsample(logits_rows, a_wT, kh_bd, *, group, h_in, w_in, out_dtype):
    # logits_rows: (B, NCLS*H, W) f32; a_wT: (W, 224); kh_bd: (G*224, G*H)
    B = logits_rows.shape[0]
    n_groups = NCLS // group
    resident = functools.partial(pl.BlockSpec,
                                 index_map=lambda b, g: (0, 0),
                                 pipeline_mode=pl.Buffered(1))
    out = pl.pallas_call(
        _upsample_kernel,
        out_shape=jax.ShapeDtypeStruct((B, NCLS * OUT_HW, OUT_HW), out_dtype),
        grid_spec=pltpu.PrefetchScalarGridSpec(
            num_scalar_prefetch=0,
            grid=(B, n_groups),
            in_specs=[
                pl.BlockSpec((1, group * h_in, w_in), lambda b, g: (b, g, 0)),
                resident((w_in, OUT_HW)),
                resident((group * OUT_HW, group * h_in)),
            ],
            out_specs=pl.BlockSpec((1, group * OUT_HW, OUT_HW),
                                   lambda b, g: (b, g, 0)),
        ),
        compiler_params=pltpu.CompilerParams(
            dimension_semantics=("parallel", "parallel")),
    )(logits_rows, a_wT, kh_bd)
    # Free metadata reshape of the HBM result to NCHW.
    return out.reshape(B, NCLS, OUT_HW, OUT_HW)


def _make_interp_matrix(out_size, in_size):
    # align_corners=True bilinear interpolation matrix (out_size, in_size).
    if in_size == 1:
        return jnp.ones((out_size, 1), jnp.float32)
    scale = (in_size - 1) / (out_size - 1)
    src = jnp.arange(out_size, dtype=jnp.float32) * scale
    i0 = jnp.clip(jnp.floor(src).astype(jnp.int32), 0, in_size - 1)
    i1 = jnp.clip(i0 + 1, 0, in_size - 1)
    frac = src - i0.astype(jnp.float32)
    cols = jnp.arange(in_size)
    a = ((cols[None, :] == i0[:, None]).astype(jnp.float32) * (1.0 - frac)[:, None]
         + (cols[None, :] == i1[:, None]).astype(jnp.float32) * frac[:, None])
    return a.astype(jnp.float32)


def _pick_class_group(h):
    # The (1, G*H, W) logits block needs G*H % 8 == 0 (sublane tiling rule);
    # if H is not 8-aligned, fall back to all 21 classes in one (full-dim,
    # exempt) block.
    return 7 if (7 * h) % 8 == 0 else NCLS


# ---------------------------------------------------------------------------
# Full forward (NCHW in, NCHW out, like the PyTorch module).
# Weights follow the PyTorch conv layout: w* is (C_out, C_in).
# ---------------------------------------------------------------------------
def dense_classifier_forward(x_nchw, params, *, out_dtype=jnp.float32):
    B, C, H, W = x_nchw.shape
    assert C == CIN
    HW = H * W

    # Fold the mean shift into b1 (f32, wrapper); the 1/std scale is applied
    # in-kernel in f32 so w1 is NOT rescaled before its bf16 cast.
    inv_std = (1.0 / params["std"]).astype(jnp.float32)                # (CIN,)
    b1f = params["b1"] - params["w1"] @ (params["mean"] * inv_std)     # (HID,)

    w1b = params["w1"].astype(jnp.bfloat16)
    w2b = params["w2"].astype(jnp.bfloat16)
    w3b = params["w3"].astype(jnp.bfloat16)

    x3 = x_nchw.reshape(B, CIN, HW)        # free reshape; x stays f32 in HBM

    args = (inv_std[:, None], w1b, b1f[:, None], w2b, params["b2"][:, None],
            w3b, params["b3"][:, None])

    # Small-feature-map regime: pack all images' pixels into one lane-dense
    # tile so the MXU N dim / store width are >= 128 (repack cost is tiny).
    packed = (B > 1) and (HW < 128) and (B * HW <= MAX_TILE_HW)
    if packed:
        xp = jnp.transpose(x3, (1, 0, 2)).reshape(1, CIN, B * HW)
        lp = _run_mlp(xp, *args, tile_hw=B * HW)                   # (1,NCLS,B*HW)
        logits = jnp.transpose(lp.reshape(NCLS, B, HW), (1, 0, 2))  # (B,NCLS,HW)
    else:
        tile_hw = HW if HW <= MAX_TILE_HW else MAX_TILE_HW
        logits = _run_mlp(x3, *args, tile_hw=tile_hw)              # (B,NCLS,HW)

    # Bilinear upsample to 224x224 (align_corners=True), separable matmuls.
    group = _pick_class_group(H)
    a_h = _make_interp_matrix(OUT_HW, H)                       # (224, H)
    a_wT = _make_interp_matrix(OUT_HW, W).T                    # (W, 224)
    kh_bd = jnp.kron(jnp.eye(group, dtype=jnp.float32), a_h)   # (G*224, G*H)
    logits_rows = logits.reshape(B, NCLS * H, W)               # free reshape
    return _run_upsample(logits_rows, a_wT, kh_bd, group=group,
                         h_in=H, w_in=W, out_dtype=out_dtype)


# ---------------------------------------------------------------------------
# Pure-JAX reference mirroring the PyTorch module (f32, highest precision).
# ---------------------------------------------------------------------------
def _reference_forward(x_nchw, params):
    hp = lax.Precision.HIGHEST
    mean = params["mean"][None, :, None, None]
    std = params["std"][None, :, None, None]
    xn = (x_nchw - mean) / std
    h1 = jax.nn.relu(jnp.einsum("bchw,oc->bohw", xn, params["w1"], precision=hp)
                     + params["b1"][None, :, None, None])
    h2 = jax.nn.relu(jnp.einsum("bchw,oc->bohw", h1, params["w2"], precision=hp)
                     + params["b2"][None, :, None, None])
    logits = (jnp.einsum("bchw,oc->bohw", h2, params["w3"], precision=hp)
              + params["b3"][None, :, None, None])
    a_h = _make_interp_matrix(OUT_HW, logits.shape[2])
    a_w = _make_interp_matrix(OUT_HW, logits.shape[3])
    return jnp.einsum("oh,bchw,pw->bcop", a_h, logits, a_w, precision=hp)


if __name__ == "__main__":
    B, H, W = 2, 8, 8
    key = jax.random.PRNGKey(0)
    ks = jax.random.split(key, 9)

    x = jax.random.normal(ks[0], (B, CIN, H, W), jnp.float32)
    params = {
        # mean/std stand in for features/mean_global.npy / std_global.npy
        "mean": jax.random.normal(ks[1], (CIN,), jnp.float32) * 0.1,
        "std": jax.random.uniform(ks[2], (CIN,), jnp.float32,
                                  minval=0.5, maxval=1.5),
        # PyTorch conv-style weight layout: (C_out, C_in)
        "w1": jax.random.normal(ks[3], (HID, CIN), jnp.float32) / jnp.sqrt(CIN),
        "b1": jax.random.normal(ks[4], (HID,), jnp.float32) * 0.01,
        "w2": jax.random.normal(ks[5], (HID, HID), jnp.float32) / jnp.sqrt(HID),
        "b2": jax.random.normal(ks[6], (HID,), jnp.float32) * 0.01,
        "w3": jax.random.normal(ks[7], (NCLS, HID), jnp.float32) / jnp.sqrt(HID),
        "b3": jax.random.normal(ks[8], (NCLS,), jnp.float32) * 0.01,
    }

    out = jax.block_until_ready(dense_classifier_forward(x, params))
    assert out.shape == (B, NCLS, OUT_HW, OUT_HW)

    ref = _reference_forward(x, params)
    # bf16 matmul operands (f32 accumulation) vs. a pure-f32 reference:
    # expected max abs error ~1e-2 on O(1) logits, hence the tolerance.
    max_err = float(jnp.max(jnp.abs(out - ref)))
    assert jnp.allclose(out, ref, atol=5e-2, rtol=5e-2), \
        f"mismatch vs JAX reference (max abs err {max_err})"

    print("KERNEL_OK")
</pallas_src>

<mosaic_0001>
module attributes {stable_mosaic.version = 11 : i64} {
  func.func @_mlp_kernel(%arg0: i32, %arg1: i32, %arg2: memref<1x1472x128xf32, #tpu.memory_space<vmem>>, %arg3: memref<1472x1xf32, #tpu.memory_space<vmem>>, %arg4: memref<256x1472xbf16, #tpu.memory_space<vmem>>, %arg5: memref<256x1xf32, #tpu.memory_space<vmem>>, %arg6: memref<256x256xbf16, #tpu.memory_space<vmem>>, %arg7: memref<256x1xf32, #tpu.memory_space<vmem>>, %arg8: memref<21x256xbf16, #tpu.memory_space<vmem>>, %arg9: memref<21x1xf32, #tpu.memory_space<vmem>>, %arg10: memref<1x21x128xf32, #tpu.memory_space<vmem>>) attributes {dimension_semantics = [#tpu.dimension_semantics<parallel>, #tpu.dimension_semantics<parallel>], iteration_bounds = array<i64: 1, 1>, scalar_prefetch = 0 : i64, scratch_operands = 0 : i64, tpu.core_type = #tpu.core_type<tc>, window_params = [{transform_indices = @transform_0, window_bounds = array<i64: 1, 1472, 128>}, {pipeline_mode = #tpu.pipeline_mode<synchronous>, transform_indices = @transform_1, window_bounds = array<i64: 1472, 1>}, {pipeline_mode = #tpu.pipeline_mode<synchronous>, transform_indices = @transform_2, window_bounds = array<i64: 256, 1472>}, {pipeline_mode = #tpu.pipeline_mode<synchronous>, transform_indices = @transform_3, window_bounds = array<i64: 256, 1>}, {pipeline_mode = #tpu.pipeline_mode<synchronous>, transform_indices = @transform_4, window_bounds = array<i64: 256, 256>}, {pipeline_mode = #tpu.pipeline_mode<synchronous>, transform_indices = @transform_5, window_bounds = array<i64: 256, 1>}, {pipeline_mode = #tpu.pipeline_mode<synchronous>, transform_indices = @transform_6, window_bounds = array<i64: 21, 256>}, {pipeline_mode = #tpu.pipeline_mode<synchronous>, transform_indices = @transform_7, window_bounds = array<i64: 21, 1>}, {transform_indices = @transform_8, window_bounds = array<i64: 1, 21, 128>}]} {
    %c0 = arith.constant 0 : index
    %c0_0 = arith.constant 0 : index
    %c0_1 = arith.constant 0 : index
    %0 = vector.load %arg2[%c0, %c0_0, %c0_1] : memref<1x1472x128xf32, #tpu.memory_space<vmem>>, vector<1x1472x128xf32>
    %1 = vector.shape_cast %0 : vector<1x1472x128xf32> to vector<1472x128xf32>
    %c0_2 = arith.constant 0 : index
    %c0_3 = arith.constant 0 : index
    %2 = vector.load %arg3[%c0_2, %c0_3] : memref<1472x1xf32, #tpu.memory_space<vmem>>, vector<1472x1xf32>
    %3 = vector.broadcast %2 : vector<1472x1xf32> to vector<1472x128xf32>
    %4 = arith.mulf %1, %3 : vector<1472x128xf32>
    %5 = arith.truncf %4 : vector<1472x128xf32> to vector<1472x128xbf16>
    %c0_4 = arith.constant 0 : index
    %c0_5 = arith.constant 0 : index
    %6 = vector.load %arg4[%c0_4, %c0_5] : memref<256x1472xbf16, #tpu.memory_space<vmem>>, vector<256x1472xbf16>
    %cst = arith.constant dense<0.000000e+00> : vector<256x128xf32>
    %7 = tpu.matmul %6, %5, %cst {dimension_numbers = #tpu.dot_dimension_numbers<[1], [0], [0], [1], [0, 0, 1, 1], [], []>} : vector<256x1472xbf16>, vector<1472x128xbf16>, vector<256x128xf32> -> vector<256x128xf32>
    %c0_6 = arith.constant 0 : index
    %c0_7 = arith.constant 0 : index
    %8 = vector.load %arg5[%c0_6, %c0_7] : memref<256x1xf32, #tpu.memory_space<vmem>>, vector<256x1xf32>
    %9 = vector.broadcast %8 : vector<256x1xf32> to vector<256x128xf32>
    %10 = arith.addf %7, %9 : vector<256x128xf32>
    %cst_8 = arith.constant 0.000000e+00 : f32
    %11 = vector.broadcast %cst_8 : f32 to vector<256x128xf32>
    %12 = arith.maximumf %10, %11 : vector<256x128xf32>
    %13 = arith.truncf %12 : vector<256x128xf32> to vector<256x128xbf16>
    %c0_9 = arith.constant 0 : index
    %c0_10 = arith.constant 0 : index
    %14 = vector.load %arg6[%c0_9, %c0_10] : memref<256x256xbf16, #tpu.memory_space<vmem>>, vector<256x256xbf16>
    %cst_11 = arith.constant dense<0.000000e+00> : vector<256x128xf32>
    %15 = tpu.matmul %14, %13, %cst_11 {dimension_numbers = #tpu.dot_dimension_numbers<[1], [0], [0], [1], [0, 0, 1, 1], [], []>} : vector<256x256xbf16>, vector<256x128xbf16>, vector<256x128xf32> -> vector<256x128xf32>
    %c0_12 = arith.constant 0 : index
    %c0_13 = arith.constant 0 : index
    %16 = vector.load %arg7[%c0_12, %c0_13] : memref<256x1xf32, #tpu.memory_space<vmem>>, vector<256x1xf32>
    %17 = vector.broadcast %16 : vector<256x1xf32> to vector<256x128xf32>
    %18 = arith.addf %15, %17 : vector<256x128xf32>
    %cst_14 = arith.constant 0.000000e+00 : f32
    %19 = vector.broadcast %cst_14 : f32 to vector<256x128xf32>
    %20 = arith.maximumf %18, %19 : vector<256x128xf32>
    %21 = arith.truncf %20 : vector<256x128xf32> to vector<256x128xbf16>
    %c0_15 = arith.constant 0 : index
    %c0_16 = arith.constant 0 : index
    %22 = vector.load %arg8[%c0_15, %c0_16] : memref<21x256xbf16, #tpu.memory_space<vmem>>, vector<21x256xbf16>
    %cst_17 = arith.constant dense<0.000000e+00> : vector<21x128xf32>
    %23 = tpu.matmul %22, %21, %cst_17 {dimension_numbers = #tpu.dot_dimension_numbers<[1], [0], [0], [1], [0, 0, 1, 1], [], []>} : vector<21x256xbf16>, vector<256x128xbf16>, vector<21x128xf32> -> vector<21x128xf32>
    %c0_18 = arith.constant 0 : index
    %c0_19 = arith.constant 0 : index
    %24 = vector.load %arg9[%c0_18, %c0_19] : memref<21x1xf32, #tpu.memory_space<vmem>>, vector<21x1xf32>
    %25 = vector.broadcast %24 : vector<21x1xf32> to vector<21x128xf32>
    %26 = arith.addf %23, %25 : vector<21x128xf32>
    %c0_20 = arith.constant 0 : index
    %c0_21 = arith.constant 0 : index
    %c0_22 = arith.constant 0 : index
    %27 = vector.load %arg10[%c0_20, %c0_21, %c0_22] : memref<1x21x128xf32, #tpu.memory_space<vmem>>, vector<1x21x128xf32>
    %28 = vector.shape_cast %27 : vector<1x21x128xf32> to vector<21x128xf32>
    %29 = vector.shape_cast %26 : vector<21x128xf32> to vector<1x21x128xf32>
    tpu.vector_store %arg10[%c0_20, %c0_21, %c0_22], %29 {strides = array<i32>} : memref<1x21x128xf32, #tpu.memory_space<vmem>>, vector<1x21x128xf32>,
    return
  }
  func.func @transform_0(%arg0: i32, %arg1: i32) -> (i32, i32, i32) {
    %c0_i32 = arith.constant 0 : i32
    %c0_i32_0 = arith.constant 0 : i32
    return %arg0, %c0_i32, %arg1 : i32, i32, i32
  }
  func.func @transform_1(%arg0: i32, %arg1: i32) -> (i32, i32) {
    %c0_i32 = arith.constant 0 : i32
    %c0_i32_0 = arith.constant 0 : i32
    %c0_i32_1 = arith.constant 0 : i32
    return %c0_i32, %c0_i32_0 : i32, i32
  }
  func.func @transform_2(%arg0: i32, %arg1: i32) -> (i32, i32) {
    %c0_i32 = arith.constant 0 : i32
    %c0_i32_0 = arith.constant 0 : i32
    %c0_i32_1 = arith.constant 0 : i32
    return %c0_i32, %c0_i32_0 : i32, i32
  }
  func.func @transform_3(%arg0: i32, %arg1: i32) -> (i32, i32) {
    %c0_i32 = arith.constant 0 : i32
    %c0_i32_0 = arith.constant 0 : i32
    %c0_i32_1 = arith.constant 0 : i32
    return %c0_i32, %c0_i32_0 : i32, i32
  }
  func.func @transform_4(%arg0: i32, %arg1: i32) -> (i32, i32) {
    %c0_i32 = arith.constant 0 : i32
    %c0_i32_0 = arith.constant 0 : i32
    %c0_i32_1 = arith.constant 0 : i32
    return %c0_i32, %c0_i32_0 : i32, i32
  }
  func.func @transform_5(%arg0: i32, %arg1: i32) -> (i32, i32) {
    %c0_i32 = arith.constant 0 : i32
    %c0_i32_0 = arith.constant 0 : i32
    %c0_i32_1 = arith.constant 0 : i32
    return %c0_i32, %c0_i32_0 : i32, i32
  }
  func.func @transform_6(%arg0: i32, %arg1: i32) -> (i32, i32) {
    %c0_i32 = arith.constant 0 : i32
    %c0_i32_0 = arith.constant 0 : i32
    %c0_i32_1 = arith.constant 0 : i32
    return %c0_i32, %c0_i32_0 : i32, i32
  }
  func.func @transform_7(%arg0: i32, %arg1: i32) -> (i32, i32) {
    %c0_i32 = arith.constant 0 : i32
    %c0_i32_0 = arith.constant 0 : i32
    %c0_i32_1 = arith.constant 0 : i32
    return %c0_i32, %c0_i32_0 : i32, i32
  }
  func.func @transform_8(%arg0: i32, %arg1: i32) -> (i32, i32, i32) {
    %c0_i32 = arith.constant 0 : i32
    %c0_i32_0 = arith.constant 0 : i32
    return %arg0, %c0_i32, %arg1 : i32, i32, i32
  }
}

</mosaic_0001>

<llo_original>
// kernel: tpu_custom_call.1
$region0: #{tpu_custom_call.1}
  #allocation0 [shape = 'u32[]', space=smem, size = 0x4, offset = 0x4, fixed_abs, tag = 'smem constant byte address 0x4 - core index']
  #allocation1 [shape = 'u32[144,128]{1,0:T(1,128)}', space=vmem, size = 0x12000, scoped, tag = 'internal scratch']
  %s0 = inlined_call_operand.vmem [shape: f32[1,1472,128], index: 0, kind: input, shape index: {}]
  %s1 = inlined_call_operand.vmem [shape: f32[1472,1], index: 1, kind: input, shape index: {}]
  %s2 = inlined_call_operand.vmem [shape: bf16[256,1472], index: 2, kind: input, shape index: {}]
  %s3 = inlined_call_operand.vmem [shape: f32[256,1], index: 3, kind: input, shape index: {}]
  %s4 = inlined_call_operand.vmem [shape: bf16[256,256], index: 4, kind: input, shape index: {}]
  %s5 = inlined_call_operand.vmem [shape: f32[256,1], index: 5, kind: input, shape index: {}]
  %s6 = inlined_call_operand.vmem [shape: bf16[21,256], index: 6, kind: input, shape index: {}]
  %s7 = inlined_call_operand.vmem [shape: f32[21,1], index: 7, kind: input, shape index: {}]
  %s8 = inlined_call_operand.vmem [shape: f32[1,21,128], index: 8, kind: output, shape index: {}]
  %s9 = sld [smem:[#allocation0]]
  $region42: #{tpu_custom_call.1} parent=0
    _
  %s11 = ssub.s32 1, %s9
  %s12 = scalar_select 0, %s11, %s9
  // Predicated region
  $region2: #{tpu_custom_call.1} parent=0 // pred_check
    _
  $region3: #{tpu_custom_call.1} parent=0 // pred_check_branch
    %14 = sbr.rel (0) target = $region5
  $region4: #{tpu_custom_call.1} parent=0 // pred_region
    _
  $region5: #{tpu_custom_call.1} parent=0 // pred_fallthru
    _
  // Predicated region
  $region6: #{tpu_custom_call.1} parent=0 // pred_check
    _
  $region7: #{tpu_custom_call.1} parent=0 // pred_check_branch
    %16 = sbr.rel (0) target = $region9
  $region8: #{tpu_custom_call.1} parent=0 // pred_region
    _
  $region9: #{tpu_custom_call.1} parent=0 // pred_fallthru
    _
  // Predicated region
  $region10: #{tpu_custom_call.1} parent=0 // pred_check
    _
  $region11: #{tpu_custom_call.1} parent=0 // pred_check_branch
    %18 = sbr.rel (0) target = $region13
  $region12: #{tpu_custom_call.1} parent=0 // pred_region
    _
  $region13: #{tpu_custom_call.1} parent=0 // pred_fallthru
    _
  // Predicated region
  $region14: #{tpu_custom_call.1} parent=0 // pred_check
    _
  $region15: #{tpu_custom_call.1} parent=0 // pred_check_branch
    %20 = sbr.rel (0) target = $region17
  $region16: #{tpu_custom_call.1} parent=0 // pred_region
    _
  $region17: #{tpu_custom_call.1} parent=0 // pred_fallthru
    _
  // Predicated region
  $region18: #{tpu_custom_call.1} parent=0 // pred_check
    _
  $region19: #{tpu_custom_call.1} parent=0 // pred_check_branch
    %22 = sbr.rel (0) target = $region21
  $region20: #{tpu_custom_call.1} parent=0 // pred_region
    _
  $region21: #{tpu_custom_call.1} parent=0 // pred_fallthru
    _
  // Predicated region
  $region22: #{tpu_custom_call.1} parent=0 // pred_check
    _
  $region23: #{tpu_custom_call.1} parent=0 // pred_check_branch
    %24 = sbr.rel (0) target = $region25
  $region24: #{tpu_custom_call.1} parent=0 // pred_region
    _
  $region25: #{tpu_custom_call.1} parent=0 // pred_fallthru
    _
  // Predicated region
  $region26: #{tpu_custom_call.1} parent=0 // pred_check
    _
  $region27: #{tpu_custom_call.1} parent=0 // pred_check_branch
    %26 = sbr.rel (0) target = $region29
  $region28: #{tpu_custom_call.1} parent=0 // pred_region
    _
  $region29: #{tpu_custom_call.1} parent=0 // pred_fallthru
    _
  // Predicated region
  $region30: #{tpu_custom_call.1} parent=0 // pred_check
    _
  $region31: #{tpu_custom_call.1} parent=0 // pred_check_branch
    %28 = sbr.rel (0) target = $region33
  $region32: #{tpu_custom_call.1} parent=0 // pred_region
    _
  $region33: #{tpu_custom_call.1} parent=0 // pred_fallthru
    _
  %v30 = vld [vmem:[%s0] sm:$0xff]
  %v31 = vld [vmem:[%s0 + $0x8] sm:$0xff]
  %v32 = vld [vmem:[%s0 + $0x10] sm:$0xff]
  %v33 = vld [vmem:[%s0 + $0x18] sm:$0xff]
  %v34 = vld [vmem:[%s0 + $0x20] sm:$0xff]
  %v35 = vld [vmem:[%s0 + $0x28] sm:$0xff]
  %v36 = vld [vmem:[%s0 + $0x30] sm:$0xff]
  %v37 = vld [vmem:[%s0 + $0x38] sm:$0xff]
  %v38 = vld [vmem:[%s0 + $0x40] sm:$0xff]
  %v39 = vld [vmem:[%s0 + $0x48] sm:$0xff]
  %v40 = vld [vmem:[%s0 + $0x50] sm:$0xff]
  %v41 = vld [vmem:[%s0 + $0x58] sm:$0xff]
  %v42 = vld [vmem:[%s0 + $0x60] sm:$0xff]
  %v43 = vld [vmem:[%s0 + $0x68] sm:$0xff]
  %v44 = vld [vmem:[%s0 + $0x70] sm:$0xff]
  %v45 = vld [vmem:[%s0 + $0x78] sm:$0xff]
  %v46 = vld [vmem:[%s0 + $0x80] sm:$0xff]
  %v47 = vld [vmem:[%s0 + $0x88] sm:$0xff]
  %v48 = vld [vmem:[%s0 + $0x90] sm:$0xff]
  %v49 = vld [vmem:[%s0 + $0x98] sm:$0xff]
  %v50 = vld [vmem:[%s0 + $0xa0] sm:$0xff]
  %v51 = vld [vmem:[%s0 + $0xa8] sm:$0xff]
  %v52 = vld [vmem:[%s0 + $0xb0] sm:$0xff]
  %v53 = vld [vmem:[%s0 + $0xb8] sm:$0xff]
  %v54 = vld [vmem:[%s0 + $0xc0] sm:$0xff]
  %v55 = vld [vmem:[%s0 + $0xc8] sm:$0xff]
  %v56 = vld [vmem:[%s0 + $0xd0] sm:$0xff]
  %v57 = vld [vmem:[%s0 + $0xd8] sm:$0xff]
  %v58 = vld [vmem:[%s0 + $0xe0] sm:$0xff]
  %v59 = vld [vmem:[%s0 + $0xe8] sm:$0xff]
  %v60 = vld [vmem:[%s0 + $0xf0] sm:$0xff]
  %v61 = vld [vmem:[%s0 + $0xf8] sm:$0xff]
  %v62 = vld [vmem:[%s0 + $0x100] sm:$0xff]
  %v63 = vld [vmem:[%s0 + $0x108] sm:$0xff]
  %v64 = vld [vmem:[%s0 + $0x110] sm:$0xff]
  %v65 = vld [vmem:[%s0 + $0x118] sm:$0xff]
  %v66 = vld [vmem:[%s0 + $0x120] sm:$0xff]
  %v67 = vld [vmem:[%s0 + $0x128] sm:$0xff]
  %v68 = vld [vmem:[%s0 + $0x130] sm:$0xff]
  %v69 = vld [vmem:[%s0 + $0x138] sm:$0xff]
  %v70 = vld [vmem:[%s0 + $0x140] sm:$0xff]
  %v71 = vld [vmem:[%s0 + $0x148] sm:$0xff]
  %v72 = vld [vmem:[%s0 + $0x150] sm:$0xff]
  %v73 = vld [vmem:[%s0 + $0x158] sm:$0xff]
  %v74 = vld [vmem:[%s0 + $0x160] sm:$0xff]
  %v75 = vld [vmem:[%s0 + $0x168] sm:$0xff]
  %v76 = vld [vmem:[%s0 + $0x170] sm:$0xff]
  %v77 = vld [vmem:[%s0 + $0x178] sm:$0xff]
  %v78 = vld [vmem:[%s0 + $0x180] sm:$0xff]
  %v79 = vld [vmem:[%s0 + $0x188] sm:$0xff]
  %v80 = vld [vmem:[%s0 + $0x190] sm:$0xff]
  %v81 = vld [vmem:[%s0 + $0x198] sm:$0xff]
  %v82 = vld [vmem:[%s0 + $0x1a0] sm:$0xff]
  %v83 = vld [vmem:[%s0 + $0x1a8] sm:$0xff]
  %v84 = vld [vmem:[%s0 + $0x1b0] sm:$0xff]
  %v85 = vld [vmem:[%s0 + $0x1b8] sm:$0xff]
  %v86 = vld [vmem:[%s0 + $0x1c0] sm:$0xff]
  %v87 = vld [vmem:[%s0 + $0x1c8] sm:$0xff]
  %v88 = vld [vmem:[%s0 + $0x1d0] sm:$0xff]
  %v89 = vld [vmem:[%s0 + $0x1d8] sm:$0xff]
  %v90 = vld [vmem:[%s0 + $0x1e0] sm:$0xff]
  %v91 = vld [vmem:[%s0 + $0x1e8] sm:$0xff]
  %v92 = vld [vmem:[%s0 + $0x1f0] sm:$0xff]
  %v93 = vld [vmem:[%s0 + $0x1f8] sm:$0xff]
  %v94 = vld [vmem:[%s0 + $0x200] sm:$0xff]
  %v95 = vld [vmem:[%s0 + $0x208] sm:$0xff]
  %v96 = vld [vmem:[%s0 + $0x210] sm:$0xff]
  %v97 = vld [vmem:[%s0 + $0x218] sm:$0xff]
  %v98 = vld [vmem:[%s0 + $0x220] sm:$0xff]
  %v99 = vld [vmem:[%s0 + $0x228] sm:$0xff]
  %v100 = vld [vmem:[%s0 + $0x230] sm:$0xff]
  %v101 = vld [vmem:[%s0 + $0x238] sm:$0xff]
  %v102 = vld [vmem:[%s0 + $0x240] sm:$0xff]
  %v103 = vld [vmem:[%s0 + $0x248] sm:$0xff]
  %v104 = vld [vmem:[%s0 + $0x250] sm:$0xff]
  %v105 = vld [vmem:[%s0 + $0x258] sm:$0xff]
  %v106 = vld [vmem:[%s0 + $0x260] sm:$0xff]
  %v107 = vld [vmem:[%s0 + $0x268] sm:$0xff]
  %v108 = vld [vmem:[%s0 + $0x270] sm:$0xff]
  %v109 = vld [vmem:[%s0 + $0x278] sm:$0xff]
  %v110 = vld [vmem:[%s0 + $0x280] sm:$0xff]
  %v111 = vld [vmem:[%s0 + $0x288] sm:$0xff]
  %v112 = vld [vmem:[%s0 + $0x290] sm:$0xff]
  %v113 = vld [vmem:[%s0 + $0x298] sm:$0xff]
  %v114 = vld [vmem:[%s0 + $0x2a0] sm:$0xff]
  %v115 = vld [vmem:[%s0 + $0x2a8] sm:$0xff]
  %v116 = vld [vmem:[%s0 + $0x2b0] sm:$0xff]
  %v117 = vld [vmem:[%s0 + $0x2b8] sm:$0xff]
  %v118 = vld [vmem:[%s0 + $0x2c0] sm:$0xff]
  %v119 = vld [vmem:[%s0 + $0x2c8] sm:$0xff]
  %v120 = vld [vmem:[%s0 + $0x2d0] sm:$0xff]
  %v121 = vld [vmem:[%s0 + $0x2d8] sm:$0xff]
  %v122 = vld [vmem:[%s0 + $0x2e0] sm:$0xff]
  %v123 = vld [vmem:[%s0 + $0x2e8] sm:$0xff]
  %v124 = vld [vmem:[%s0 + $0x2f0] sm:$0xff]
  %v125 = vld [vmem:[%s0 + $0x2f8] sm:$0xff]
  %v126 = vld [vmem:[%s0 + $0x300] sm:$0xff]
  %v127 = vld [vmem:[%s0 + $0x308] sm:$0xff]
  %v128 = vld [vmem:[%s0 + $0x310] sm:$0xff]
  %v129 = vld [vmem:[%s0 + $0x318] sm:$0xff]
  %v130 = vld [vmem:[%s0 + $0x320] sm:$0xff]
  %v131 = vld [vmem:[%s0 + $0x328] sm:$0xff]
  %v132 = vld [vmem:[%s0 + $0x330] sm:$0xff]
  %v133 = vld [vmem:[%s0 + $0x338] sm:$0xff]
  %v134 = vld [vmem:[%s0 + $0x340] sm:$0xff]
  %v135 = vld [vmem:[%s0 + $0x348] sm:$0xff]
  %v136 = vld [vmem:[%s0 + $0x350] sm:$0xff]
  %v137 = vld [vmem:[%s0 + $0x358] sm:$0xff]
  %v138 = vld [vmem:[%s0 + $0x360] sm:$0xff]
  %v139 = vld [vmem:[%s0 + $0x368] sm:$0xff]
  %v140 = vld [vmem:[%s0 + $0x370] sm:$0xff]
  %v141 = vld [vmem:[%s0 + $0x378] sm:$0xff]
  %v142 = vld [vmem:[%s0 + $0x380] sm:$0xff]
  %v143 = vld [vmem:[%s0 + $0x388] sm:$0xff]
  %v144 = vld [vmem:[%s0 + $0x390] sm:$0xff]
  %v145 = vld [vmem:[%s0 + $0x398] sm:$0xff]
  %v146 = vld [vmem:[%s0 + $0x3a0] sm:$0xff]
  %v147 = vld [vmem:[%s0 + $0x3a8] sm:$0xff]
  %v148 = vld [vmem:[%s0 + $0x3b0] sm:$0xff]
  %v149 = vld [vmem:[%s0 + $0x3b8] sm:$0xff]
  %v150 = vld [vmem:[%s0 + $0x3c0] sm:$0xff]
  %v151 = vld [vmem:[%s0 + $0x3c8] sm:$0xff]
  %v152 = vld [vmem:[%s0 + $0x3d0] sm:$0xff]
  %v153 = vld [vmem:[%s0 + $0x3d8] sm:$0xff]
  %v154 = vld [vmem:[%s0 + $0x3e0] sm:$0xff]
  %v155 = vld [vmem:[%s0 + $0x3e8] sm:$0xff]
  %v156 = vld [vmem:[%s0 + $0x3f0] sm:$0xff]
  %v157 = vld [vmem:[%s0 + $0x3f8] sm:$0xff]
  %v158 = vld [vmem:[%s0 + $0x400] sm:$0xff]
  %v159 = vld [vmem:[%s0 + $0x408] sm:$0xff]
  %v160 = vld [vmem:[%s0 + $0x410] sm:$0xff]
  %v161 = vld [vmem:[%s0 + $0x418] sm:$0xff]
  %v162 = vld [vmem:[%s0 + $0x420] sm:$0xff]
  %v163 = vld [vmem:[%s0 + $0x428] sm:$0xff]
  %v164 = vld [vmem:[%s0 + $0x430] sm:$0xff]
  %v165 = vld [vmem:[%s0 + $0x438] sm:$0xff]
  %v166 = vld [vmem:[%s0 + $0x440] sm:$0xff]
  %v167 = vld [vmem:[%s0 + $0x448] sm:$0xff]
  %v168 = vld [vmem:[%s0 + $0x450] sm:$0xff]
  %v169 = vld [vmem:[%s0 + $0x458] sm:$0xff]
  %v170 = vld [vmem:[%s0 + $0x460] sm:$0xff]
  %v171 = vld [vmem:[%s0 + $0x468] sm:$0xff]
  %v172 = vld [vmem:[%s0 + $0x470] sm:$0xff]
  %v173 = vld [vmem:[%s0 + $0x478] sm:$0xff]
  %v174 = vld [vmem:[%s0 + $0x480] sm:$0xff]
  %v175 = vld [vmem:[%s0 + $0x488] sm:$0xff]
  %v176 = vld [vmem:[%s0 + $0x490] sm:$0xff]
  %v177 = vld [vmem:[%s0 + $0x498] sm:$0xff]
  %v178 = vld [vmem:[%s0 + $0x4a0] sm:$0xff]
  %v179 = vld [vmem:[%s0 + $0x4a8] sm:$0xff]
  %v180 = vld [vmem:[%s0 + $0x4b0] sm:$0xff]
  %v181 = vld [vmem:[%s0 + $0x4b8] sm:$0xff]
  %v182 = vld [vmem:[%s0 + $0x4c0] sm:$0xff]
  %v183 = vld [vmem:[%s0 + $0x4c8] sm:$0xff]
  %v184 = vld [vmem:[%s0 + $0x4d0] sm:$0xff]
  %v185 = vld [vmem:[%s0 + $0x4d8] sm:$0xff]
  %v186 = vld [vmem:[%s0 + $0x4e0] sm:$0xff]
  %v187 = vld [vmem:[%s0 + $0x4e8] sm:$0xff]
  %v188 = vld [vmem:[%s0 + $0x4f0] sm:$0xff]
  %v189 = vld [vmem:[%s0 + $0x4f8] sm:$0xff]
  %v190 = vld [vmem:[%s0 + $0x500] sm:$0xff]
  %v191 = vld [vmem:[%s0 + $0x508] sm:$0xff]
  %v192 = vld [vmem:[%s0 + $0x510] sm:$0xff]
  %v193 = vld [vmem:[%s0 + $0x518] sm:$0xff]
  %v194 = vld [vmem:[%s0 + $0x520] sm:$0xff]
  %v195 = vld [vmem:[%s0 + $0x528] sm:$0xff]
  %v196 = vld [vmem:[%s0 + $0x530] sm:$0xff]
  %v197 = vld [vmem:[%s0 + $0x538] sm:$0xff]
  %v198 = vld [vmem:[%s0 + $0x540] sm:$0xff]
  %v199 = vld [vmem:[%s0 + $0x548] sm:$0xff]
  %v200 = vld [vmem:[%s0 + $0x550] sm:$0xff]
  %v201 = vld [vmem:[%s0 + $0x558] sm:$0xff]
  %v202 = vld [vmem:[%s0 + $0x560] sm:$0xff]
  %v203 = vld [vmem:[%s0 + $0x568] sm:$0xff]
  %v204 = vld [vmem:[%s0 + $0x570] sm:$0xff]
  %v205 = vld [vmem:[%s0 + $0x578] sm:$0xff]
  %v206 = vld [vmem:[%s0 + $0x580] sm:$0xff]
  %v207 = vld [vmem:[%s0 + $0x588] sm:$0xff]
  %v208 = vld [vmem:[%s0 + $0x590] sm:$0xff]
  %v209 = vld [vmem:[%s0 + $0x598] sm:$0xff]
  %v210 = vld [vmem:[%s0 + $0x5a0] sm:$0xff]
  %v211 = vld [vmem:[%s0 + $0x5a8] sm:$0xff]
  %v212 = vld [vmem:[%s0 + $0x5b0] sm:$0xff]
  %v213 = vld [vmem:[%s0 + $0x5b8] sm:$0xff]
  %v214 = vld [vmem:[%s1] sm:$0xff]
  %v215 = vld [vmem:[%s1 + $0x8] sm:$0xff]
  %v216 = vld [vmem:[%s1 + $0x10] sm:$0xff]
  %v217 = vld [vmem:[%s1 + $0x18] sm:$0xff]
  %v218 = vld [vmem:[%s1 + $0x20] sm:$0xff]
  %v219 = vld [vmem:[%s1 + $0x28] sm:$0xff]
  %v220 = vld [vmem:[%s1 + $0x30] sm:$0xff]
  %v221 = vld [vmem:[%s1 + $0x38] sm:$0xff]
  %v222 = vld [vmem:[%s1 + $0x40] sm:$0xff]
  %v223 = vld [vmem:[%s1 + $0x48] sm:$0xff]
  %v224 = vld [vmem:[%s1 + $0x50] sm:$0xff]
  %v225 = vld [vmem:[%s1 + $0x58] sm:$0xff]
  %v226 = vld [vmem:[%s1 + $0x60] sm:$0xff]
  %v227 = vld [vmem:[%s1 + $0x68] sm:$0xff]
  %v228 = vld [vmem:[%s1 + $0x70] sm:$0xff]
  %v229 = vld [vmem:[%s1 + $0x78] sm:$0xff]
  %v230 = vld [vmem:[%s1 + $0x80] sm:$0xff]
  %v231 = vld [vmem:[%s1 + $0x88] sm:$0xff]
  %v232 = vld [vmem:[%s1 + $0x90] sm:$0xff]
  %v233 = vld [vmem:[%s1 + $0x98] sm:$0xff]
  %v234 = vld [vmem:[%s1 + $0xa0] sm:$0xff]
  %v235 = vld [vmem:[%s1 + $0xa8] sm:$0xff]
  %v236 = vld [vmem:[%s1 + $0xb0] sm:$0xff]
  %v237 = vld [vmem:[%s1 + $0xb8] sm:$0xff]
  %v238 = vld [vmem:[%s1 + $0xc0] sm:$0xff]
  %v239 = vld [vmem:[%s1 + $0xc8] sm:$0xff]
  %v240 = vld [vmem:[%s1 + $0xd0] sm:$0xff]
  %v241 = vld [vmem:[%s1 + $0xd8] sm:$0xff]
  %v242 = vld [vmem:[%s1 + $0xe0] sm:$0xff]
  %v243 = vld [vmem:[%s1 + $0xe8] sm:$0xff]
  %v244 = vld [vmem:[%s1 + $0xf0] sm:$0xff]
  %v245 = vld [vmem:[%s1 + $0xf8] sm:$0xff]
  %v246 = vld [vmem:[%s1 + $0x100] sm:$0xff]
  %v247 = vld [vmem:[%s1 + $0x108] sm:$0xff]
  %v248 = vld [vmem:[%s1 + $0x110] sm:$0xff]
  %v249 = vld [vmem:[%s1 + $0x118] sm:$0xff]
  %v250 = vld [vmem:[%s1 + $0x120] sm:$0xff]
  %v251 = vld [vmem:[%s1 + $0x128] sm:$0xff]
  %v252 = vld [vmem:[%s1 + $0x130] sm:$0xff]
  %v253 = vld [vmem:[%s1 + $0x138] sm:$0xff]
  %v254 = vld [vmem:[%s1 + $0x140] sm:$0xff]
  %v255 = vld [vmem:[%s1 + $0x148] sm:$0xff]
  %v256 = vld [vmem:[%s1 + $0x150] sm:$0xff]
  %v257 = vld [vmem:[%s1 + $0x158] sm:$0xff]
  %v258 = vld [vmem:[%s1 + $0x160] sm:$0xff]
  %v259 = vld [vmem:[%s1 + $0x168] sm:$0xff]
  %v260 = vld [vmem:[%s1 + $0x170] sm:$0xff]
  %v261 = vld [vmem:[%s1 + $0x178] sm:$0xff]
  %v262 = vld [vmem:[%s1 + $0x180] sm:$0xff]
  %v263 = vld [vmem:[%s1 + $0x188] sm:$0xff]
  %v264 = vld [vmem:[%s1 + $0x190] sm:$0xff]
  %v265 = vld [vmem:[%s1 + $0x198] sm:$0xff]
  %v266 = vld [vmem:[%s1 + $0x1a0] sm:$0xff]
  %v267 = vld [vmem:[%s1 + $0x1a8] sm:$0xff]
  %v268 = vld [vmem:[%s1 + $0x1b0] sm:$0xff]
  %v269 = vld [vmem:[%s1 + $0x1b8] sm:$0xff]
  %v270 = vld [vmem:[%s1 + $0x1c0] sm:$0xff]
  %v271 = vld [vmem:[%s1 + $0x1c8] sm:$0xff]
  %v272 = vld [vmem:[%s1 + $0x1d0] sm:$0xff]
  %v273 = vld [vmem:[%s1 + $0x1d8] sm:$0xff]
  %v274 = vld [vmem:[%s1 + $0x1e0] sm:$0xff]
  %v275 = vld [vmem:[%s1 + $0x1e8] sm:$0xff]
  %v276 = vld [vmem:[%s1 + $0x1f0] sm:$0xff]
  %v277 = vld [vmem:[%s1 + $0x1f8] sm:$0xff]
  %v278 = vld [vmem:[%s1 + $0x200] sm:$0xff]
  %v279 = vld [vmem:[%s1 + $0x208] sm:$0xff]
  %v280 = vld [vmem:[%s1 + $0x210] sm:$0xff]
  %v281 = vld [vmem:[%s1 + $0x218] sm:$0xff]
  %v282 = vld [vmem:[%s1 + $0x220] sm:$0xff]
  %v283 = vld [vmem:[%s1 + $0x228] sm:$0xff]
  %v284 = vld [vmem:[%s1 + $0x230] sm:$0xff]
  %v285 = vld [vmem:[%s1 + $0x238] sm:$0xff]
  %v286 = vld [vmem:[%s1 + $0x240] sm:$0xff]
  %v287 = vld [vmem:[%s1 + $0x248] sm:$0xff]
  %v288 = vld [vmem:[%s1 + $0x250] sm:$0xff]
  %v289 = vld [vmem:[%s1 + $0x258] sm:$0xff]
  %v290 = vld [vmem:[%s1 + $0x260] sm:$0xff]
  %v291 = vld [vmem:[%s1 + $0x268] sm:$0xff]
  %v292 = vld [vmem:[%s1 + $0x270] sm:$0xff]
  %v293 = vld [vmem:[%s1 + $0x278] sm:$0xff]
  %v294 = vld [vmem:[%s1 + $0x280] sm:$0xff]
  %v295 = vld [vmem:[%s1 + $0x288] sm:$0xff]
  %v296 = vld [vmem:[%s1 + $0x290] sm:$0xff]
  %v297 = vld [vmem:[%s1 + $0x298] sm:$0xff]
  %v298 = vld [vmem:[%s1 + $0x2a0] sm:$0xff]
  %v299 = vld [vmem:[%s1 + $0x2a8] sm:$0xff]
  %v300 = vld [vmem:[%s1 + $0x2b0] sm:$0xff]
  %v301 = vld [vmem:[%s1 + $0x2b8] sm:$0xff]
  %v302 = vld [vmem:[%s1 + $0x2c0] sm:$0xff]
  %v303 = vld [vmem:[%s1 + $0x2c8] sm:$0xff]
  %v304 = vld [vmem:[%s1 + $0x2d0] sm:$0xff]
  %v305 = vld [vmem:[%s1 + $0x2d8] sm:$0xff]
  %v306 = vld [vmem:[%s1 + $0x2e0] sm:$0xff]
  %v307 = vld [vmem:[%s1 + $0x2e8] sm:$0xff]
  %v308 = vld [vmem:[%s1 + $0x2f0] sm:$0xff]
  %v309 = vld [vmem:[%s1 + $0x2f8] sm:$0xff]
  %v310 = vld [vmem:[%s1 + $0x300] sm:$0xff]
  %v311 = vld [vmem:[%s1 + $0x308] sm:$0xff]
  %v312 = vld [vmem:[%s1 + $0x310] sm:$0xff]
  %v313 = vld [vmem:[%s1 + $0x318] sm:$0xff]
  %v314 = vld [vmem:[%s1 + $0x320] sm:$0xff]
  %v315 = vld [vmem:[%s1 + $0x328] sm:$0xff]
  %v316 = vld [vmem:[%s1 + $0x330] sm:$0xff]
  %v317 = vld [vmem:[%s1 + $0x338] sm:$0xff]
  %v318 = vld [vmem:[%s1 + $0x340] sm:$0xff]
  %v319 = vld [vmem:[%s1 + $0x348] sm:$0xff]
  %v320 = vld [vmem:[%s1 + $0x350] sm:$0xff]
  %v321 = vld [vmem:[%s1 + $0x358] sm:$0xff]
  %v322 = vld [vmem:[%s1 + $0x360] sm:$0xff]
  %v323 = vld [vmem:[%s1 + $0x368] sm:$0xff]
  %v324 = vld [vmem:[%s1 + $0x370] sm:$0xff]
  %v325 = vld [vmem:[%s1 + $0x378] sm:$0xff]
  %v326 = vld [vmem:[%s1 + $0x380] sm:$0xff]
  %v327 = vld [vmem:[%s1 + $0x388] sm:$0xff]
  %v328 = vld [vmem:[%s1 + $0x390] sm:$0xff]
  %v329 = vld [vmem:[%s1 + $0x398] sm:$0xff]
  %v330 = vld [vmem:[%s1 + $0x3a0] sm:$0xff]
  %v331 = vld [vmem:[%s1 + $0x3a8] sm:$0xff]
  %v332 = vld [vmem:[%s1 + $0x3b0] sm:$0xff]
  %v333 = vld [vmem:[%s1 + $0x3b8] sm:$0xff]
  %v334 = vld [vmem:[%s1 + $0x3c0] sm:$0xff]
  %v335 = vld [vmem:[%s1 + $0x3c8] sm:$0xff]
  %v336 = vld [vmem:[%s1 + $0x3d0] sm:$0xff]
  %v337 = vld [vmem:[%s1 + $0x3d8] sm:$0xff]
  %v338 = vld [vmem:[%s1 + $0x3e0] sm:$0xff]
  %v339 = vld [vmem:[%s1 + $0x3e8] sm:$0xff]
  %v340 = vld [vmem:[%s1 + $0x3f0] sm:$0xff]
  %v341 = vld [vmem:[%s1 + $0x3f8] sm:$0xff]
  %v342 = vld [vmem:[%s1 + $0x400] sm:$0xff]
  %v343 = vld [vmem:[%s1 + $0x408] sm:$0xff]
  %v344 = vld [vmem:[%s1 + $0x410] sm:$0xff]
  %v345 = vld [vmem:[%s1 + $0x418] sm:$0xff]
  %v346 = vld [vmem:[%s1 + $0x420] sm:$0xff]
  %v347 = vld [vmem:[%s1 + $0x428] sm:$0xff]
  %v348 = vld [vmem:[%s1 + $0x430] sm:$0xff]
  %v349 = vld [vmem:[%s1 + $0x438] sm:$0xff]
  %v350 = vld [vmem:[%s1 + $0x440] sm:$0xff]
  %v351 = vld [vmem:[%s1 + $0x448] sm:$0xff]
  %v352 = vld [vmem:[%s1 + $0x450] sm:$0xff]
  %v353 = vld [vmem:[%s1 + $0x458] sm:$0xff]
  %v354 = vld [vmem:[%s1 + $0x460] sm:$0xff]
  %v355 = vld [vmem:[%s1 + $0x468] sm:$0xff]
  %v356 = vld [vmem:[%s1 + $0x470] sm:$0xff]
  %v357 = vld [vmem:[%s1 + $0x478] sm:$0xff]
  %v358 = vld [vmem:[%s1 + $0x480] sm:$0xff]
  %v359 = vld [vmem:[%s1 + $0x488] sm:$0xff]
  %v360 = vld [vmem:[%s1 + $0x490] sm:$0xff]
  %v361 = vld [vmem:[%s1 + $0x498] sm:$0xff]
  %v362 = vld [vmem:[%s1 + $0x4a0] sm:$0xff]
  %v363 = vld [vmem:[%s1 + $0x4a8] sm:$0xff]
  %v364 = vld [vmem:[%s1 + $0x4b0] sm:$0xff]
  %v365 = vld [vmem:[%s1 + $0x4b8] sm:$0xff]
  %v366 = vld [vmem:[%s1 + $0x4c0] sm:$0xff]
  %v367 = vld [vmem:[%s1 + $0x4c8] sm:$0xff]
  %v368 = vld [vmem:[%s1 + $0x4d0] sm:$0xff]
  %v369 = vld [vmem:[%s1 + $0x4d8] sm:$0xff]
  %v370 = vld [vmem:[%s1 + $0x4e0] sm:$0xff]
  %v371 = vld [vmem:[%s1 + $0x4e8] sm:$0xff]
  %v372 = vld [vmem:[%s1 + $0x4f0] sm:$0xff]
  %v373 = vld [vmem:[%s1 + $0x4f8] sm:$0xff]
  %v374 = vld [vmem:[%s1 + $0x500] sm:$0xff]
  %v375 = vld [vmem:[%s1 + $0x508] sm:$0xff]
  %v376 = vld [vmem:[%s1 + $0x510] sm:$0xff]
  %v377 = vld [vmem:[%s1 + $0x518] sm:$0xff]
  %v378 = vld [vmem:[%s1 + $0x520] sm:$0xff]
  %v379 = vld [vmem:[%s1 + $0x528] sm:$0xff]
  %v380 = vld [vmem:[%s1 + $0x530] sm:$0xff]
  %v381 = vld [vmem:[%s1 + $0x538] sm:$0xff]
  %v382 = vld [vmem:[%s1 + $0x540] sm:$0xff]
  %v383 = vld [vmem:[%s1 + $0x548] sm:$0xff]
  %v384 = vld [vmem:[%s1 + $0x550] sm:$0xff]
  %v385 = vld [vmem:[%s1 + $0x558] sm:$0xff]
  %v386 = vld [vmem:[%s1 + $0x560] sm:$0xff]
  %v387 = vld [vmem:[%s1 + $0x568] sm:$0xff]
  %v388 = vld [vmem:[%s1 + $0x570] sm:$0xff]
  %v389 = vld [vmem:[%s1 + $0x578] sm:$0xff]
  %v390 = vld [vmem:[%s1 + $0x580] sm:$0xff]
  %v391 = vld [vmem:[%s1 + $0x588] sm:$0xff]
  %v392 = vld [vmem:[%s1 + $0x590] sm:$0xff]
  %v393 = vld [vmem:[%s1 + $0x598] sm:$0xff]
  %v394 = vld [vmem:[%s1 + $0x5a0] sm:$0xff]
  %v395 = vld [vmem:[%s1 + $0x5a8] sm:$0xff]
  %v396 = vld [vmem:[%s1 + $0x5b0] sm:$0xff]
  %v397 = vld [vmem:[%s1 + $0x5b8] sm:$0xff]
  %399 = vset.pattern.permute.xlu0 0
  %400 = vperm.xlu0 %399, %v214
  %v401 = vpop.permute.xlu0 %400
  %404 = vset.pattern.permute.xlu0 0
  %405 = vperm.xlu0 %404, %v215
  %v406 = vpop.permute.xlu0 %405
  %409 = vset.pattern.permute.xlu0 0
  %410 = vperm.xlu0 %409, %v216
  %v411 = vpop.permute.xlu0 %410
  %414 = vset.pattern.permute.xlu0 0
  %415 = vperm.xlu0 %414, %v217
  %v416 = vpop.permute.xlu0 %415
  %419 = vset.pattern.permute.xlu0 0
  %420 = vperm.xlu0 %419, %v218
  %v421 = vpop.permute.xlu0 %420
  %424 = vset.pattern.permute.xlu0 0
  %425 = vperm.xlu0 %424, %v219
  %v426 = vpop.permute.xlu0 %425
  %429 = vset.pattern.permute.xlu0 0
  %430 = vperm.xlu0 %429, %v220
  %v431 = vpop.permute.xlu0 %430
  %434 = vset.pattern.permute.xlu0 0
  %435 = vperm.xlu0 %434, %v221
  %v436 = vpop.permute.xlu0 %435
  %439 = vset.pattern.permute.xlu0 0
  %440 = vperm.xlu0 %439, %v222
  %v441 = vpop.permute.xlu0 %440
  %444 = vset.pattern.permute.xlu0 0
  %445 = vperm.xlu0 %444, %v223
  %v446 = vpop.permute.xlu0 %445
  %449 = vset.pattern.permute.xlu0 0
  %450 = vperm.xlu0 %449, %v224
  %v451 = vpop.permute.xlu0 %450
  %454 = vset.pattern.permute.xlu0 0
  %455 = vperm.xlu0 %454, %v225
  %v456 = vpop.permute.xlu0 %455
  %459 = vset.pattern.permute.xlu0 0
  %460 = vperm.xlu0 %459, %v226
  %v461 = vpop.permute.xlu0 %460
  %464 = vset.pattern.permute.xlu0 0
  %465 = vperm.xlu0 %464, %v227
  %v466 = vpop.permute.xlu0 %465
  %469 = vset.pattern.permute.xlu0 0
  %470 = vperm.xlu0 %469, %v228
  %v471 = vpop.permute.xlu0 %470
  %474 = vset.pattern.permute.xlu0 0
  %475 = vperm.xlu0 %474, %v229
  %v476 = vpop.permute.xlu0 %475
  %479 = vset.pattern.permute.xlu0 0
  %480 = vperm.xlu0 %479, %v230
  %v481 = vpop.permute.xlu0 %480
  %484 = vset.pattern.permute.xlu0 0
  %485 = vperm.xlu0 %484, %v231
  %v486 = vpop.permute.xlu0 %485
  %489 = vset.pattern.permute.xlu0 0
  %490 = vperm.xlu0 %489, %v232
  %v491 = vpop.permute.xlu0 %490
  %494 = vset.pattern.permute.xlu0 0
  %495 = vperm.xlu0 %494, %v233
  %v496 = vpop.permute.xlu0 %495
  %499 = vset.pattern.permute.xlu0 0
  %500 = vperm.xlu0 %499, %v234
  %v501 = vpop.permute.xlu0 %500
  %504 = vset.pattern.permute.xlu0 0
  %505 = vperm.xlu0 %504, %v235
  %v506 = vpop.permute.xlu0 %505
  %509 = vset.pattern.permute.xlu0 0
  %510 = vperm.xlu0 %509, %v236
  %v511 = vpop.permute.xlu0 %510
  %514 = vset.pattern.permute.xlu0 0
  %515 = vperm.xlu0 %514, %v237
  %v516 = vpop.permute.xlu0 %515
  %519 = vset.pattern.permute.xlu0 0
  %520 = vperm.xlu0 %519, %v238
  %v521 = vpop.permute.xlu0 %520
  %524 = vset.pattern.permute.xlu0 0
  %525 = vperm.xlu0 %524, %v239
  %v526 = vpop.permute.xlu0 %525
  %529 = vset.pattern.permute.xlu0 0
  %530 = vperm.xlu0 %529, %v240
  %v531 = vpop.permute.xlu0 %530
  %534 = vset.pattern.permute.xlu0 0
  %535 = vperm.xlu0 %534, %v241
  %v536 = vpop.permute.xlu0 %535
  %539 = vset.pattern.permute.xlu0 0
  %540 = vperm.xlu0 %539, %v242
  %v541 = vpop.permute.xlu0 %540
  %544 = vset.pattern.permute.xlu0 0
  %545 = vperm.xlu0 %544, %v243
  %v546 = vpop.permute.xlu0 %545
  %549 = vset.pattern.permute.xlu0 0
  %550 = vperm.xlu0 %549, %v244
  %v551 = vpop.permute.xlu0 %550
  %554 = vset.pattern.permute.xlu0 0
  %555 = vperm.xlu0 %554, %v245
  %v556 = vpop.permute.xlu0 %555
  %559 = vset.pattern.permute.xlu0 0
  %560 = vperm.xlu0 %559, %v246
  %v561 = vpop.permute.xlu0 %560
  %564 = vset.pattern.permute.xlu0 0
  %565 = vperm.xlu0 %564, %v247
  %v566 = vpop.permute.xlu0 %565
  %569 = vset.pattern.permute.xlu0 0
  %570 = vperm.xlu0 %569, %v248
  %v571 = vpop.permute.xlu0 %570
  %574 = vset.pattern.permute.xlu0 0
  %575 = vperm.xlu0 %574, %v249
  %v576 = vpop.permute.xlu0 %575
  %579 = vset.pattern.permute.xlu0 0
  %580 = vperm.xlu0 %579, %v250
  %v581 = vpop.permute.xlu0 %580
  %584 = vset.pattern.permute.xlu0 0
  %585 = vperm.xlu0 %584, %v251
  %v586 = vpop.permute.xlu0 %585
  %589 = vset.pattern.permute.xlu0 0
  %590 = vperm.xlu0 %589, %v252
  %v591 = vpop.permute.xlu0 %590
  %594 = vset.pattern.permute.xlu0 0
  %595 = vperm.xlu0 %594, %v253
  %v596 = vpop.permute.xlu0 %595
  %599 = vset.pattern.permute.xlu0 0
  %600 = vperm.xlu0 %599, %v254
  %v601 = vpop.permute.xlu0 %600
  %604 = vset.pattern.permute.xlu0 0
  %605 = vperm.xlu0 %604, %v255
  %v606 = vpop.permute.xlu0 %605
  %609 = vset.pattern.permute.xlu0 0
  %610 = vperm.xlu0 %609, %v256
  %v611 = vpop.permute.xlu0 %610
  %614 = vset.pattern.permute.xlu0 0
  %615 = vperm.xlu0 %614, %v257
  %v616 = vpop.permute.xlu0 %615
  %619 = vset.pattern.permute.xlu0 0
  %620 = vperm.xlu0 %619, %v258
  %v621 = vpop.permute.xlu0 %620
  %624 = vset.pattern.permute.xlu0 0
  %625 = vperm.xlu0 %624, %v259
  %v626 = vpop.permute.xlu0 %625
  %629 = vset.pattern.permute.xlu0 0
  %630 = vperm.xlu0 %629, %v260
  %v631 = vpop.permute.xlu0 %630
  %634 = vset.pattern.permute.xlu0 0
  %635 = vperm.xlu0 %634, %v261
  %v636 = vpop.permute.xlu0 %635
  %639 = vset.pattern.permute.xlu0 0
  %640 = vperm.xlu0 %639, %v262
  %v641 = vpop.permute.xlu0 %640
  %644 = vset.pattern.permute.xlu0 0
  %645 = vperm.xlu0 %644, %v263
  %v646 = vpop.permute.xlu0 %645
  %649 = vset.pattern.permute.xlu0 0
  %650 = vperm.xlu0 %649, %v264
  %v651 = vpop.permute.xlu0 %650
  %654 = vset.pattern.permute.xlu0 0
  %655 = vperm.xlu0 %654, %v265
  %v656 = vpop.permute.xlu0 %655
  %659 = vset.pattern.permute.xlu0 0
  %660 = vperm.xlu0 %659, %v266
  %v661 = vpop.permute.xlu0 %660
  %664 = vset.pattern.permute.xlu0 0
  %665 = vperm.xlu0 %664, %v267
  %v666 = vpop.permute.xlu0 %665
  %669 = vset.pattern.permute.xlu0 0
  %670 = vperm.xlu0 %669, %v268
  %v671 = vpop.permute.xlu0 %670
  %674 = vset.pattern.permute.xlu0 0
  %675 = vperm.xlu0 %674, %v269
  %v676 = vpop.permute.xlu0 %675
  %679 = vset.pattern.permute.xlu0 0
  %680 = vperm.xlu0 %679, %v270
  %v681 = vpop.permute.xlu0 %680
  %684 = vset.pattern.permute.xlu0 0
  %685 = vperm.xlu0 %684, %v271
  %v686 = vpop.permute.xlu0 %685
  %689 = vset.pattern.permute.xlu0 0
  %690 = vperm.xlu0 %689, %v272
  %v691 = vpop.permute.xlu0 %690
  %694 = vset.pattern.permute.xlu0 0
  %695 = vperm.xlu0 %694, %v273
  %v696 = vpop.permute.xlu0 %695
  %699 = vset.pattern.permute.xlu0 0
  %700 = vperm.xlu0 %699, %v274
  %v701 = vpop.permute.xlu0 %700
  %704 = vset.pattern.permute.xlu0 0
  %705 = vperm.xlu0 %704, %v275
  %v706 = vpop.permute.xlu0 %705
  %709 = vset.pattern.permute.xlu0 0
  %710 = vperm.xlu0 %709, %v276
  %v711 = vpop.permute.xlu0 %710
  %714 = vset.pattern.permute.xlu0 0
  %715 = vperm.xlu0 %714, %v277
  %v716 = vpop.permute.xlu0 %715
  %719 = vset.pattern.permute.xlu0 0
  %720 = vperm.xlu0 %719, %v278
  %v721 = vpop.permute.xlu0 %720
  %724 = vset.pattern.permute.xlu0 0
  %725 = vperm.xlu0 %724, %v279
  %v726 = vpop.permute.xlu0 %725
  %729 = vset.pattern.permute.xlu0 0
  %730 = vperm.xlu0 %729, %v280
  %v731 = vpop.permute.xlu0 %730
  %734 = vset.pattern.permute.xlu0 0
  %735 = vperm.xlu0 %734, %v281
  %v736 = vpop.permute.xlu0 %735
  %739 = vset.pattern.permute.xlu0 0
  %740 = vperm.xlu0 %739, %v282
  %v741 = vpop.permute.xlu0 %740
  %744 = vset.pattern.permute.xlu0 0
  %745 = vperm.xlu0 %744, %v283
  %v746 = vpop.permute.xlu0 %745
  %749 = vset.pattern.permute.xlu0 0
  %750 = vperm.xlu0 %749, %v284
  %v751 = vpop.permute.xlu0 %750
  %754 = vset.pattern.permute.xlu0 0
  %755 = vperm.xlu0 %754, %v285
  %v756 = vpop.permute.xlu0 %755
  %759 = vset.pattern.permute.xlu0 0
  %760 = vperm.xlu0 %759, %v286
  %v761 = vpop.permute.xlu0 %760
  %764 = vset.pattern.permute.xlu0 0
  %765 = vperm.xlu0 %764, %v287
  %v766 = vpop.permute.xlu0 %765
  %769 = vset.pattern.permute.xlu0 0
  %770 = vperm.xlu0 %769, %v288
  %v771 = vpop.permute.xlu0 %770
  %774 = vset.pattern.permute.xlu0 0
  %775 = vperm.xlu0 %774, %v289
  %v776 = vpop.permute.xlu0 %775
  %779 = vset.pattern.permute.xlu0 0
  %780 = vperm.xlu0 %779, %v290
  %v781 = vpop.permute.xlu0 %780
  %784 = vset.pattern.permute.xlu0 0
  %785 = vperm.xlu0 %784, %v291
  %v786 = vpop.permute.xlu0 %785
  %789 = vset.pattern.permute.xlu0 0
  %790 = vperm.xlu0 %789, %v292
  %v791 = vpop.permute.xlu0 %790
  %794 = vset.pattern.permute.xlu0 0
  %795 = vperm.xlu0 %794, %v293
  %v796 = vpop.permute.xlu0 %795
  %799 = vset.pattern.permute.xlu0 0
  %800 = vperm.xlu0 %799, %v294
  %v801 = vpop.permute.xlu0 %800
  %804 = vset.pattern.permute.xlu0 0
  %805 = vperm.xlu0 %804, %v295
  %v806 = vpop.permute.xlu0 %805
  %809 = vset.pattern.permute.xlu0 0
  %810 = vperm.xlu0 %809, %v296
  %v811 = vpop.permute.xlu0 %810
  %814 = vset.pattern.permute.xlu0 0
  %815 = vperm.xlu0 %814, %v297
  %v816 = vpop.permute.xlu0 %815
  %819 = vset.pattern.permute.xlu0 0
  %820 = vperm.xlu0 %819, %v298
  %v821 = vpop.permute.xlu0 %820
  %824 = vset.pattern.permute.xlu0 0
  %825 = vperm.xlu0 %824, %v299
  %v826 = vpop.permute.xlu0 %825
  %829 = vset.pattern.permute.xlu0 0
  %830 = vperm.xlu0 %829, %v300
  %v831 = vpop.permute.xlu0 %830
  %834 = vset.pattern.permute.xlu0 0
  %835 = vperm.xlu0 %834, %v301
  %v836 = vpop.permute.xlu0 %835
  %839 = vset.pattern.permute.xlu0 0
  %840 = vperm.xlu0 %839, %v302
  %v841 = vpop.permute.xlu0 %840
  %844 = vset.pattern.permute.xlu0 0
  %845 = vperm.xlu0 %844, %v303
  %v846 = vpop.permute.xlu0 %845
  %849 = vset.pattern.permute.xlu0 0
  %850 = vperm.xlu0 %849, %v304
  %v851 = vpop.permute.xlu0 %850
  %854 = vset.pattern.permute.xlu0 0
  %855 = vperm.xlu0 %854, %v305
  %v856 = vpop.permute.xlu0 %855
  %859 = vset.pattern.permute.xlu0 0
  %860 = vperm.xlu0 %859, %v306
  %v861 = vpop.permute.xlu0 %860
  %864 = vset.pattern.permute.xlu0 0
  %865 = vperm.xlu0 %864, %v307
  %v866 = vpop.permute.xlu0 %865
  %869 = vset.pattern.permute.xlu0 0
  %870 = vperm.xlu0 %869, %v308
  %v871 = vpop.permute.xlu0 %870
  %874 = vset.pattern.permute.xlu0 0
  %875 = vperm.xlu0 %874, %v309
  %v876 = vpop.permute.xlu0 %875
  %879 = vset.pattern.permute.xlu0 0
  %880 = vperm.xlu0 %879, %v310
  %v881 = vpop.permute.xlu0 %880
  %884 = vset.pattern.permute.xlu0 0
  %885 = vperm.xlu0 %884, %v311
  %v886 = vpop.permute.xlu0 %885
  %889 = vset.pattern.permute.xlu0 0
  %890 = vperm.xlu0 %889, %v312
  %v891 = vpop.permute.xlu0 %890
  %894 = vset.pattern.permute.xlu0 0
  %895 = vperm.xlu0 %894, %v313
  %v896 = vpop.permute.xlu0 %895
  %899 = vset.pattern.permute.xlu0 0
  %900 = vperm.xlu0 %899, %v314
  %v901 = vpop.permute.xlu0 %900
  %904 = vset.pattern.permute.xlu0 0
  %905 = vperm.xlu0 %904, %v315
  %v906 = vpop.permute.xlu0 %905
  %909 = vset.pattern.permute.xlu0 0
  %910 = vperm.xlu0 %909, %v316
  %v911 = vpop.permute.xlu0 %910
  %914 = vset.pattern.permute.xlu0 0
  %915 = vperm.xlu0 %914, %v317
  %v916 = vpop.permute.xlu0 %915
  %919 = vset.pattern.permute.xlu0 0
  %920 = vperm.xlu0 %919, %v318
  %v921 = vpop.permute.xlu0 %920
  %924 = vset.pattern.permute.xlu0 0
  %925 = vperm.xlu0 %924, %v319
  %v926 = vpop.permute.xlu0 %925
  %929 = vset.pattern.permute.xlu0 0
  %930 = vperm.xlu0 %929, %v320
  %v931 = vpop.permute.xlu0 %930
  %934 = vset.pattern.permute.xlu0 0
  %935 = vperm.xlu0 %934, %v321
  %v936 = vpop.permute.xlu0 %935
  %939 = vset.pattern.permute.xlu0 0
  %940 = vperm.xlu0 %939, %v322
  %v941 = vpop.permute.xlu0 %940
  %944 = vset.pattern.permute.xlu0 0
  %945 = vperm.xlu0 %944, %v323
  %v946 = vpop.permute.xlu0 %945
  %949 = vset.pattern.permute.xlu0 0
  %950 = vperm.xlu0 %949, %v324
  %v951 = vpop.permute.xlu0 %950
  %954 = vset.pattern.permute.xlu0 0
  %955 = vperm.xlu0 %954, %v325
  %v956 = vpop.permute.xlu0 %955
  %959 = vset.pattern.permute.xlu0 0
  %960 = vperm.xlu0 %959, %v326
  %v961 = vpop.permute.xlu0 %960
  %964 = vset.pattern.permute.xlu0 0
  %965 = vperm.xlu0 %964, %v327
  %v966 = vpop.permute.xlu0 %965
  %969 = vset.pattern.permute.xlu0 0
  %970 = vperm.xlu0 %969, %v328
  %v971 = vpop.permute.xlu0 %970
  %974 = vset.pattern.permute.xlu0 0
  %975 = vperm.xlu0 %974, %v329
  %v976 = vpop.permute.xlu0 %975
  %979 = vset.pattern.permute.xlu0 0
  %980 = vperm.xlu0 %979, %v330
  %v981 = vpop.permute.xlu0 %980
  %984 = vset.pattern.permute.xlu0 0
  %985 = vperm.xlu0 %984, %v331
  %v986 = vpop.permute.xlu0 %985
  %989 = vset.pattern.permute.xlu0 0
  %990 = vperm.xlu0 %989, %v332
  %v991 = vpop.permute.xlu0 %990
  %994 = vset.pattern.permute.xlu0 0
  %995 = vperm.xlu0 %994, %v333
  %v996 = vpop.permute.xlu0 %995
  %999 = vset.pattern.permute.xlu0 0
  %1000 = vperm.xlu0 %999, %v334
  %v1001 = vpop.permute.xlu0 %1000
  %1004 = vset.pattern.permute.xlu0 0
  %1005 = vperm.xlu0 %1004, %v335
  %v1006 = vpop.permute.xlu0 %1005
  %1009 = vset.pattern.permute.xlu0 0
  %1010 = vperm.xlu0 %1009, %v336
  %v1011 = vpop.permute.xlu0 %1010
  %1014 = vset.pattern.permute.xlu0 0
  %1015 = vperm.xlu0 %1014, %v337
  %v1016 = vpop.permute.xlu0 %1015
  %1019 = vset.pattern.permute.xlu0 0
  %1020 = vperm.xlu0 %1019, %v338
  %v1021 = vpop.permute.xlu0 %1020
  %1024 = vset.pattern.permute.xlu0 0
  %1025 = vperm.xlu0 %1024, %v339
  %v1026 = vpop.permute.xlu0 %1025
  %1029 = vset.pattern.permute.xlu0 0
  %1030 = vperm.xlu0 %1029, %v340
  %v1031 = vpop.permute.xlu0 %1030
  %1034 = vset.pattern.permute.xlu0 0
  %1035 = vperm.xlu0 %1034, %v341
  %v1036 = vpop.permute.xlu0 %1035
  %1039 = vset.pattern.permute.xlu0 0
  %1040 = vperm.xlu0 %1039, %v342
  %v1041 = vpop.permute.xlu0 %1040
  %1044 = vset.pattern.permute.xlu0 0
  %1045 = vperm.xlu0 %1044, %v343
  %v1046 = vpop.permute.xlu0 %1045
  %1049 = vset.pattern.permute.xlu0 0
  %1050 = vperm.xlu0 %1049, %v344
  %v1051 = vpop.permute.xlu0 %1050
  %1054 = vset.pattern.permute.xlu0 0
  %1055 = vperm.xlu0 %1054, %v345
  %v1056 = vpop.permute.xlu0 %1055
  %1059 = vset.pattern.permute.xlu0 0
  %1060 = vperm.xlu0 %1059, %v346
  %v1061 = vpop.permute.xlu0 %1060
  %1064 = vset.pattern.permute.xlu0 0
  %1065 = vperm.xlu0 %1064, %v347
  %v1066 = vpop.permute.xlu0 %1065
  %1069 = vset.pattern.permute.xlu0 0
  %1070 = vperm.xlu0 %1069, %v348
  %v1071 = vpop.permute.xlu0 %1070
  %1074 = vset.pattern.permute.xlu0 0
  %1075 = vperm.xlu0 %1074, %v349
  %v1076 = vpop.permute.xlu0 %1075
  %1079 = vset.pattern.permute.xlu0 0
  %1080 = vperm.xlu0 %1079, %v350
  %v1081 = vpop.permute.xlu0 %1080
  %1084 = vset.pattern.permute.xlu0 0
  %1085 = vperm.xlu0 %1084, %v351
  %v1086 = vpop.permute.xlu0 %1085
  %1089 = vset.pattern.permute.xlu0 0
  %1090 = vperm.xlu0 %1089, %v352
  %v1091 = vpop.permute.xlu0 %1090
  %1094 = vset.pattern.permute.xlu0 0
  %1095 = vperm.xlu0 %1094, %v353
  %v1096 = vpop.permute.xlu0 %1095
  %1099 = vset.pattern.permute.xlu0 0
  %1100 = vperm.xlu0 %1099, %v354
  %v1101 = vpop.permute.xlu0 %1100
  %1104 = vset.pattern.permute.xlu0 0
  %1105 = vperm.xlu0 %1104, %v355
  %v1106 = vpop.permute.xlu0 %1105
  %1109 = vset.pattern.permute.xlu0 0
  %1110 = vperm.xlu0 %1109, %v356
  %v1111 = vpop.permute.xlu0 %1110
  %1114 = vset.pattern.permute.xlu0 0
  %1115 = vperm.xlu0 %1114, %v357
  %v1116 = vpop.permute.xlu0 %1115
  %1119 = vset.pattern.permute.xlu0 0
  %1120 = vperm.xlu0 %1119, %v358
  %v1121 = vpop.permute.xlu0 %1120
  %1124 = vset.pattern.permute.xlu0 0
  %1125 = vperm.xlu0 %1124, %v359
  %v1126 = vpop.permute.xlu0 %1125
  %1129 = vset.pattern.permute.xlu0 0
  %1130 = vperm.xlu0 %1129, %v360
  %v1131 = vpop.permute.xlu0 %1130
  %1134 = vset.pattern.permute.xlu0 0
  %1135 = vperm.xlu0 %1134, %v361
  %v1136 = vpop.permute.xlu0 %1135
  %1139 = vset.pattern.permute.xlu0 0
  %1140 = vperm.xlu0 %1139, %v362
  %v1141 = vpop.permute.xlu0 %1140
  %1144 = vset.pattern.permute.xlu0 0
  %1145 = vperm.xlu0 %1144, %v363
  %v1146 = vpop.permute.xlu0 %1145
  %1149 = vset.pattern.permute.xlu0 0
  %1150 = vperm.xlu0 %1149, %v364
  %v1151 = vpop.permute.xlu0 %1150
  %1154 = vset.pattern.permute.xlu0 0
  %1155 = vperm.xlu0 %1154, %v365
  %v1156 = vpop.permute.xlu0 %1155
  %1159 = vset.pattern.permute.xlu0 0
  %1160 = vperm.xlu0 %1159, %v366
  %v1161 = vpop.permute.xlu0 %1160
  %1164 = vset.pattern.permute.xlu0 0
  %1165 = vperm.xlu0 %1164, %v367
  %v1166 = vpop.permute.xlu0 %1165
  %1169 = vset.pattern.permute.xlu0 0
  %1170 = vperm.xlu0 %1169, %v368
  %v1171 = vpop.permute.xlu0 %1170
  %1174 = vset.pattern.permute.xlu0 0
  %1175 = vperm.xlu0 %1174, %v369
  %v1176 = vpop.permute.xlu0 %1175
  %1179 = vset.pattern.permute.xlu0 0
  %1180 = vperm.xlu0 %1179, %v370
  %v1181 = vpop.permute.xlu0 %1180
  %1184 = vset.pattern.permute.xlu0 0
  %1185 = vperm.xlu0 %1184, %v371
  %v1186 = vpop.permute.xlu0 %1185
  %1189 = vset.pattern.permute.xlu0 0
  %1190 = vperm.xlu0 %1189, %v372
  %v1191 = vpop.permute.xlu0 %1190
  %1194 = vset.pattern.permute.xlu0 0
  %1195 = vperm.xlu0 %1194, %v373
  %v1196 = vpop.permute.xlu0 %1195
  %1199 = vset.pattern.permute.xlu0 0
  %1200 = vperm.xlu0 %1199, %v374
  %v1201 = vpop.permute.xlu0 %1200
  %1204 = vset.pattern.permute.xlu0 0
  %1205 = vperm.xlu0 %1204, %v375
  %v1206 = vpop.permute.xlu0 %1205
  %1209 = vset.pattern.permute.xlu0 0
  %1210 = vperm.xlu0 %1209, %v376
  %v1211 = vpop.permute.xlu0 %1210
  %1214 = vset.pattern.permute.xlu0 0
  %1215 = vperm.xlu0 %1214, %v377
  %v1216 = vpop.permute.xlu0 %1215
  %1219 = vset.pattern.permute.xlu0 0
  %1220 = vperm.xlu0 %1219, %v378
  %v1221 = vpop.permute.xlu0 %1220
  %1224 = vset.pattern.permute.xlu0 0
  %1225 = vperm.xlu0 %1224, %v379
  %v1226 = vpop.permute.xlu0 %1225
  %1229 = vset.pattern.permute.xlu0 0
  %1230 = vperm.xlu0 %1229, %v380
  %v1231 = vpop.permute.xlu0 %1230
  %1234 = vset.pattern.permute.xlu0 0
  %1235 = vperm.xlu0 %1234, %v381
  %v1236 = vpop.permute.xlu0 %1235
  %1239 = vset.pattern.permute.xlu0 0
  %1240 = vperm.xlu0 %1239, %v382
  %v1241 = vpop.permute.xlu0 %1240
  %1244 = vset.pattern.permute.xlu0 0
  %1245 = vperm.xlu0 %1244, %v383
  %v1246 = vpop.permute.xlu0 %1245
  %1249 = vset.pattern.permute.xlu0 0
  %1250 = vperm.xlu0 %1249, %v384
  %v1251 = vpop.permute.xlu0 %1250
  %1254 = vset.pattern.permute.xlu0 0
  %1255 = vperm.xlu0 %1254, %v385
  %v1256 = vpop.permute.xlu0 %1255
  %1259 = vset.pattern.permute.xlu0 0
  %1260 = vperm.xlu0 %1259, %v386
  %v1261 = vpop.permute.xlu0 %1260
  %1264 = vset.pattern.permute.xlu0 0
  %1265 = vperm.xlu0 %1264, %v387
  %v1266 = vpop.permute.xlu0 %1265
  %1269 = vset.pattern.permute.xlu0 0
  %1270 = vperm.xlu0 %1269, %v388
  %v1271 = vpop.permute.xlu0 %1270
  %1274 = vset.pattern.permute.xlu0 0
  %1275 = vperm.xlu0 %1274, %v389
  %v1276 = vpop.permute.xlu0 %1275
  %1279 = vset.pattern.permute.xlu0 0
  %1280 = vperm.xlu0 %1279, %v390
  %v1281 = vpop.permute.xlu0 %1280
  %1284 = vset.pattern.permute.xlu0 0
  %1285 = vperm.xlu0 %1284, %v391
  %v1286 = vpop.permute.xlu0 %1285
  %1289 = vset.pattern.permute.xlu0 0
  %1290 = vperm.xlu0 %1289, %v392
  %v1291 = vpop.permute.xlu0 %1290
  %1294 = vset.pattern.permute.xlu0 0
  %1295 = vperm.xlu0 %1294, %v393
  %v1296 = vpop.permute.xlu0 %1295
  %1299 = vset.pattern.permute.xlu0 0
  %1300 = vperm.xlu0 %1299, %v394
  %v1301 = vpop.permute.xlu0 %1300
  %1304 = vset.pattern.permute.xlu0 0
  %1305 = vperm.xlu0 %1304, %v395
  %v1306 = vpop.permute.xlu0 %1305
  %1309 = vset.pattern.permute.xlu0 0
  %1310 = vperm.xlu0 %1309, %v396
  %v1311 = vpop.permute.xlu0 %1310
  %1314 = vset.pattern.permute.xlu0 0
  %1315 = vperm.xlu0 %1314, %v397
  %v1316 = vpop.permute.xlu0 %1315
  %v1318 = vmul.f32 %v30, %v401
  %v1319 = vmul.f32 %v31, %v406
  %v1320 = vmul.f32 %v32, %v411
  %v1321 = vmul.f32 %v33, %v416
  %v1322 = vmul.f32 %v34, %v421
  %v1323 = vmul.f32 %v35, %v426
  %v1324 = vmul.f32 %v36, %v431
  %v1325 = vmul.f32 %v37, %v436
  %v1326 = vmul.f32 %v38, %v441
  %v1327 = vmul.f32 %v39, %v446
  %v1328 = vmul.f32 %v40, %v451
  %v1329 = vmul.f32 %v41, %v456
  %v1330 = vmul.f32 %v42, %v461
  %v1331 = vmul.f32 %v43, %v466
  %v1332 = vmul.f32 %v44, %v471
  %v1333 = vmul.f32 %v45, %v476
  %v1334 = vmul.f32 %v46, %v481
  %v1335 = vmul.f32 %v47, %v486
  %v1336 = vmul.f32 %v48, %v491
  %v1337 = vmul.f32 %v49, %v496
  %v1338 = vmul.f32 %v50, %v501
  %v1339 = vmul.f32 %v51, %v506
  %v1340 = vmul.f32 %v52, %v511
  %v1341 = vmul.f32 %v53, %v516
  %v1342 = vmul.f32 %v54, %v521
  %v1343 = vmul.f32 %v55, %v526
  %v1344 = vmul.f32 %v56, %v531
  %v1345 = vmul.f32 %v57, %v536
  %v1346 = vmul.f32 %v58, %v541
  %v1347 = vmul.f32 %v59, %v546
  %v1348 = vmul.f32 %v60, %v551
  %v1349 = vmul.f32 %v61, %v556
  %v1350 = vmul.f32 %v62, %v561
  %v1351 = vmul.f32 %v63, %v566
  %v1352 = vmul.f32 %v64, %v571
  %v1353 = vmul.f32 %v65, %v576
  %v1354 = vmul.f32 %v66, %v581
  %v1355 = vmul.f32 %v67, %v586
  %v1356 = vmul.f32 %v68, %v591
  %v1357 = vmul.f32 %v69, %v596
  %v1358 = vmul.f32 %v70, %v601
  %v1359 = vmul.f32 %v71, %v606
  %v1360 = vmul.f32 %v72, %v611
  %v1361 = vmul.f32 %v73, %v616
  %v1362 = vmul.f32 %v74, %v621
  %v1363 = vmul.f32 %v75, %v626
  %v1364 = vmul.f32 %v76, %v631
  %v1365 = vmul.f32 %v77, %v636
  %v1366 = vmul.f32 %v78, %v641
  %v1367 = vmul.f32 %v79, %v646
  %v1368 = vmul.f32 %v80, %v651
  %v1369 = vmul.f32 %v81, %v656
  %v1370 = vmul.f32 %v82, %v661
  %v1371 = vmul.f32 %v83, %v666
  %v1372 = vmul.f32 %v84, %v671
  %v1373 = vmul.f32 %v85, %v676
  %v1374 = vmul.f32 %v86, %v681
  %v1375 = vmul.f32 %v87, %v686
  %v1376 = vmul.f32 %v88, %v691
  %v1377 = vmul.f32 %v89, %v696
  %v1378 = vmul.f32 %v90, %v701
  %v1379 = vmul.f32 %v91, %v706
  %v1380 = vmul.f32 %v92, %v711
  %v1381 = vmul.f32 %v93, %v716
  %v1382 = vmul.f32 %v94, %v721
  %v1383 = vmul.f32 %v95, %v726
  %v1384 = vmul.f32 %v96, %v731
  %v1385 = vmul.f32 %v97, %v736
  %v1386 = vmul.f32 %v98, %v741
  %v1387 = vmul.f32 %v99, %v746
  %v1388 = vmul.f32 %v100, %v751
  %v1389 = vmul.f32 %v101, %v756
  %v1390 = vmul.f32 %v102, %v761
  %v1391 = vmul.f32 %v103, %v766
  %v1392 = vmul.f32 %v104, %v771
  %v1393 = vmul.f32 %v105, %v776
  %v1394 = vmul.f32 %v106, %v781
  %v1395 = vmul.f32 %v107, %v786
  %v1396 = vmul.f32 %v108, %v791
  %v1397 = vmul.f32 %v109, %v796
  %v1398 = vmul.f32 %v110, %v801
  %v1399 = vmul.f32 %v111, %v806
  %v1400 = vmul.f32 %v112, %v811
  %v1401 = vmul.f32 %v113, %v816
  %v1402 = vmul.f32 %v114, %v821
  %v1403 = vmul.f32 %v115, %v826
  %v1404 = vmul.f32 %v116, %v831
  %v1405 = vmul.f32 %v117, %v836
  %v1406 = vmul.f32 %v118, %v841
  %v1407 = vmul.f32 %v119, %v846
  %v1408 = vmul.f32 %v120, %v851
  %v1409 = vmul.f32 %v121, %v856
  %v1410 = vmul.f32 %v122, %v861
  %v1411 = vmul.f32 %v123, %v866
  %v1412 = vmul.f32 %v124, %v871
  %v1413 = vmul.f32 %v125, %v876
  %v1414 = vmul.f32 %v126, %v881
  %v1415 = vmul.f32 %v127, %v886
  %v1416 = vmul.f32 %v128, %v891
  %v1417 = vmul.f32 %v129, %v896
  %v1418 = vmul.f32 %v130, %v901
  %v1419 = vmul.f32 %v131, %v906
  %v1420 = vmul.f32 %v132, %v911
  %v1421 = vmul.f32 %v133, %v916
  %v1422 = vmul.f32 %v134, %v921
  %v1423 = vmul.f32 %v135, %v926
  %v1424 = vmul.f32 %v136, %v931
  %v1425 = vmul.f32 %v137, %v936
  %v1426 = vmul.f32 %v138, %v941
  %v1427 = vmul.f32 %v139, %v946
  %v1428 = vmul.f32 %v140, %v951
  %v1429 = vmul.f32 %v141, %v956
  %v1430 = vmul.f32 %v142, %v961
  %v1431 = vmul.f32 %v143, %v966
  %v1432 = vmul.f32 %v144, %v971
  %v1433 = vmul.f32 %v145, %v976
  %v1434 = vmul.f32 %v146, %v981
  %v1435 = vmul.f32 %v147, %v986
  %v1436 = vmul.f32 %v148, %v991
  %v1437 = vmul.f32 %v149, %v996
  %v1438 = vmul.f32 %v150, %v1001
  %v1439 = vmul.f32 %v151, %v1006
  %v1440 = vmul.f32 %v152, %v1011
  %v1441 = vmul.f32 %v153, %v1016
  %v1442 = vmul.f32 %v154, %v1021
  %v1443 = vmul.f32 %v155, %v1026
  %v1444 = vmul.f32 %v156, %v1031
  %v1445 = vmul.f32 %v157, %v1036
  %v1446 = vmul.f32 %v158, %v1041
  %v1447 = vmul.f32 %v159, %v1046
  %v1448 = vmul.f32 %v160, %v1051
  %v1449 = vmul.f32 %v161, %v1056
  %v1450 = vmul.f32 %v162, %v1061
  %v1451 = vmul.f32 %v163, %v1066
  %v1452 = vmul.f32 %v164, %v1071
  %v1453 = vmul.f32 %v165, %v1076
  %v1454 = vmul.f32 %v166, %v1081
  %v1455 = vmul.f32 %v167, %v1086
  %v1456 = vmul.f32 %v168, %v1091
  %v1457 = vmul.f32 %v169, %v1096
  %v1458 = vmul.f32 %v170, %v1101
  %v1459 = vmul.f32 %v171, %v1106
  %v1460 = vmul.f32 %v172, %v1111
  %v1461 = vmul.f32 %v173, %v1116
  %v1462 = vmul.f32 %v174, %v1121
  %v1463 = vmul.f32 %v175, %v1126
  %v1464 = vmul.f32 %v176, %v1131
  %v1465 = vmul.f32 %v177, %v1136
  %v1466 = vmul.f32 %v178, %v1141
  %v1467 = vmul.f32 %v179, %v1146
  %v1468 = vmul.f32 %v180, %v1151
  %v1469 = vmul.f32 %v181, %v1156
  %v1470 = vmul.f32 %v182, %v1161
  %v1471 = vmul.f32 %v183, %v1166
  %v1472 = vmul.f32 %v184, %v1171
  %v1473 = vmul.f32 %v185, %v1176
  %v1474 = vmul.f32 %v186, %v1181
  %v1475 = vmul.f32 %v187, %v1186
  %v1476 = vmul.f32 %v188, %v1191
  %v1477 = vmul.f32 %v189, %v1196
  %v1478 = vmul.f32 %v190, %v1201
  %v1479 = vmul.f32 %v191, %v1206
  %v1480 = vmul.f32 %v192, %v1211
  %v1481 = vmul.f32 %v193, %v1216
  %v1482 = vmul.f32 %v194, %v1221
  %v1483 = vmul.f32 %v195, %v1226
  %v1484 = vmul.f32 %v196, %v1231
  %v1485 = vmul.f32 %v197, %v1236
  %v1486 = vmul.f32 %v198, %v1241
  %v1487 = vmul.f32 %v199, %v1246
  %v1488 = vmul.f32 %v200, %v1251
  %v1489 = vmul.f32 %v201, %v1256
  %v1490 = vmul.f32 %v202, %v1261
  %v1491 = vmul.f32 %v203, %v1266
  %v1492 = vmul.f32 %v204, %v1271
  %v1493 = vmul.f32 %v205, %v1276
  %v1494 = vmul.f32 %v206, %v1281
  %v1495 = vmul.f32 %v207, %v1286
  %v1496 = vmul.f32 %v208, %v1291
  %v1497 = vmul.f32 %v209, %v1296
  %v1498 = vmul.f32 %v210, %v1301
  %v1499 = vmul.f32 %v211, %v1306
  %v1500 = vmul.f32 %v212, %v1311
  %v1501 = vmul.f32 %v213, %v1316
  %v1502 = vpack.c.bf16 %v1319, %v1318
  %v1503 = vpack.c.bf16 %v1321, %v1320
  %v1504 = vpack.c.bf16 %v1323, %v1322
  %v1505 = vpack.c.bf16 %v1325, %v1324
  %v1506 = vpack.c.bf16 %v1327, %v1326
  %v1507 = vpack.c.bf16 %v1329, %v1328
  %v1508 = vpack.c.bf16 %v1331, %v1330
  %v1509 = vpack.c.bf16 %v1333, %v1332
  %v1510 = vpack.c.bf16 %v1335, %v1334
  %v1511 = vpack.c.bf16 %v1337, %v1336
  %v1512 = vpack.c.bf16 %v1339, %v1338
  %v1513 = vpack.c.bf16 %v1341, %v1340
  %v1514 = vpack.c.bf16 %v1343, %v1342
  %v1515 = vpack.c.bf16 %v1345, %v1344
  %v1516 = vpack.c.bf16 %v1347, %v1346
  %v1517 = vpack.c.bf16 %v1349, %v1348
  %v1518 = vpack.c.bf16 %v1351, %v1350
  %v1519 = vpack.c.bf16 %v1353, %v1352
  %v1520 = vpack.c.bf16 %v1355, %v1354
  %v1521 = vpack.c.bf16 %v1357, %v1356
  %v1522 = vpack.c.bf16 %v1359, %v1358
  %v1523 = vpack.c.bf16 %v1361, %v1360
  %v1524 = vpack.c.bf16 %v1363, %v1362
  %v1525 = vpack.c.bf16 %v1365, %v1364
  %v1526 = vpack.c.bf16 %v1367, %v1366
  %v1527 = vpack.c.bf16 %v1369, %v1368
  %v1528 = vpack.c.bf16 %v1371, %v1370
  %v1529 = vpack.c.bf16 %v1373, %v1372
  %v1530 = vpack.c.bf16 %v1375, %v1374
  %v1531 = vpack.c.bf16 %v1377, %v1376
  %v1532 = vpack.c.bf16 %v1379, %v1378
  %v1533 = vpack.c.bf16 %v1381, %v1380
  %v1534 = vpack.c.bf16 %v1383, %v1382
  %v1535 = vpack.c.bf16 %v1385, %v1384
  %v1536 = vpack.c.bf16 %v1387, %v1386
  %v1537 = vpack.c.bf16 %v1389, %v1388
  %v1538 = vpack.c.bf16 %v1391, %v1390
  %v1539 = vpack.c.bf16 %v1393, %v1392
  %v1540 = vpack.c.bf16 %v1395, %v1394
  %v1541 = vpack.c.bf16 %v1397, %v1396
  %v1542 = vpack.c.bf16 %v1399, %v1398
  %v1543 = vpack.c.bf16 %v1401, %v1400
  %v1544 = vpack.c.bf16 %v1403, %v1402
  %v1545 = vpack.c.bf16 %v1405, %v1404
  %v1546 = vpack.c.bf16 %v1407, %v1406
  %v1547 = vpack.c.bf16 %v1409, %v1408
  %v1548 = vpack.c.bf16 %v1411, %v1410
  %v1549 = vpack.c.bf16 %v1413, %v1412
  %v1550 = vpack.c.bf16 %v1415, %v1414
  %v1551 = vpack.c.bf16 %v1417, %v1416
  %v1552 = vpack.c.bf16 %v1419, %v1418
  %v1553 = vpack.c.bf16 %v1421, %v1420
  %v1554 = vpack.c.bf16 %v1423, %v1422
  %v1555 = vpack.c.bf16 %v1425, %v1424
  %v1556 = vpack.c.bf16 %v1427, %v1426
  %v1557 = vpack.c.bf16 %v1429, %v1428
  %v1558 = vpack.c.bf16 %v1431, %v1430
  %v1559 = vpack.c.bf16 %v1433, %v1432
  %v1560 = vpack.c.bf16 %v1435, %v1434
  %v1561 = vpack.c.bf16 %v1437, %v1436
  %v1562 = vpack.c.bf16 %v1439, %v1438
  %v1563 = vpack.c.bf16 %v1441, %v1440
  %v1564 = vpack.c.bf16 %v1443, %v1442
  %v1565 = vpack.c.bf16 %v1445, %v1444
  %v1566 = vpack.c.bf16 %v1447, %v1446
  %v1567 = vpack.c.bf16 %v1449, %v1448
  %v1568 = vpack.c.bf16 %v1451, %v1450
  %v1569 = vpack.c.bf16 %v1453, %v1452
  %v1570 = vpack.c.bf16 %v1455, %v1454
  %v1571 = vpack.c.bf16 %v1457, %v1456
  %v1572 = vpack.c.bf16 %v1459, %v1458
  %v1573 = vpack.c.bf16 %v1461, %v1460
  %v1574 = vpack.c.bf16 %v1463, %v1462
  %v1575 = vpack.c.bf16 %v1465, %v1464
  %v1576 = vpack.c.bf16 %v1467, %v1466
  %v1577 = vpack.c.bf16 %v1469, %v1468
  %v1578 = vpack.c.bf16 %v1471, %v1470
  %v1579 = vpack.c.bf16 %v1473, %v1472
  %v1580 = vpack.c.bf16 %v1475, %v1474
  %v1581 = vpack.c.bf16 %v1477, %v1476
  %v1582 = vpack.c.bf16 %v1479, %v1478
  %v1583 = vpack.c.bf16 %v1481, %v1480
  %v1584 = vpack.c.bf16 %v1483, %v1482
  %v1585 = vpack.c.bf16 %v1485, %v1484
  %v1586 = vpack.c.bf16 %v1487, %v1486
  %v1587 = vpack.c.bf16 %v1489, %v1488
  %v1588 = vpack.c.bf16 %v1491, %v1490
  %v1589 = vpack.c.bf16 %v1493, %v1492
  %v1590 = vpack.c.bf16 %v1495, %v1494
  %v1591 = vpack.c.bf16 %v1497, %v1496
  %v1592 = vpack.c.bf16 %v1499, %v1498
  %v1593 = vpack.c.bf16 %v1501, %v1500
  %v1594 = vld [vmem:[%s2] sm:$0xff]
  %v1595 = vld [vmem:[%s2 + $0x8] sm:$0xff]
  %v1596 = vld [vmem:[%s2 + $0x10] sm:$0xff]
  %v1597 = vld [vmem:[%s2 + $0x18] sm:$0xff]
  %v1598 = vld [vmem:[%s2 + $0x20] sm:$0xff]
  %v1599 = vld [vmem:[%s2 + $0x28] sm:$0xff]
  %v1600 = vld [vmem:[%s2 + $0x30] sm:$0xff]
  %v1601 = vld [vmem:[%s2 + $0x38] sm:$0xff]
  %v1602 = vld [vmem:[%s2 + $0x40] sm:$0xff]
  %v1603 = vld [vmem:[%s2 + $0x48] sm:$0xff]
  %v1604 = vld [vmem:[%s2 + $0x50] sm:$0xff]
  %v1605 = vld [vmem:[%s2 + $0x58] sm:$0xff]
  %v1606 = vld [vmem:[%s2 + $0x60] sm:$0xff]
  %v1607 = vld [vmem:[%s2 + $0x68] sm:$0xff]
  %v1608 = vld [vmem:[%s2 + $0x70] sm:$0xff]
  %v1609 = vld [vmem:[%s2 + $0x78] sm:$0xff]
  %v1610 = vld [vmem:[%s2 + $0x80] sm:$0xff]
  %v1611 = vld [vmem:[%s2 + $0x88] sm:$0xff]
  %v1612 = vld [vmem:[%s2 + $0x90] sm:$0xff]
  %v1613 = vld [vmem:[%s2 + $0x98] sm:$0xff]
  %v1614 = vld [vmem:[%s2 + $0xa0] sm:$0xff]
  %v1615 = vld [vmem:[%s2 + $0xa8] sm:$0xff]
  %v1616 = vld [vmem:[%s2 + $0xb0] sm:$0xff]
  %v1617 = vld [vmem:[%s2 + $0xb8] sm:$0xff]
  %v1618 = vld [vmem:[%s2 + $0xc0] sm:$0xff]
  %v1619 = vld [vmem:[%s2 + $0xc8] sm:$0xff]
  %v1620 = vld [vmem:[%s2 + $0xd0] sm:$0xff]
  %v1621 = vld [vmem:[%s2 + $0xd8] sm:$0xff]
  %v1622 = vld [vmem:[%s2 + $0xe0] sm:$0xff]
  %v1623 = vld [vmem:[%s2 + $0xe8] sm:$0xff]
  %v1624 = vld [vmem:[%s2 + $0xf0] sm:$0xff]
  %v1625 = vld [vmem:[%s2 + $0xf8] sm:$0xff]
  %v1626 = vld [vmem:[%s2 + $0x100] sm:$0xff]
  %v1627 = vld [vmem:[%s2 + $0x108] sm:$0xff]
  %v1628 = vld [vmem:[%s2 + $0x110] sm:$0xff]
  %v1629 = vld [vmem:[%s2 + $0x118] sm:$0xff]
  %v1630 = vld [vmem:[%s2 + $0x120] sm:$0xff]
  %v1631 = vld [vmem:[%s2 + $0x128] sm:$0xff]
  %v1632 = vld [vmem:[%s2 + $0x130] sm:$0xff]
  %v1633 = vld [vmem:[%s2 + $0x138] sm:$0xff]
  %v1634 = vld [vmem:[%s2 + $0x140] sm:$0xff]
  %v1635 = vld [vmem:[%s2 + $0x148] sm:$0xff]
  %v1636 = vld [vmem:[%s2 + $0x150] sm:$0xff]
  %v1637 = vld [vmem:[%s2 + $0x158] sm:$0xff]
  %v1638 = vld [vmem:[%s2 + $0x160] sm:$0xff]
  %v1639 = vld [vmem:[%s2 + $0x168] sm:$0xff]
  %v1640 = vld [vmem:[%s2 + $0x170] sm:$0xff]
  %v1641 = vld [vmem:[%s2 + $0x178] sm:$0xff]
  %v1642 = vld [vmem:[%s2 + $0x180] sm:$0xff]
  %v1643 = vld [vmem:[%s2 + $0x188] sm:$0xff]
  %v1644 = vld [vmem:[%s2 + $0x190] sm:$0xff]
  %v1645 = vld [vmem:[%s2 + $0x198] sm:$0xff]
  %v1646 = vld [vmem:[%s2 + $0x1a0] sm:$0xff]
  %v1647 = vld [vmem:[%s2 + $0x1a8] sm:$0xff]
  %v1648 = vld [vmem:[%s2 + $0x1b0] sm:$0xff]
  %v1649 = vld [vmem:[%s2 + $0x1b8] sm:$0xff]
  %v1650 = vld [vmem:[%s2 + $0x1c0] sm:$0xff]
  %v1651 = vld [vmem:[%s2 + $0x1c8] sm:$0xff]
  %v1652 = vld [vmem:[%s2 + $0x1d0] sm:$0xff]
  %v1653 = vld [vmem:[%s2 + $0x1d8] sm:$0xff]
  %v1654 = vld [vmem:[%s2 + $0x1e0] sm:$0xff]
  %v1655 = vld [vmem:[%s2 + $0x1e8] sm:$0xff]
  %v1656 = vld [vmem:[%s2 + $0x1f0] sm:$0xff]
  %v1657 = vld [vmem:[%s2 + $0x1f8] sm:$0xff]
  %v1658 = vld [vmem:[%s2 + $0x200] sm:$0xff]
  %v1659 = vld [vmem:[%s2 + $0x208] sm:$0xff]
  %v1660 = vld [vmem:[%s2 + $0x210] sm:$0xff]
  %v1661 = vld [vmem:[%s2 + $0x218] sm:$0xff]
  %v1662 = vld [vmem:[%s2 + $0x220] sm:$0xff]
  %v1663 = vld [vmem:[%s2 + $0x228] sm:$0xff]
  %v1664 = vld [vmem:[%s2 + $0x230] sm:$0xff]
  %v1665 = vld [vmem:[%s2 + $0x238] sm:$0xff]
  %v1666 = vld [vmem:[%s2 + $0x240] sm:$0xff]
  %v1667 = vld [vmem:[%s2 + $0x248] sm:$0xff]
  %v1668 = vld [vmem:[%s2 + $0x250] sm:$0xff]
  %v1669 = vld [vmem:[%s2 + $0x258] sm:$0xff]
  %v1670 = vld [vmem:[%s2 + $0x260] sm:$0xff]
  %v1671 = vld [vmem:[%s2 + $0x268] sm:$0xff]
  %v1672 = vld [vmem:[%s2 + $0x270] sm:$0xff]
  %v1673 = vld [vmem:[%s2 + $0x278] sm:$0xff]
  %v1674 = vld [vmem:[%s2 + $0x280] sm:$0xff]
  %v1675 = vld [vmem:[%s2 + $0x288] sm:$0xff]
  %v1676 = vld [vmem:[%s2 + $0x290] sm:$0xff]
  %v1677 = vld [vmem:[%s2 + $0x298] sm:$0xff]
  %v1678 = vld [vmem:[%s2 + $0x2a0] sm:$0xff]
  %v1679 = vld [vmem:[%s2 + $0x2a8] sm:$0xff]
  %v1680 = vld [vmem:[%s2 + $0x2b0] sm:$0xff]
  %v1681 = vld [vmem:[%s2 + $0x2b8] sm:$0xff]
  %v1682 = vld [vmem:[%s2 + $0x2c0] sm:$0xff]
  %v1683 = vld [vmem:[%s2 + $0x2c8] sm:$0xff]
  %v1684 = vld [vmem:[%s2 + $0x2d0] sm:$0xff]
  %v1685 = vld [vmem:[%s2 + $0x2d8] sm:$0xff]
  %v1686 = vld [vmem:[%s2 + $0x2e0] sm:$0xff]
  %v1687 = vld [vmem:[%s2 + $0x2e8] sm:$0xff]
  %v1688 = vld [vmem:[%s2 + $0x2f0] sm:$0xff]
  %v1689 = vld [vmem:[%s2 + $0x2f8] sm:$0xff]
  %v1690 = vld [vmem:[%s2 + $0x300] sm:$0xff]
  %v1691 = vld [vmem:[%s2 + $0x308] sm:$0xff]
  %v1692 = vld [vmem:[%s2 + $0x310] sm:$0xff]
  %v1693 = vld [vmem:[%s2 + $0x318] sm:$0xff]
  %v1694 = vld [vmem:[%s2 + $0x320] sm:$0xff]
  %v1695 = vld [vmem:[%s2 + $0x328] sm:$0xff]
  %v1696 = vld [vmem:[%s2 + $0x330] sm:$0xff]
  %v1697 = vld [vmem:[%s2 + $0x338] sm:$0xff]
  %v1698 = vld [vmem:[%s2 + $0x340] sm:$0xff]
  %v1699 = vld [vmem:[%s2 + $0x348] sm:$0xff]
  %v1700 = vld [vmem:[%s2 + $0x350] sm:$0xff]
  %v1701 = vld [vmem:[%s2 + $0x358] sm:$0xff]
  %v1702 = vld [vmem:[%s2 + $0x360] sm:$0xff]
  %v1703 = vld [vmem:[%s2 + $0x368] sm:$0xff]
  %v1704 = vld [vmem:[%s2 + $0x370] sm:$0xff]
  %v1705 = vld [vmem:[%s2 + $0x378] sm:$0xff]
  %v1706 = vld [vmem:[%s2 + $0x380] sm:$0xff]
  %v1707 = vld [vmem:[%s2 + $0x388] sm:$0xff]
  %v1708 = vld [vmem:[%s2 + $0x390] sm:$0xff]
  %v1709 = vld [vmem:[%s2 + $0x398] sm:$0xff]
  %v1710 = vld [vmem:[%s2 + $0x3a0] sm:$0xff]
  %v1711 = vld [vmem:[%s2 + $0x3a8] sm:$0xff]
  %v1712 = vld [vmem:[%s2 + $0x3b0] sm:$0xff]
  %v1713 = vld [vmem:[%s2 + $0x3b8] sm:$0xff]
  %v1714 = vld [vmem:[%s2 + $0x3c0] sm:$0xff]
  %v1715 = vld [vmem:[%s2 + $0x3c8] sm:$0xff]
  %v1716 = vld [vmem:[%s2 + $0x3d0] sm:$0xff]
  %v1717 = vld [vmem:[%s2 + $0x3d8] sm:$0xff]
  %v1718 = vld [vmem:[%s2 + $0x3e0] sm:$0xff]
  %v1719 = vld [vmem:[%s2 + $0x3e8] sm:$0xff]
  %v1720 = vld [vmem:[%s2 + $0x3f0] sm:$0xff]
  %v1721 = vld [vmem:[%s2 + $0x3f8] sm:$0xff]
  %v1722 = vld [vmem:[%s2 + $0x400] sm:$0xff]
  %v1723 = vld [vmem:[%s2 + $0x408] sm:$0xff]
  %v1724 = vld [vmem:[%s2 + $0x410] sm:$0xff]
  %v1725 = vld [vmem:[%s2 + $0x418] sm:$0xff]
  %v1726 = vld [vmem:[%s2 + $0x420] sm:$0xff]
  %v1727 = vld [vmem:[%s2 + $0x428] sm:$0xff]
  %v1728 = vld [vmem:[%s2 + $0x430] sm:$0xff]
  %v1729 = vld [vmem:[%s2 + $0x438] sm:$0xff]
  %v1730 = vld [vmem:[%s2 + $0x440] sm:$0xff]
  %v1731 = vld [vmem:[%s2 + $0x448] sm:$0xff]
  %v1732 = vld [vmem:[%s2 + $0x450] sm:$0xff]
  %v1733 = vld [vmem:[%s2 + $0x458] sm:$0xff]
  %v1734 = vld [vmem:[%s2 + $0x460] sm:$0xff]
  %v1735 = vld [vmem:[%s2 + $0x468] sm:$0xff]
  %v1736 = vld [vmem:[%s2 + $0x470] sm:$0xff]
  %v1737 = vld [vmem:[%s2 + $0x478] sm:$0xff]
  %v1738 = vld [vmem:[%s2 + $0x480] sm:$0xff]
  %v1739 = vld [vmem:[%s2 + $0x488] sm:$0xff]
  %v1740 = vld [vmem:[%s2 + $0x490] sm:$0xff]
  %v1741 = vld [vmem:[%s2 + $0x498] sm:$0xff]
  %v1742 = vld [vmem:[%s2 + $0x4a0] sm:$0xff]
  %v1743 = vld [vmem:[%s2 + $0x4a8] sm:$0xff]
  %v1744 = vld [vmem:[%s2 + $0x4b0] sm:$0xff]
  %v1745 = vld [vmem:[%s2 + $0x4b8] sm:$0xff]
  %v1746 = vld [vmem:[%s2 + $0x4c0] sm:$0xff]
  %v1747 = vld [vmem:[%s2 + $0x4c8] sm:$0xff]
  %v1748 = vld [vmem:[%s2 + $0x4d0] sm:$0xff]
  %v1749 = vld [vmem:[%s2 + $0x4d8] sm:$0xff]
  %v1750 = vld [vmem:[%s2 + $0x4e0] sm:$0xff]
  %v1751 = vld [vmem:[%s2 + $0x4e8] sm:$0xff]
  %v1752 = vld [vmem:[%s2 + $0x4f0] sm:$0xff]
  %v1753 = vld [vmem:[%s2 + $0x4f8] sm:$0xff]
  %v1754 = vld [vmem:[%s2 + $0x500] sm:$0xff]
  %v1755 = vld [vmem:[%s2 + $0x508] sm:$0xff]
  %v1756 = vld [vmem:[%s2 + $0x510] sm:$0xff]
  %v1757 = vld [vmem:[%s2 + $0x518] sm:$0xff]
  %v1758 = vld [vmem:[%s2 + $0x520] sm:$0xff]
  %v1759 = vld [vmem:[%s2 + $0x528] sm:$0xff]
  %v1760 = vld [vmem:[%s2 + $0x530] sm:$0xff]
  %v1761 = vld [vmem:[%s2 + $0x538] sm:$0xff]
  %v1762 = vld [vmem:[%s2 + $0x540] sm:$0xff]
  %v1763 = vld [vmem:[%s2 + $0x548] sm:$0xff]
  %v1764 = vld [vmem:[%s2 + $0x550] sm:$0xff]
  %v1765 = vld [vmem:[%s2 + $0x558] sm:$0xff]
  %v1766 = vld [vmem:[%s2 + $0x560] sm:$0xff]
  %v1767 = vld [vmem:[%s2 + $0x568] sm:$0xff]
  %v1768 = vld [vmem:[%s2 + $0x570] sm:$0xff]
  %v1769 = vld [vmem:[%s2 + $0x578] sm:$0xff]
  %v1770 = vld [vmem:[%s2 + $0x580] sm:$0xff]
  %v1771 = vld [vmem:[%s2 + $0x588] sm:$0xff]
  %v1772 = vld [vmem:[%s2 + $0x590] sm:$0xff]
  %v1773 = vld [vmem:[%s2 + $0x598] sm:$0xff]
  %v1774 = vld [vmem:[%s2 + $0x5a0] sm:$0xff]
  %v1775 = vld [vmem:[%s2 + $0x5a8] sm:$0xff]
  %v1776 = vld [vmem:[%s2 + $0x5b0] sm:$0xff]
  %v1777 = vld [vmem:[%s2 + $0x5b8] sm:$0xff]
  %v1778 = vld [vmem:[%s2 + $0x5c0] sm:$0xff]
  %v1779 = vld [vmem:[%s2 + $0x5c8] sm:$0xff]
  %v1780 = vld [vmem:[%s2 + $0x5d0] sm:$0xff]
  %v1781 = vld [vmem:[%s2 + $0x5d8] sm:$0xff]
  %v1782 = vld [vmem:[%s2 + $0x5e0] sm:$0xff]
  %v1783 = vld [vmem:[%s2 + $0x5e8] sm:$0xff]
  %v1784 = vld [vmem:[%s2 + $0x5f0] sm:$0xff]
  %v1785 = vld [vmem:[%s2 + $0x5f8] sm:$0xff]
  %v1786 = vld [vmem:[%s3] sm:$0xff]
  %v1787 = vld [vmem:[%s3 + $0x8] sm:$0xff]
  %v1788 = vld [vmem:[%s3 + $0x10] sm:$0xff]
  %v1789 = vld [vmem:[%s3 + $0x18] sm:$0xff]
  %v1790 = vld [vmem:[%s3 + $0x20] sm:$0xff]
  %v1791 = vld [vmem:[%s3 + $0x28] sm:$0xff]
  %v1792 = vld [vmem:[%s3 + $0x30] sm:$0xff]
  %v1793 = vld [vmem:[%s3 + $0x38] sm:$0xff]
  %v1794 = vld [vmem:[%s3 + $0x40] sm:$0xff]
  %v1795 = vld [vmem:[%s3 + $0x48] sm:$0xff]
  %v1796 = vld [vmem:[%s3 + $0x50] sm:$0xff]
  %v1797 = vld [vmem:[%s3 + $0x58] sm:$0xff]
  %v1798 = vld [vmem:[%s3 + $0x60] sm:$0xff]
  %v1799 = vld [vmem:[%s3 + $0x68] sm:$0xff]
  %v1800 = vld [vmem:[%s3 + $0x70] sm:$0xff]
  %v1801 = vld [vmem:[%s3 + $0x78] sm:$0xff]
  %v1802 = vld [vmem:[%s3 + $0x80] sm:$0xff]
  %v1803 = vld [vmem:[%s3 + $0x88] sm:$0xff]
  %v1804 = vld [vmem:[%s3 + $0x90] sm:$0xff]
  %v1805 = vld [vmem:[%s3 + $0x98] sm:$0xff]
  %v1806 = vld [vmem:[%s3 + $0xa0] sm:$0xff]
  %v1807 = vld [vmem:[%s3 + $0xa8] sm:$0xff]
  %v1808 = vld [vmem:[%s3 + $0xb0] sm:$0xff]
  %v1809 = vld [vmem:[%s3 + $0xb8] sm:$0xff]
  %v1810 = vld [vmem:[%s3 + $0xc0] sm:$0xff]
  %v1811 = vld [vmem:[%s3 + $0xc8] sm:$0xff]
  %v1812 = vld [vmem:[%s3 + $0xd0] sm:$0xff]
  %v1813 = vld [vmem:[%s3 + $0xd8] sm:$0xff]
  %v1814 = vld [vmem:[%s3 + $0xe0] sm:$0xff]
  %v1815 = vld [vmem:[%s3 + $0xe8] sm:$0xff]
  %v1816 = vld [vmem:[%s3 + $0xf0] sm:$0xff]
  %v1817 = vld [vmem:[%s3 + $0xf8] sm:$0xff]
  %1819 = vset.pattern.permute.xlu0 0
  %1820 = vperm.xlu0 %1819, %v1786
  %v1821 = vpop.permute.xlu0 %1820
  %1824 = vset.pattern.permute.xlu0 0
  %1825 = vperm.xlu0 %1824, %v1787
  %v1826 = vpop.permute.xlu0 %1825
  %1829 = vset.pattern.permute.xlu0 0
  %1830 = vperm.xlu0 %1829, %v1788
  %v1831 = vpop.permute.xlu0 %1830
  %1834 = vset.pattern.permute.xlu0 0
  %1835 = vperm.xlu0 %1834, %v1789
  %v1836 = vpop.permute.xlu0 %1835
  %1839 = vset.pattern.permute.xlu0 0
  %1840 = vperm.xlu0 %1839, %v1790
  %v1841 = vpop.permute.xlu0 %1840
  %1844 = vset.pattern.permute.xlu0 0
  %1845 = vperm.xlu0 %1844, %v1791
  %v1846 = vpop.permute.xlu0 %1845
  %1849 = vset.pattern.permute.xlu0 0
  %1850 = vperm.xlu0 %1849, %v1792
  %v1851 = vpop.permute.xlu0 %1850
  %1854 = vset.pattern.permute.xlu0 0
  %1855 = vperm.xlu0 %1854, %v1793
  %v1856 = vpop.permute.xlu0 %1855
  %1859 = vset.pattern.permute.xlu0 0
  %1860 = vperm.xlu0 %1859, %v1794
  %v1861 = vpop.permute.xlu0 %1860
  %1864 = vset.pattern.permute.xlu0 0
  %1865 = vperm.xlu0 %1864, %v1795
  %v1866 = vpop.permute.xlu0 %1865
  %1869 = vset.pattern.permute.xlu0 0
  %1870 = vperm.xlu0 %1869, %v1796
  %v1871 = vpop.permute.xlu0 %1870
  %1874 = vset.pattern.permute.xlu0 0
  %1875 = vperm.xlu0 %1874, %v1797
  %v1876 = vpop.permute.xlu0 %1875
  %1879 = vset.pattern.permute.xlu0 0
  %1880 = vperm.xlu0 %1879, %v1798
  %v1881 = vpop.permute.xlu0 %1880
  %1884 = vset.pattern.permute.xlu0 0
  %1885 = vperm.xlu0 %1884, %v1799
  %v1886 = vpop.permute.xlu0 %1885
  %1889 = vset.pattern.permute.xlu0 0
  %1890 = vperm.xlu0 %1889, %v1800
  %v1891 = vpop.permute.xlu0 %1890
  %1894 = vset.pattern.permute.xlu0 0
  %1895 = vperm.xlu0 %1894, %v1801
  %v1896 = vpop.permute.xlu0 %1895
  %1899 = vset.pattern.permute.xlu0 0
  %1900 = vperm.xlu0 %1899, %v1802
  %v1901 = vpop.permute.xlu0 %1900
  %1904 = vset.pattern.permute.xlu0 0
  %1905 = vperm.xlu0 %1904, %v1803
  %v1906 = vpop.permute.xlu0 %1905
  %1909 = vset.pattern.permute.xlu0 0
  %1910 = vperm.xlu0 %1909, %v1804
  %v1911 = vpop.permute.xlu0 %1910
  %1914 = vset.pattern.permute.xlu0 0
  %1915 = vperm.xlu0 %1914, %v1805
  %v1916 = vpop.permute.xlu0 %1915
  %1919 = vset.pattern.permute.xlu0 0
  %1920 = vperm.xlu0 %1919, %v1806
  %v1921 = vpop.permute.xlu0 %1920
  %1924 = vset.pattern.permute.xlu0 0
  %1925 = vperm.xlu0 %1924, %v1807
  %v1926 = vpop.permute.xlu0 %1925
  %1929 = vset.pattern.permute.xlu0 0
  %1930 = vperm.xlu0 %1929, %v1808
  %v1931 = vpop.permute.xlu0 %1930
  %1934 = vset.pattern.permute.xlu0 0
  %1935 = vperm.xlu0 %1934, %v1809
  %v1936 = vpop.permute.xlu0 %1935
  %1939 = vset.pattern.permute.xlu0 0
  %1940 = vperm.xlu0 %1939, %v1810
  %v1941 = vpop.permute.xlu0 %1940
  %1944 = vset.pattern.permute.xlu0 0
  %1945 = vperm.xlu0 %1944, %v1811
  %v1946 = vpop.permute.xlu0 %1945
  %1949 = vset.pattern.permute.xlu0 0
  %1950 = vperm.xlu0 %1949, %v1812
  %v1951 = vpop.permute.xlu0 %1950
  %1954 = vset.pattern.permute.xlu0 0
  %1955 = vperm.xlu0 %1954, %v1813
  %v1956 = vpop.permute.xlu0 %1955
  %1959 = vset.pattern.permute.xlu0 0
  %1960 = vperm.xlu0 %1959, %v1814
  %v1961 = vpop.permute.xlu0 %1960
  %1964 = vset.pattern.permute.xlu0 0
  %1965 = vperm.xlu0 %1964, %v1815
  %v1966 = vpop.permute.xlu0 %1965
  %1969 = vset.pattern.permute.xlu0 0
  %1970 = vperm.xlu0 %1969, %v1816
  %v1971 = vpop.permute.xlu0 %1970
  %1974 = vset.pattern.permute.xlu0 0
  %1975 = vperm.xlu0 %1974, %v1817
  %v1976 = vpop.permute.xlu0 %1975
  %v2170 = vunpack.c.l.b16 %v1594
  %v2171 = vunpack.c.h.b16 %v1594
  %v2172 = vunpack.c.l.b16 %v1595
  %v2173 = vunpack.c.h.b16 %v1595
  %v2174 = vunpack.c.l.b16 %v1596
  %v2175 = vunpack.c.h.b16 %v1596
  %v2176 = vunpack.c.l.b16 %v1597
  %v2177 = vunpack.c.h.b16 %v1597
  %v2178 = vunpack.c.l.b16 %v1598
  %v2179 = vunpack.c.h.b16 %v1598
  %v2180 = vunpack.c.l.b16 %v1599
  %v2181 = vunpack.c.h.b16 %v1599
  %v2182 = vunpack.c.l.b16 %v1600
  %v2183 = vunpack.c.h.b16 %v1600
  %v2184 = vunpack.c.l.b16 %v1601
  %v2185 = vunpack.c.h.b16 %v1601
  %v2186 = vunpack.c.l.b16 %v1602
  %v2187 = vunpack.c.h.b16 %v1602
  %v2188 = vunpack.c.l.b16 %v1603
  %v2189 = vunpack.c.h.b16 %v1603
  %v2190 = vunpack.c.l.b16 %v1604
  %v2191 = vunpack.c.h.b16 %v1604
  %v2192 = vunpack.c.l.b16 %v1605
  %v2193 = vunpack.c.h.b16 %v1605
  %v2194 = vunpack.c.l.b16 %v1606
  %v2195 = vunpack.c.h.b16 %v1606
  %v2196 = vunpack.c.l.b16 %v1607
  %v2197 = vunpack.c.h.b16 %v1607
  %v2198 = vunpack.c.l.b16 %v1608
  %v2199 = vunpack.c.h.b16 %v1608
  %v2200 = vunpack.c.l.b16 %v1609
  %v2201 = vunpack.c.h.b16 %v1609
  %v2202 = vunpack.c.l.b16 %v1610
  %v2203 = vunpack.c.h.b16 %v1610
  %v2204 = vunpack.c.l.b16 %v1611
  %v2205 = vunpack.c.h.b16 %v1611
  %v2206 = vunpack.c.l.b16 %v1612
  %v2207 = vunpack.c.h.b16 %v1612
  %v2208 = vunpack.c.l.b16 %v1613
  %v2209 = vunpack.c.h.b16 %v1613
  %v2210 = vunpack.c.l.b16 %v1614
  %v2211 = vunpack.c.h.b16 %v1614
  %v2212 = vunpack.c.l.b16 %v1615
  %v2213 = vunpack.c.h.b16 %v1615
  %v2214 = vunpack.c.l.b16 %v1616
  %v2215 = vunpack.c.h.b16 %v1616
  %v2216 = vunpack.c.l.b16 %v1617
  %v2217 = vunpack.c.h.b16 %v1617
  %v2218 = vunpack.c.l.b16 %v1618
  %v2219 = vunpack.c.h.b16 %v1618
  %v2220 = vunpack.c.l.b16 %v1619
  %v2221 = vunpack.c.h.b16 %v1619
  %v2222 = vunpack.c.l.b16 %v1620
  %v2223 = vunpack.c.h.b16 %v1620
  %v2224 = vunpack.c.l.b16 %v1621
  %v2225 = vunpack.c.h.b16 %v1621
  %v2226 = vunpack.c.l.b16 %v1622
  %v2227 = vunpack.c.h.b16 %v1622
  %v2228 = vunpack.c.l.b16 %v1623
  %v2229 = vunpack.c.h.b16 %v1623
  %v2230 = vunpack.c.l.b16 %v1624
  %v2231 = vunpack.c.h.b16 %v1624
  %v2232 = vunpack.c.l.b16 %v1625
  %v2233 = vunpack.c.h.b16 %v1625
  %v2234 = vunpack.c.l.b16 %v1626
  %v2235 = vunpack.c.h.b16 %v1626
  %v2236 = vunpack.c.l.b16 %v1627
  %v2237 = vunpack.c.h.b16 %v1627
  %v2238 = vunpack.c.l.b16 %v1628
  %v2239 = vunpack.c.h.b16 %v1628
  %v2240 = vunpack.c.l.b16 %v1629
  %v2241 = vunpack.c.h.b16 %v1629
  %v2242 = vunpack.c.l.b16 %v1630
  %v2243 = vunpack.c.h.b16 %v1630
  %v2244 = vunpack.c.l.b16 %v1631
  %v2245 = vunpack.c.h.b16 %v1631
  %v2246 = vunpack.c.l.b16 %v1632
  %v2247 = vunpack.c.h.b16 %v1632
  %v2248 = vunpack.c.l.b16 %v1633
  %v2249 = vunpack.c.h.b16 %v1633
  %v2250 = vunpack.c.l.b16 %v1634
  %v2251 = vunpack.c.h.b16 %v1634
  %v2252 = vunpack.c.l.b16 %v1635
  %v2253 = vunpack.c.h.b16 %v1635
  %v2254 = vunpack.c.l.b16 %v1636
  %v2255 = vunpack.c.h.b16 %v1636
  %v2256 = vunpack.c.l.b16 %v1637
  %v2257 = vunpack.c.h.b16 %v1637
  %v2258 = vunpack.c.l.b16 %v1638
  %v2259 = vunpack.c.h.b16 %v1638
  %v2260 = vunpack.c.l.b16 %v1639
  %v2261 = vunpack.c.h.b16 %v1639
  %v2262 = vunpack.c.l.b16 %v1640
  %v2263 = vunpack.c.h.b16 %v1640
  %v2264 = vunpack.c.l.b16 %v1641
  %v2265 = vunpack.c.h.b16 %v1641
  %v2266 = vunpack.c.l.b16 %v1642
  %v2267 = vunpack.c.h.b16 %v1642
  %v2268 = vunpack.c.l.b16 %v1643
  %v2269 = vunpack.c.h.b16 %v1643
  %v2270 = vunpack.c.l.b16 %v1644
  %v2271 = vunpack.c.h.b16 %v1644
  %v2272 = vunpack.c.l.b16 %v1645
  %v2273 = vunpack.c.h.b16 %v1645
  %v2274 = vunpack.c.l.b16 %v1646
  %v2275 = vunpack.c.h.b16 %v1646
  %v2276 = vunpack.c.l.b16 %v1647
  %v2277 = vunpack.c.h.b16 %v1647
  %v2278 = vunpack.c.l.b16 %v1648
  %v2279 = vunpack.c.h.b16 %v1648
  %v2280 = vunpack.c.l.b16 %v1649
  %v2281 = vunpack.c.h.b16 %v1649
  %v2282 = vunpack.c.l.b16 %v1650
  %v2283 = vunpack.c.h.b16 %v1650
  %v2284 = vunpack.c.l.b16 %v1651
  %v2285 = vunpack.c.h.b16 %v1651
  %v2286 = vunpack.c.l.b16 %v1652
  %v2287 = vunpack.c.h.b16 %v1652
  %v2288 = vunpack.c.l.b16 %v1653
  %v2289 = vunpack.c.h.b16 %v1653
  %v2290 = vunpack.c.l.b16 %v1654
  %v2291 = vunpack.c.h.b16 %v1654
  %v2292 = vunpack.c.l.b16 %v1655
  %v2293 = vunpack.c.h.b16 %v1655
  %v2294 = vunpack.c.l.b16 %v1656
  %v2295 = vunpack.c.h.b16 %v1656
  %v2296 = vunpack.c.l.b16 %v1657
  %v2297 = vunpack.c.h.b16 %v1657
  %v2298 = vunpack.c.l.b16 %v1658
  %v2299 = vunpack.c.h.b16 %v1658
  %v2300 = vunpack.c.l.b16 %v1659
  %v2301 = vunpack.c.h.b16 %v1659
  %v2302 = vunpack.c.l.b16 %v1660
  %v2303 = vunpack.c.h.b16 %v1660
  %v2304 = vunpack.c.l.b16 %v1661
  %v2305 = vunpack.c.h.b16 %v1661
  %v2306 = vunpack.c.l.b16 %v1662
  %v2307 = vunpack.c.h.b16 %v1662
  %v2308 = vunpack.c.l.b16 %v1663
  %v2309 = vunpack.c.h.b16 %v1663
  %v2310 = vunpack.c.l.b16 %v1664
  %v2311 = vunpack.c.h.b16 %v1664
  %v2312 = vunpack.c.l.b16 %v1665
  %v2313 = vunpack.c.h.b16 %v1665
  %v2314 = vunpack.c.l.b16 %v1666
  %v2315 = vunpack.c.h.b16 %v1666
  %v2316 = vunpack.c.l.b16 %v1667
  %v2317 = vunpack.c.h.b16 %v1667
  %v2318 = vunpack.c.l.b16 %v1668
  %v2319 = vunpack.c.h.b16 %v1668
  %v2320 = vunpack.c.l.b16 %v1669
  %v2321 = vunpack.c.h.b16 %v1669
  %v2322 = vunpack.c.l.b16 %v1670
  %v2323 = vunpack.c.h.b16 %v1670
  %v2324 = vunpack.c.l.b16 %v1671
  %v2325 = vunpack.c.h.b16 %v1671
  %v2326 = vunpack.c.l.b16 %v1672
  %v2327 = vunpack.c.h.b16 %v1672
  %v2328 = vunpack.c.l.b16 %v1673
  %v2329 = vunpack.c.h.b16 %v1673
  %v2330 = vunpack.c.l.b16 %v1674
  %v2331 = vunpack.c.h.b16 %v1674
  %v2332 = vunpack.c.l.b16 %v1675
  %v2333 = vunpack.c.h.b16 %v1675
  %v2334 = vunpack.c.l.b16 %v1676
  %v2335 = vunpack.c.h.b16 %v1676
  %v2336 = vunpack.c.l.b16 %v1677
  %v2337 = vunpack.c.h.b16 %v1677
  %v2338 = vunpack.c.l.b16 %v1678
  %v2339 = vunpack.c.h.b16 %v1678
  %v2340 = vunpack.c.l.b16 %v1679
  %v2341 = vunpack.c.h.b16 %v1679
  %v2342 = vunpack.c.l.b16 %v1680
  %v2343 = vunpack.c.h.b16 %v1680
  %v2344 = vunpack.c.l.b16 %v1681
  %v2345 = vunpack.c.h.b16 %v1681
  %v2346 = vunpack.c.l.b16 %v1682
  %v2347 = vunpack.c.h.b16 %v1682
  %v2348 = vunpack.c.l.b16 %v1683
  %v2349 = vunpack.c.h.b16 %v1683
  %v2350 = vunpack.c.l.b16 %v1684
  %v2351 = vunpack.c.h.b16 %v1684
  %v2352 = vunpack.c.l.b16 %v1685
  %v2353 = vunpack.c.h.b16 %v1685
  %v2354 = vunpack.c.l.b16 %v1686
  %v2355 = vunpack.c.h.b16 %v1686
  %v2356 = vunpack.c.l.b16 %v1687
  %v2357 = vunpack.c.h.b16 %v1687
  %v2358 = vunpack.c.l.b16 %v1688
  %v2359 = vunpack.c.h.b16 %v1688
  %v2360 = vunpack.c.l.b16 %v1689
  %v2361 = vunpack.c.h.b16 %v1689
  %v2362 = vunpack.c.l.b16 %v1690
  %v2363 = vunpack.c.h.b16 %v1690
  %v2364 = vunpack.c.l.b16 %v1691
  %v2365 = vunpack.c.h.b16 %v1691
  %v2366 = vunpack.c.l.b16 %v1692
  %v2367 = vunpack.c.h.b16 %v1692
  %v2368 = vunpack.c.l.b16 %v1693
  %v2369 = vunpack.c.h.b16 %v1693
  %v2370 = vunpack.c.l.b16 %v1694
  %v2371 = vunpack.c.h.b16 %v1694
  %v2372 = vunpack.c.l.b16 %v1695
  %v2373 = vunpack.c.h.b16 %v1695
  %v2374 = vunpack.c.l.b16 %v1696
  %v2375 = vunpack.c.h.b16 %v1696
  %v2376 = vunpack.c.l.b16 %v1697
  %v2377 = vunpack.c.h.b16 %v1697
  %v2378 = vunpack.c.l.b16 %v1698
  %v2379 = vunpack.c.h.b16 %v1698
  %v2380 = vunpack.c.l.b16 %v1699
  %v2381 = vunpack.c.h.b16 %v1699
  %v2382 = vunpack.c.l.b16 %v1700
  %v2383 = vunpack.c.h.b16 %v1700
  %v2384 = vunpack.c.l.b16 %v1701
  %v2385 = vunpack.c.h.b16 %v1701
  %v2386 = vunpack.c.l.b16 %v1702
  %v2387 = vunpack.c.h.b16 %v1702
  %v2388 = vunpack.c.l.b16 %v1703
  %v2389 = vunpack.c.h.b16 %v1703
  %v2390 = vunpack.c.l.b16 %v1704
  %v2391 = vunpack.c.h.b16 %v1704
  %v2392 = vunpack.c.l.b16 %v1705
  %v2393 = vunpack.c.h.b16 %v1705
  %v2394 = vunpack.c.l.b16 %v1706
  %v2395 = vunpack.c.h.b16 %v1706
  %v2396 = vunpack.c.l.b16 %v1707
  %v2397 = vunpack.c.h.b16 %v1707
  %v2398 = vunpack.c.l.b16 %v1708
  %v2399 = vunpack.c.h.b16 %v1708
  %v2400 = vunpack.c.l.b16 %v1709
  %v2401 = vunpack.c.h.b16 %v1709
  %v2402 = vunpack.c.l.b16 %v1710
  %v2403 = vunpack.c.h.b16 %v1710
  %v2404 = vunpack.c.l.b16 %v1711
  %v2405 = vunpack.c.h.b16 %v1711
  %v2406 = vunpack.c.l.b16 %v1712
  %v2407 = vunpack.c.h.b16 %v1712
  %v2408 = vunpack.c.l.b16 %v1713
  %v2409 = vunpack.c.h.b16 %v1713
  %v2410 = vunpack.c.l.b16 %v1714
  %v2411 = vunpack.c.h.b16 %v1714
  %v2412 = vunpack.c.l.b16 %v1715
  %v2413 = vunpack.c.h.b16 %v1715
  %v2414 = vunpack.c.l.b16 %v1716
  %v2415 = vunpack.c.h.b16 %v1716
  %v2416 = vunpack.c.l.b16 %v1717
  %v2417 = vunpack.c.h.b16 %v1717
  %v2418 = vunpack.c.l.b16 %v1718
  %v2419 = vunpack.c.h.b16 %v1718
  %v2420 = vunpack.c.l.b16 %v1719
  %v2421 = vunpack.c.h.b16 %v1719
  %v2422 = vunpack.c.l.b16 %v1720
  %v2423 = vunpack.c.h.b16 %v1720
  %v2424 = vunpack.c.l.b16 %v1721
  %v2425 = vunpack.c.h.b16 %v1721
  %v2426 = vunpack.c.l.b16 %v1722
  %v2427 = vunpack.c.h.b16 %v1722
  %v2428 = vunpack.c.l.b16 %v1723
  %v2429 = vunpack.c.h.b16 %v1723
  %v2430 = vunpack.c.l.b16 %v1724
  %v2431 = vunpack.c.h.b16 %v1724
  %v2432 = vunpack.c.l.b16 %v1725
  %v2433 = vunpack.c.h.b16 %v1725
  %v2434 = vunpack.c.l.b16 %v1726
  %v2435 = vunpack.c.h.b16 %v1726
  %v2436 = vunpack.c.l.b16 %v1727
  %v2437 = vunpack.c.h.b16 %v1727
  %v2438 = vunpack.c.l.b16 %v1728
  %v2439 = vunpack.c.h.b16 %v1728
  %v2440 = vunpack.c.l.b16 %v1729
  %v2441 = vunpack.c.h.b16 %v1729
  %v2442 = vunpack.c.l.b16 %v1730
  %v2443 = vunpack.c.h.b16 %v1730
  %v2444 = vunpack.c.l.b16 %v1731
  %v2445 = vunpack.c.h.b16 %v1731
  %v2446 = vunpack.c.l.b16 %v1732
  %v2447 = vunpack.c.h.b16 %v1732
  %v2448 = vunpack.c.l.b16 %v1733
  %v2449 = vunpack.c.h.b16 %v1733
  %v2450 = vunpack.c.l.b16 %v1734
  %v2451 = vunpack.c.h.b16 %v1734
  %v2452 = vunpack.c.l.b16 %v1735
  %v2453 = vunpack.c.h.b16 %v1735
  %v2454 = vunpack.c.l.b16 %v1736
  %v2455 = vunpack.c.h.b16 %v1736
  %v2456 = vunpack.c.l.b16 %v1737
  %v2457 = vunpack.c.h.b16 %v1737
  %v2458 = vunpack.c.l.b16 %v1738
  %v2459 = vunpack.c.h.b16 %v1738
  %v2460 = vunpack.c.l.b16 %v1739
  %v2461 = vunpack.c.h.b16 %v1739
  %v2462 = vunpack.c.l.b16 %v1740
  %v2463 = vunpack.c.h.b16 %v1740
  %v2464 = vunpack.c.l.b16 %v1741
  %v2465 = vunpack.c.h.b16 %v1741
  %v2466 = vunpack.c.l.b16 %v1742
  %v2467 = vunpack.c.h.b16 %v1742
  %v2468 = vunpack.c.l.b16 %v1743
  %v2469 = vunpack.c.h.b16 %v1743
  %v2470 = vunpack.c.l.b16 %v1744
  %v2471 = vunpack.c.h.b16 %v1744
  %v2472 = vunpack.c.l.b16 %v1745
  %v2473 = vunpack.c.h.b16 %v1745
  %v2474 = vunpack.c.l.b16 %v1746
  %v2475 = vunpack.c.h.b16 %v1746
  %v2476 = vunpack.c.l.b16 %v1747
  %v2477 = vunpack.c.h.b16 %v1747
  %v2478 = vunpack.c.l.b16 %v1748
  %v2479 = vunpack.c.h.b16 %v1748
  %v2480 = vunpack.c.l.b16 %v1749
  %v2481 = vunpack.c.h.b16 %v1749
  %v2482 = vunpack.c.l.b16 %v1750
  %v2483 = vunpack.c.h.b16 %v1750
  %v2484 = vunpack.c.l.b16 %v1751
  %v2485 = vunpack.c.h.b16 %v1751
  %v2486 = vunpack.c.l.b16 %v1752
  %v2487 = vunpack.c.h.b16 %v1752
  %v2488 = vunpack.c.l.b16 %v1753
  %v2489 = vunpack.c.h.b16 %v1753
  %v2490 = vunpack.c.l.b16 %v1754
  %v2491 = vunpack.c.h.b16 %v1754
  %v2492 = vunpack.c.l.b16 %v1755
  %v2493 = vunpack.c.h.b16 %v1755
  %v2494 = vunpack.c.l.b16 %v1756
  %v2495 = vunpack.c.h.b16 %v1756
  %v2496 = vunpack.c.l.b16 %v1757
  %v2497 = vunpack.c.h.b16 %v1757
  %v2498 = vunpack.c.l.b16 %v1758
  %v2499 = vunpack.c.h.b16 %v1758
  %v2500 = vunpack.c.l.b16 %v1759
  %v2501 = vunpack.c.h.b16 %v1759
  %v2502 = vunpack.c.l.b16 %v1760
  %v2503 = vunpack.c.h.b16 %v1760
  %v2504 = vunpack.c.l.b16 %v1761
  %v2505 = vunpack.c.h.b16 %v1761
  %v2506 = vunpack.c.l.b16 %v1762
  %v2507 = vunpack.c.h.b16 %v1762
  %v2508 = vunpack.c.l.b16 %v1763
  %v2509 = vunpack.c.h.b16 %v1763
  %v2510 = vunpack.c.l.b16 %v1764
  %v2511 = vunpack.c.h.b16 %v1764
  %v2512 = vunpack.c.l.b16 %v1765
  %v2513 = vunpack.c.h.b16 %v1765
  %v2514 = vunpack.c.l.b16 %v1766
  %v2515 = vunpack.c.h.b16 %v1766
  %v2516 = vunpack.c.l.b16 %v1767
  %v2517 = vunpack.c.h.b16 %v1767
  %v2518 = vunpack.c.l.b16 %v1768
  %v2519 = vunpack.c.h.b16 %v1768
  %v2520 = vunpack.c.l.b16 %v1769
  %v2521 = vunpack.c.h.b16 %v1769
  %v2522 = vunpack.c.l.b16 %v1770
  %v2523 = vunpack.c.h.b16 %v1770
  %v2524 = vunpack.c.l.b16 %v1771
  %v2525 = vunpack.c.h.b16 %v1771
  %v2526 = vunpack.c.l.b16 %v1772
  %v2527 = vunpack.c.h.b16 %v1772
  %v2528 = vunpack.c.l.b16 %v1773
  %v2529 = vunpack.c.h.b16 %v1773
  %v2530 = vunpack.c.l.b16 %v1774
  %v2531 = vunpack.c.h.b16 %v1774
  %v2532 = vunpack.c.l.b16 %v1775
  %v2533 = vunpack.c.h.b16 %v1775
  %v2534 = vunpack.c.l.b16 %v1776
  %v2535 = vunpack.c.h.b16 %v1776
  %v2536 = vunpack.c.l.b16 %v1777
  %v2537 = vunpack.c.h.b16 %v1777
  %v2538 = vunpack.c.l.b16 %v1778
  %v2539 = vunpack.c.h.b16 %v1778
  %v2540 = vunpack.c.l.b16 %v1779
  %v2541 = vunpack.c.h.b16 %v1779
  %v2542 = vunpack.c.l.b16 %v1780
  %v2543 = vunpack.c.h.b16 %v1780
  %v2544 = vunpack.c.l.b16 %v1781
  %v2545 = vunpack.c.h.b16 %v1781
  %v2546 = vunpack.c.l.b16 %v1782
  %v2547 = vunpack.c.h.b16 %v1782
  %v2548 = vunpack.c.l.b16 %v1783
  %v2549 = vunpack.c.h.b16 %v1783
  %v2550 = vunpack.c.l.b16 %v1784
  %v2551 = vunpack.c.h.b16 %v1784
  %v2552 = vunpack.c.l.b16 %v1785
  %v2553 = vunpack.c.h.b16 %v1785
  %v2554 = vpack.c.b16 %v2182, %v2170
  %v2555 = vpack.c.b16 %v2183, %v2171
  %v2556 = vpack.c.b16 %v2184, %v2172
  %v2557 = vpack.c.b16 %v2185, %v2173
  %v2558 = vpack.c.b16 %v2186, %v2174
  %v2559 = vpack.c.b16 %v2187, %v2175
  %v2560 = vpack.c.b16 %v2188, %v2176
  %v2561 = vpack.c.b16 %v2189, %v2177
  %v2562 = vpack.c.b16 %v2190, %v2178
  %v2563 = vpack.c.b16 %v2191, %v2179
  %v2564 = vpack.c.b16 %v2192, %v2180
  %v2565 = vpack.c.b16 %v2193, %v2181
  %v2566 = vpack.c.b16 %v2206, %v2194
  %v2567 = vpack.c.b16 %v2207, %v2195
  %v2568 = vpack.c.b16 %v2208, %v2196
  %v2569 = vpack.c.b16 %v2209, %v2197
  %v2570 = vpack.c.b16 %v2210, %v2198
  %v2571 = vpack.c.b16 %v2211, %v2199
  %v2572 = vpack.c.b16 %v2212, %v2200
  %v2573 = vpack.c.b16 %v2213, %v2201
  %v2574 = vpack.c.b16 %v2214, %v2202
  %v2575 = vpack.c.b16 %v2215, %v2203
  %v2576 = vpack.c.b16 %v2216, %v2204
  %v2577 = vpack.c.b16 %v2217, %v2205
  %v2578 = vpack.c.b16 %v2230, %v2218
  %v2579 = vpack.c.b16 %v2231, %v2219
  %v2580 = vpack.c.b16 %v2232, %v2220
  %v2581 = vpack.c.b16 %v2233, %v2221
  %v2582 = vpack.c.b16 %v2234, %v2222
  %v2583 = vpack.c.b16 %v2235, %v2223
  %v2584 = vpack.c.b16 %v2236, %v2224
  %v2585 = vpack.c.b16 %v2237, %v2225
  %v2586 = vpack.c.b16 %v2238, %v2226
  %v2587 = vpack.c.b16 %v2239, %v2227
  %v2588 = vpack.c.b16 %v2240, %v2228
  %v2589 = vpack.c.b16 %v2241, %v2229
  %v2590 = vpack.c.b16 %v2254, %v2242
  %v2591 = vpack.c.b16 %v2255, %v2243
  %v2592 = vpack.c.b16 %v2256, %v2244
  %v2593 = vpack.c.b16 %v2257, %v2245
  %v2594 = vpack.c.b16 %v2258, %v2246
  %v2595 = vpack.c.b16 %v2259, %v2247
  %v2596 = vpack.c.b16 %v2260, %v2248
  %v2597 = vpack.c.b16 %v2261, %v2249
  %v2598 = vpack.c.b16 %v2262, %v2250
  %v2599 = vpack.c.b16 %v2263, %v2251
  %v2600 = vpack.c.b16 %v2264, %v2252
  %v2601 = vpack.c.b16 %v2265, %v2253
  %v2602 = vpack.c.b16 %v2278, %v2266
  %v2603 = vpack.c.b16 %v2279, %v2267
  %v2604 = vpack.c.b16 %v2280, %v2268
  %v2605 = vpack.c.b16 %v2281, %v2269
  %v2606 = vpack.c.b16 %v2282, %v2270
  %v2607 = vpack.c.b16 %v2283, %v2271
  %v2608 = vpack.c.b16 %v2284, %v2272
  %v2609 = vpack.c.b16 %v2285, %v2273
  %v2610 = vpack.c.b16 %v2286, %v2274
  %v2611 = vpack.c.b16 %v2287, %v2275
  %v2612 = vpack.c.b16 %v2288, %v2276
  %v2613 = vpack.c.b16 %v2289, %v2277
  %v2614 = vpack.c.b16 %v2302, %v2290
  %v2615 = vpack.c.b16 %v2303, %v2291
  %v2616 = vpack.c.b16 %v2304, %v2292
  %v2617 = vpack.c.b16 %v2305, %v2293
  %v2618 = vpack.c.b16 %v2306, %v2294
  %v2619 = vpack.c.b16 %v2307, %v2295
  %v2620 = vpack.c.b16 %v2308, %v2296
  %v2621 = vpack.c.b16 %v2309, %v2297
  %v2622 = vpack.c.b16 %v2310, %v2298
  %v2623 = vpack.c.b16 %v2311, %v2299
  %v2624 = vpack.c.b16 %v2312, %v2300
  %v2625 = vpack.c.b16 %v2313, %v2301
  %v2626 = vpack.c.b16 %v2326, %v2314
  %v2627 = vpack.c.b16 %v2327, %v2315
  %v2628 = vpack.c.b16 %v2328, %v2316
  %v2629 = vpack.c.b16 %v2329, %v2317
  %v2630 = vpack.c.b16 %v2330, %v2318
  %v2631 = vpack.c.b16 %v2331, %v2319
  %v2632 = vpack.c.b16 %v2332, %v2320
  %v2633 = vpack.c.b16 %v2333, %v2321
  %v2634 = vpack.c.b16 %v2334, %v2322
  %v2635 = vpack.c.b16 %v2335, %v2323
  %v2636 = vpack.c.b16 %v2336, %v2324
  %v2637 = vpack.c.b16 %v2337, %v2325
  %v2638 = vpack.c.b16 %v2350, %v2338
  %v2639 = vpack.c.b16 %v2351, %v2339
  %v2640 = vpack.c.b16 %v2352, %v2340
  %v2641 = vpack.c.b16 %v2353, %v2341
  %v2642 = vpack.c.b16 %v2354, %v2342
  %v2643 = vpack.c.b16 %v2355, %v2343
  %v2644 = vpack.c.b16 %v2356, %v2344
  %v2645 = vpack.c.b16 %v2357, %v2345
  %v2646 = vpack.c.b16 %v2358, %v2346
  %v2647 = vpack.c.b16 %v2359, %v2347
  %v2648 = vpack.c.b16 %v2360, %v2348
  %v2649 = vpack.c.b16 %v2361, %v2349
  %v2650 = vpack.c.b16 %v2374, %v2362
  %v2651 = vpack.c.b16 %v2375, %v2363
  %v2652 = vpack.c.b16 %v2376, %v2364
  %v2653 = vpack.c.b16 %v2377, %v2365
  %v2654 = vpack.c.b16 %v2378, %v2366
  %v2655 = vpack.c.b16 %v2379, %v2367
  %v2656 = vpack.c.b16 %v2380, %v2368
  %v2657 = vpack.c.b16 %v2381, %v2369
  %v2658 = vpack.c.b16 %v2382, %v2370
  %v2659 = vpack.c.b16 %v2383, %v2371
  %v2660 = vpack.c.b16 %v2384, %v2372
  %v2661 = vpack.c.b16 %v2385, %v2373
  %v2662 = vpack.c.b16 %v2398, %v2386
  %v2663 = vpack.c.b16 %v2399, %v2387
  %v2664 = vpack.c.b16 %v2400, %v2388
  %v2665 = vpack.c.b16 %v2401, %v2389
  %v2666 = vpack.c.b16 %v2402, %v2390
  %v2667 = vpack.c.b16 %v2403, %v2391
  %v2668 = vpack.c.b16 %v2404, %v2392
  %v2669 = vpack.c.b16 %v2405, %v2393
  %v2670 = vpack.c.b16 %v2406, %v2394
  %v2671 = vpack.c.b16 %v2407, %v2395
  %v2672 = vpack.c.b16 %v2408, %v2396
  %v2673 = vpack.c.b16 %v2409, %v2397
  %v2674 = vpack.c.b16 %v2422, %v2410
  %v2675 = vpack.c.b16 %v2423, %v2411
  %v2676 = vpack.c.b16 %v2424, %v2412
  %v2677 = vpack.c.b16 %v2425, %v2413
  %v2678 = vpack.c.b16 %v2426, %v2414
  %v2679 = vpack.c.b16 %v2427, %v2415
  %v2680 = vpack.c.b16 %v2428, %v2416
  %v2681 = vpack.c.b16 %v2429, %v2417
  %v2682 = vpack.c.b16 %v2430, %v2418
  %v2683 = vpack.c.b16 %v2431, %v2419
  %v2684 = vpack.c.b16 %v2432, %v2420
  %v2685 = vpack.c.b16 %v2433, %v2421
  %v2686 = vpack.c.b16 %v2446, %v2434
  %v2687 = vpack.c.b16 %v2447, %v2435
  %v2688 = vpack.c.b16 %v2448, %v2436
  %v2689 = vpack.c.b16 %v2449, %v2437
  %v2690 = vpack.c.b16 %v2450, %v2438
  %v2691 = vpack.c.b16 %v2451, %v2439
  %v2692 = vpack.c.b16 %v2452, %v2440
  %v2693 = vpack.c.b16 %v2453, %v2441
  %v2694 = vpack.c.b16 %v2454, %v2442
  %v2695 = vpack.c.b16 %v2455, %v2443
  %v2696 = vpack.c.b16 %v2456, %v2444
  %v2697 = vpack.c.b16 %v2457, %v2445
  %v2698 = vpack.c.b16 %v2470, %v2458
  %v2699 = vpack.c.b16 %v2471, %v2459
  %v2700 = vpack.c.b16 %v2472, %v2460
  %v2701 = vpack.c.b16 %v2473, %v2461
  %v2702 = vpack.c.b16 %v2474, %v2462
  %v2703 = vpack.c.b16 %v2475, %v2463
  %v2704 = vpack.c.b16 %v2476, %v2464
  %v2705 = vpack.c.b16 %v2477, %v2465
  %v2706 = vpack.c.b16 %v2478, %v2466
  %v2707 = vpack.c.b16 %v2479, %v2467
  %v2708 = vpack.c.b16 %v2480, %v2468
  %v2709 = vpack.c.b16 %v2481, %v2469
  %v2710 = vpack.c.b16 %v2494, %v2482
  %v2711 = vpack.c.b16 %v2495, %v2483
  %v2712 = vpack.c.b16 %v2496, %v2484
  %v2713 = vpack.c.b16 %v2497, %v2485
  %v2714 = vpack.c.b16 %v2498, %v2486
  %v2715 = vpack.c.b16 %v2499, %v2487
  %v2716 = vpack.c.b16 %v2500, %v2488
  %v2717 = vpack.c.b16 %v2501, %v2489
  %v2718 = vpack.c.b16 %v2502, %v2490
  %v2719 = vpack.c.b16 %v2503, %v2491
  %v2720 = vpack.c.b16 %v2504, %v2492
  %v2721 = vpack.c.b16 %v2505, %v2493
  %v2722 = vpack.c.b16 %v2518, %v2506
  %v2723 = vpack.c.b16 %v2519, %v2507
  %v2724 = vpack.c.b16 %v2520, %v2508
  %v2725 = vpack.c.b16 %v2521, %v2509
  %v2726 = vpack.c.b16 %v2522, %v2510
  %v2727 = vpack.c.b16 %v2523, %v2511
  %v2728 = vpack.c.b16 %v2524, %v2512
  %v2729 = vpack.c.b16 %v2525, %v2513
  %v2730 = vpack.c.b16 %v2526, %v2514
  %v2731 = vpack.c.b16 %v2527, %v2515
  %v2732 = vpack.c.b16 %v2528, %v2516
  %v2733 = vpack.c.b16 %v2529, %v2517
  %v2734 = vpack.c.b16 %v2542, %v2530
  %v2735 = vpack.c.b16 %v2543, %v2531
  %v2736 = vpack.c.b16 %v2544, %v2532
  %v2737 = vpack.c.b16 %v2545, %v2533
  %v2738 = vpack.c.b16 %v2546, %v2534
  %v2739 = vpack.c.b16 %v2547, %v2535
  %v2740 = vpack.c.b16 %v2548, %v2536
  %v2741 = vpack.c.b16 %v2549, %v2537
  %v2742 = vpack.c.b16 %v2550, %v2538
  %v2743 = vpack.c.b16 %v2551, %v2539
  %v2744 = vpack.c.b16 %v2552, %v2540
  %v2745 = vpack.c.b16 %v2553, %v2541
  %vm2922 = vcmask 523264
  %v2924 = vsel %vm2922, %v2565, 0
  %v2927 = vsel %vm2922, %v2577, 0
  %v2930 = vsel %vm2922, %v2589, 0
  %v2933 = vsel %vm2922, %v2601, 0
  %v2936 = vsel %vm2922, %v2613, 0
  %v2939 = vsel %vm2922, %v2625, 0
  %v2942 = vsel %vm2922, %v2637, 0
  %v2945 = vsel %vm2922, %v2649, 0
  %v2948 = vsel %vm2922, %v2661, 0
  %v2951 = vsel %vm2922, %v2673, 0
  %v2954 = vsel %vm2922, %v2685, 0
  %v2957 = vsel %vm2922, %v2697, 0
  %v2960 = vsel %vm2922, %v2709, 0
  %v2963 = vsel %vm2922, %v2721, 0
  %v2966 = vsel %vm2922, %v2733, 0
  %v2969 = vsel %vm2922, %v2745, 0
  %2971 = vmatprep.subr.bf16.mxu0 0
  %2972 = vmatpush1.bf16.msra.mxu0 %v1502
  %2973 = vmatprep.subr.bf16.mxu0 0
  %2974 = vmatpush1.bf16.msra.mxu0 %v1503
  %2975 = vmatprep.subr.bf16.mxu0 0
  %2976 = vmatpush1.bf16.msra.mxu0 %v1504
  %2977 = vmatprep.subr.bf16.mxu0 0
  %2978 = vmatpush1.bf16.msra.mxu0 %v1505
  %2979 = vmatprep.subr.bf16.mxu0 0
  %2980 = vmatpush1.bf16.msra.mxu0 %v1506
  %2981 = vmatprep.subr.bf16.mxu0 0
  %2982 = vmatpush1.bf16.msra.mxu0 %v1507
  %2983 = vmatprep.subr.bf16.mxu0 0
  %2984 = vmatpush1.bf16.msra.mxu0 %v1508
  %2985 = vmatprep.subr.bf16.mxu0 0
  %2986 = vmatpush1.bf16.msra.mxu0 %v1509
  %2987 = vmatprep.subr.bf16.mxu0 0
  %2988 = vmatpush1.bf16.msra.mxu0 %v1510
  %2989 = vmatprep.subr.bf16.mxu0 0
  %2990 = vmatpush1.bf16.msra.mxu0 %v1511
  %2991 = vmatprep.subr.bf16.mxu0 0
  %2992 = vmatpush1.bf16.msra.mxu0 %v1512
  %2993 = vmatprep.subr.bf16.mxu0 0
  %2994 = vmatpush1.bf16.msra.mxu0 %v1513
  %2995 = vmatprep.subr.bf16.mxu0 0
  %2996 = vmatpush1.bf16.msra.mxu0 %v1514
  %2997 = vmatprep.subr.bf16.mxu0 0
  %2998 = vmatpush1.bf16.msra.mxu0 %v1515
  %2999 = vmatprep.subr.bf16.mxu0 0
  %3000 = vmatpush1.bf16.msra.mxu0 %v1516
  %3001 = vmatprep.subr.bf16.mxu0 0
  %3002 = vmatpush1.bf16.msra.mxu0 %v1517
  %3003 = vmatprep.mubr.bf16.mxu0 %v2555
  %3004 = vmatmul.mubr.bf16.gmra.mrb[0].mxu0 %v2554
  %v3005 = vpop.f32.mrb[0].mxu0
  %v3006 = vadd.f32 %v1821, %v3005
  %v3007 = vpop.f32.mrb[0].mxu0
  %v3008 = vpop.f32.mrb[0].mxu0
  %v3009 = vadd.f32 %v1826, %v3008
  %v3010 = vpop.f32.mrb[0].mxu0
  %3011 = vmatprep.mubr.bf16.mxu0 %v2567
  %3012 = vmatmul.mubr.bf16.gmra.mrb[0].mxu0 %v2566
  %v3013 = vpop.f32.mrb[0].mxu0
  %v3014 = vadd.f32 %v1831, %v3013
  %v3015 = vpop.f32.mrb[0].mxu0
  %v3016 = vpop.f32.mrb[0].mxu0
  %v3017 = vadd.f32 %v1836, %v3016
  %v3018 = vpop.f32.mrb[0].mxu0
  %3019 = vmatprep.mubr.bf16.mxu0 %v2579
  %3020 = vmatmul.mubr.bf16.gmra.mrb[0].mxu0 %v2578
  %v3021 = vpop.f32.mrb[0].mxu0
  %v3022 = vadd.f32 %v1841, %v3021
  %v3023 = vpop.f32.mrb[0].mxu0
  %v3024 = vpop.f32.mrb[0].mxu0
  %v3025 = vadd.f32 %v1846, %v3024
  %v3026 = vpop.f32.mrb[0].mxu0
  %3027 = vmatprep.mubr.bf16.mxu0 %v2591
  %3028 = vmatmul.mubr.bf16.gmra.mrb[0].mxu0 %v2590
  %v3029 = vpop.f32.mrb[0].mxu0
  %v3030 = vadd.f32 %v1851, %v3029
  %v3031 = vpop.f32.mrb[0].mxu0
  %v3032 = vpop.f32.mrb[0].mxu0
  %v3033 = vadd.f32 %v1856, %v3032
  %v3034 = vpop.f32.mrb[0].mxu0
  %3035 = vmatprep.mubr.bf16.mxu0 %v2603
  %3036 = vmatmul.mubr.bf16.gmra.mrb[0].mxu0 %v2602
  %v3037 = vpop.f32.mrb[0].mxu0
  %v3038 = vadd.f32 %v1861, %v3037
  %v3039 = vpop.f32.mrb[0].mxu0
  %v3040 = vpop.f32.mrb[0].mxu0
  %v3041 = vadd.f32 %v1866, %v3040
  %v3042 = vpop.f32.mrb[0].mxu0
  %3043 = vmatprep.mubr.bf16.mxu0 %v2615
  %3044 = vmatmul.mubr.bf16.gmra.mrb[0].mxu0 %v2614
  %v3045 = vpop.f32.mrb[0].mxu0
  %v3046 = vadd.f32 %v1871, %v3045
  %v3047 = vpop.f32.mrb[0].mxu0
  %v3048 = vpop.f32.mrb[0].mxu0
  %v3049 = vadd.f32 %v1876, %v3048
  %v3050 = vpop.f32.mrb[0].mxu0
  %3051 = vmatprep.mubr.bf16.mxu0 %v2627
  %3052 = vmatmul.mubr.bf16.gmra.mrb[0].mxu0 %v2626
  %v3053 = vpop.f32.mrb[0].mxu0
  %v3054 = vadd.f32 %v1881, %v3053
  %v3055 = vpop.f32.mrb[0].mxu0
  %v3056 = vpop.f32.mrb[0].mxu0
  %v3057 = vadd.f32 %v1886, %v3056
  %v3058 = vpop.f32.mrb[0].mxu0
  %3059 = vmatprep.mubr.bf16.mxu0 %v2639
  %3060 = vmatmul.mubr.bf16.gmra.mrb[0].mxu0 %v2638
  %v3061 = vpop.f32.mrb[0].mxu0
  %v3062 = vadd.f32 %v1891, %v3061
  %v3063 = vpop.f32.mrb[0].mxu0
  %v3064 = vpop.f32.mrb[0].mxu0
  %v3065 = vadd.f32 %v1896, %v3064
  %v3066 = vpop.f32.mrb[0].mxu0
  %3067 = vmatprep.mubr.bf16.mxu0 %v2651
  %3068 = vmatmul.mubr.bf16.gmra.mrb[0].mxu0 %v2650
  %v3069 = vpop.f32.mrb[0].mxu0
  %v3070 = vadd.f32 %v1901, %v3069
  %v3071 = vpop.f32.mrb[0].mxu0
  %v3072 = vpop.f32.mrb[0].mxu0
  %v3073 = vadd.f32 %v1906, %v3072
  %v3074 = vpop.f32.mrb[0].mxu0
  %3075 = vmatprep.mubr.bf16.mxu0 %v2663
  %3076 = vmatmul.mubr.bf16.gmra.mrb[0].mxu0 %v2662
  %v3077 = vpop.f32.mrb[0].mxu0
  %v3078 = vadd.f32 %v1911, %v3077
  %v3079 = vpop.f32.mrb[0].mxu0
  %v3080 = vpop.f32.mrb[0].mxu0
  %v3081 = vadd.f32 %v1916, %v3080
  %v3082 = vpop.f32.mrb[0].mxu0
  %3083 = vmatprep.mubr.bf16.mxu0 %v2675
  %3084 = vmatmul.mubr.bf16.gmra.mrb[0].mxu0 %v2674
  %v3085 = vpop.f32.mrb[0].mxu0
  %v3086 = vadd.f32 %v1921, %v3085
  %v3087 = vpop.f32.mrb[0].mxu0
  %v3088 = vpop.f32.mrb[0].mxu0
  %v3089 = vadd.f32 %v1926, %v3088
  %v3090 = vpop.f32.mrb[0].mxu0
  %3091 = vmatprep.mubr.bf16.mxu0 %v2687
  %3092 = vmatmul.mubr.bf16.gmra.mrb[0].mxu0 %v2686
  %v3093 = vpop.f32.mrb[0].mxu0
  %v3094 = vadd.f32 %v1931, %v3093
  %v3095 = vpop.f32.mrb[0].mxu0
  %v3096 = vpop.f32.mrb[0].mxu0
  %v3097 = vadd.f32 %v1936, %v3096
  %v3098 = vpop.f32.mrb[0].mxu0
  %3099 = vmatprep.mubr.bf16.mxu0 %v2699
  %3100 = vmatmul.mubr.bf16.gmra.mrb[0].mxu0 %v2698
  %v3101 = vpop.f32.mrb[0].mxu0
  %v3102 = vadd.f32 %v1941, %v3101
  %v3103 = vpop.f32.mrb[0].mxu0
  %v3104 = vpop.f32.mrb[0].mxu0
  %v3105 = vadd.f32 %v1946, %v3104
  %v3106 = vpop.f32.mrb[0].mxu0
  %3107 = vmatprep.mubr.bf16.mxu0 %v2711
  %3108 = vmatmul.mubr.bf16.gmra.mrb[0].mxu0 %v2710
  %v3109 = vpop.f32.mrb[0].mxu0
  %v3110 = vadd.f32 %v1951, %v3109
  %v3111 = vpop.f32.mrb[0].mxu0
  %v3112 = vpop.f32.mrb[0].mxu0
  %v3113 = vadd.f32 %v1956, %v3112
  %v3114 = vpop.f32.mrb[0].mxu0
  %3115 = vmatprep.mubr.bf16.mxu0 %v2723
  %3116 = vmatmul.mubr.bf16.gmra.mrb[0].mxu0 %v2722
  %v3117 = vpop.f32.mrb[0].mxu0
  %v3118 = vadd.f32 %v1961, %v3117
  %v3119 = vpop.f32.mrb[0].mxu0
  %v3120 = vpop.f32.mrb[0].mxu0
  %v3121 = vadd.f32 %v1966, %v3120
  %v3122 = vpop.f32.mrb[0].mxu0
  %3123 = vmatprep.mubr.bf16.mxu0 %v2735
  %3124 = vmatmul.mubr.bf16.gmra.mrb[0].mxu0 %v2734
  %v3125 = vpop.f32.mrb[0].mxu0
  %v3126 = vadd.f32 %v1971, %v3125
  %v3127 = vpop.f32.mrb[0].mxu0
  %v3128 = vpop.f32.mrb[0].mxu0
  %v3129 = vadd.f32 %v1976, %v3128
  %v3130 = vpop.f32.mrb[0].mxu0
  %3131 = vdwg.mxu0
  %3132 = vmatprep.subr.bf16.mxu0 0
  %3133 = vmatpush1.bf16.msra.mxu0 %v1518
  %3134 = vmatprep.subr.bf16.mxu0 0
  %3135 = vmatpush1.bf16.msra.mxu0 %v1519
  %3136 = vmatprep.subr.bf16.mxu0 0
  %3137 = vmatpush1.bf16.msra.mxu0 %v1520
  %3138 = vmatprep.subr.bf16.mxu0 0
  %3139 = vmatpush1.bf16.msra.mxu0 %v1521
  %3140 = vmatprep.subr.bf16.mxu0 0
  %3141 = vmatpush1.bf16.msra.mxu0 %v1522
  %3142 = vmatprep.subr.bf16.mxu0 0
  %3143 = vmatpush1.bf16.msra.mxu0 %v1523
  %3144 = vmatprep.subr.bf16.mxu0 0
  %3145 = vmatpush1.bf16.msra.mxu0 %v1524
  %3146 = vmatprep.subr.bf16.mxu0 0
  %3147 = vmatpush1.bf16.msra.mxu0 %v1525
  %3148 = vmatprep.subr.bf16.mxu0 0
  %3149 = vmatpush1.bf16.msra.mxu0 %v1526
  %3150 = vmatprep.subr.bf16.mxu0 0
  %3151 = vmatpush1.bf16.msra.mxu0 %v1527
  %3152 = vmatprep.subr.bf16.mxu0 0
  %3153 = vmatpush1.bf16.msra.mxu0 %v1528
  %3154 = vmatprep.subr.bf16.mxu0 0
  %3155 = vmatpush1.bf16.msra.mxu0 %v1529
  %3156 = vmatprep.subr.bf16.mxu0 0
  %3157 = vmatpush1.bf16.msra.mxu0 %v1530
  %3158 = vmatprep.subr.bf16.mxu0 0
  %3159 = vmatpush1.bf16.msra.mxu0 %v1531
  %3160 = vmatprep.subr.bf16.mxu0 0
  %3161 = vmatpush1.bf16.msra.mxu0 %v1532
  %3162 = vmatprep.subr.bf16.mxu0 0
  %3163 = vmatpush1.bf16.msra.mxu0 %v1533
  %3164 = vmatprep.mubr.bf16.mxu0 %v2557
  %3165 = vmatmul.mubr.bf16.gmra.mrb[0].mxu0 %v2556
  %v3166 = vpop.f32.mrb[0].mxu0
  %v3167 = vadd.f32 %v3006, %v3166
  %v3168 = vpop.f32.mrb[0].mxu0
  %v3169 = vpop.f32.mrb[0].mxu0
  %v3170 = vadd.f32 %v3009, %v3169
  %v3171 = vpop.f32.mrb[0].mxu0
  %3172 = vmatprep.mubr.bf16.mxu0 %v2569
  %3173 = vmatmul.mubr.bf16.gmra.mrb[0].mxu0 %v2568
  %v3174 = vpop.f32.mrb[0].mxu0
  %v3175 = vadd.f32 %v3014, %v3174
  %v3176 = vpop.f32.mrb[0].mxu0
  %v3177 = vpop.f32.mrb[0].mxu0
  %v3178 = vadd.f32 %v3017, %v3177
  %v3179 = vpop.f32.mrb[0].mxu0
  %3180 = vmatprep.mubr.bf16.mxu0 %v2581
  %3181 = vmatmul.mubr.bf16.gmra.mrb[0].mxu0 %v2580
  %v3182 = vpop.f32.mrb[0].mxu0
  %v3183 = vadd.f32 %v3022, %v3182
  %v3184 = vpop.f32.mrb[0].mxu0
  %v3185 = vpop.f32.mrb[0].mxu0
  %v3186 = vadd.f32 %v3025, %v3185
  %v3187 = vpop.f32.mrb[0].mxu0
  %3188 = vmatprep.mubr.bf16.mxu0 %v2593
  %3189 = vmatmul.mubr.bf16.gmra.mrb[0].mxu0 %v2592
  %v3190 = vpop.f32.mrb[0].mxu0
  %v3191 = vadd.f32 %v3030, %v3190
  %v3192 = vpop.f32.mrb[0].mxu0
  %v3193 = vpop.f32.mrb[0].mxu0
  %v3194 = vadd.f32 %v3033, %v3193
  %v3195 = vpop.f32.mrb[0].mxu0
  %3196 = vmatprep.mubr.bf16.mxu0 %v2605
  %3197 = vmatmul.mubr.bf16.gmra.mrb[0].mxu0 %v2604
  %v3198 = vpop.f32.mrb[0].mxu0
  %v3199 = vadd.f32 %v3038, %v3198
  %v3200 = vpop.f32.mrb[0].mxu0
  %v3201 = vpop.f32.mrb[0].mxu0
  %v3202 = vadd.f32 %v3041, %v3201
  %v3203 = vpop.f32.mrb[0].mxu0
  %3204 = vmatprep.mubr.bf16.mxu0 %v2617
  %3205 = vmatmul.mubr.bf16.gmra.mrb[0].mxu0 %v2616
  %v3206 = vpop.f32.mrb[0].mxu0
  %v3207 = vadd.f32 %v3046, %v3206
  %v3208 = vpop.f32.mrb[0].mxu0
  %v3209 = vpop.f32.mrb[0].mxu0
  %v3210 = vadd.f32 %v3049, %v3209
  %v3211 = vpop.f32.mrb[0].mxu0
  %3212 = vmatprep.mubr.bf16.mxu0 %v2629
  %3213 = vmatmul.mubr.bf16.gmra.mrb[0].mxu0 %v2628
  %v3214 = vpop.f32.mrb[0].mxu0
  %v3215 = vadd.f32 %v3054, %v3214
  %v3216 = vpop.f32.mrb[0].mxu0
  %v3217 = vpop.f32.mrb[0].mxu0
  %v3218 = vadd.f32 %v3057, %v3217
  %v3219 = vpop.f32.mrb[0].mxu0
  %3220 = vmatprep.mubr.bf16.mxu0 %v2641
  %3221 = vmatmul.mubr.bf16.gmra.mrb[0].mxu0 %v2640
  %v3222 = vpop.f32.mrb[0].mxu0
  %v3223 = vadd.f32 %v3062, %v3222
  %v3224 = vpop.f32.mrb[0].mxu0
  %v3225 = vpop.f32.mrb[0].mxu0
  %v3226 = vadd.f32 %v3065, %v3225
  %v3227 = vpop.f32.mrb[0].mxu0
  %3228 = vmatprep.mubr.bf16.mxu0 %v2653
  %3229 = vmatmul.mubr.bf16.gmra.mrb[0].mxu0 %v2652
  %v3230 = vpop.f32.mrb[0].mxu0
  %v3231 = vadd.f32 %v3070, %v3230
  %v3232 = vpop.f32.mrb[0].mxu0
  %v3233 = vpop.f32.mrb[0].mxu0
  %v3234 = vadd.f32 %v3073, %v3233
  %v3235 = vpop.f32.mrb[0].mxu0
  %3236 = vmatprep.mubr.bf16.mxu0 %v2665
  %3237 = vmatmul.mubr.bf16.gmra.mrb[0].mxu0 %v2664
  %v3238 = vpop.f32.mrb[0].mxu0
  %v3239 = vadd.f32 %v3078, %v3238
  %v3240 = vpop.f32.mrb[0].mxu0
  %v3241 = vpop.f32.mrb[0].mxu0
  %v3242 = vadd.f32 %v3081, %v3241
  %v3243 = vpop.f32.mrb[0].mxu0
  %3244 = vmatprep.mubr.bf16.mxu0 %v2677
  %3245 = vmatmul.mubr.bf16.gmra.mrb[0].mxu0 %v2676
  %v3246 = vpop.f32.mrb[0].mxu0
  %v3247 = vadd.f32 %v3086, %v3246
  %v3248 = vpop.f32.mrb[0].mxu0
  %v3249 = vpop.f32.mrb[0].mxu0
  %v3250 = vadd.f32 %v3089, %v3249
  %v3251 = vpop.f32.mrb[0].mxu0
  %3252 = vmatprep.mubr.bf16.mxu0 %v2689
  %3253 = vmatmul.mubr.bf16.gmra.mrb[0].mxu0 %v2688
  %v3254 = vpop.f32.mrb[0].mxu0
  %v3255 = vadd.f32 %v3094, %v3254
  %v3256 = vpop.f32.mrb[0].mxu0
  %v3257 = vpop.f32.mrb[0].mxu0
  %v3258 = vadd.f32 %v3097, %v3257
  %v3259 = vpop.f32.mrb[0].mxu0
  %3260 = vmatprep.mubr.bf16.mxu0 %v2701
  %3261 = vmatmul.mubr.bf16.gmra.mrb[0].mxu0 %v2700
  %v3262 = vpop.f32.mrb[0].mxu0
  %v3263 = vadd.f32 %v3102, %v3262
  %v3264 = vpop.f32.mrb[0].mxu0
  %v3265 = vpop.f32.mrb[0].mxu0
  %v3266 = vadd.f32 %v3105, %v3265
  %v3267 = vpop.f32.mrb[0].mxu0
  %3268 = vmatprep.mubr.bf16.mxu0 %v2713
  %3269 = vmatmul.mubr.bf16.gmra.mrb[0].mxu0 %v2712
  %v3270 = vpop.f32.mrb[0].mxu0
  %v3271 = vadd.f32 %v3110, %v3270
  %v3272 = vpop.f32.mrb[0].mxu0
  %v3273 = vpop.f32.mrb[0].mxu0
  %v3274 = vadd.f32 %v3113, %v3273
  %v3275 = vpop.f32.mrb[0].mxu0
  %3276 = vmatprep.mubr.bf16.mxu0 %v2725
  %3277 = vmatmul.mubr.bf16.gmra.mrb[0].mxu0 %v2724
  %v3278 = vpop.f32.mrb[0].mxu0
  %v3279 = vadd.f32 %v3118, %v3278
  %v3280 = vpop.f32.mrb[0].mxu0
  %v3281 = vpop.f32.mrb[0].mxu0
  %v3282 = vadd.f32 %v3121, %v3281
  %v3283 = vpop.f32.mrb[0].mxu0
  %3284 = vmatprep.mubr.bf16.mxu0 %v2737
  %3285 = vmatmul.mubr.bf16.gmra.mrb[0].mxu0 %v2736
  %v3286 = vpop.f32.mrb[0].mxu0
  %v3287 = vadd.f32 %v3126, %v3286
  %v3288 = vpop.f32.mrb[0].mxu0
  %v3289 = vpop.f32.mrb[0].mxu0
  %v3290 = vadd.f32 %v3129, %v3289
  %v3291 = vpop.f32.mrb[0].mxu0
  %3292 = vdwg.mxu0
  %3293 = vmatprep.subr.bf16.mxu0 0
  %3294 = vmatpush1.bf16.msra.mxu0 %v1534
  %3295 = vmatprep.subr.bf16.mxu0 0
  %3296 = vmatpush1.bf16.msra.mxu0 %v1535
  %3297 = vmatprep.subr.bf16.mxu0 0
  %3298 = vmatpush1.bf16.msra.mxu0 %v1536
  %3299 = vmatprep.subr.bf16.mxu0 0
  %3300 = vmatpush1.bf16.msra.mxu0 %v1537
  %3301 = vmatprep.subr.bf16.mxu0 0
  %3302 = vmatpush1.bf16.msra.mxu0 %v1538
  %3303 = vmatprep.subr.bf16.mxu0 0
  %3304 = vmatpush1.bf16.msra.mxu0 %v1539
  %3305 = vmatprep.subr.bf16.mxu0 0
  %3306 = vmatpush1.bf16.msra.mxu0 %v1540
  %3307 = vmatprep.subr.bf16.mxu0 0
  %3308 = vmatpush1.bf16.msra.mxu0 %v1541
  %3309 = vmatprep.subr.bf16.mxu0 0
  %3310 = vmatpush1.bf16.msra.mxu0 %v1542
  %3311 = vmatprep.subr.bf16.mxu0 0
  %3312 = vmatpush1.bf16.msra.mxu0 %v1543
  %3313 = vmatprep.subr.bf16.mxu0 0
  %3314 = vmatpush1.bf16.msra.mxu0 %v1544
  %3315 = vmatprep.subr.bf16.mxu0 0
  %3316 = vmatpush1.bf16.msra.mxu0 %v1545
  %3317 = vmatprep.subr.bf16.mxu0 0
  %3318 = vmatpush1.bf16.msra.mxu0 %v1546
  %3319 = vmatprep.subr.bf16.mxu0 0
  %3320 = vmatpush1.bf16.msra.mxu0 %v1547
  %3321 = vmatprep.subr.bf16.mxu0 0
  %3322 = vmatpush1.bf16.msra.mxu0 %v1548
  %3323 = vmatprep.subr.bf16.mxu0 0
  %3324 = vmatpush1.bf16.msra.mxu0 %v1549
  %3325 = vmatprep.mubr.bf16.mxu0 %v2559
  %3326 = vmatmul.mubr.bf16.gmra.mrb[0].mxu0 %v2558
  %v3327 = vpop.f32.mrb[0].mxu0
  %v3328 = vadd.f32 %v3167, %v3327
  %v3329 = vpop.f32.mrb[0].mxu0
  %v3330 = vpop.f32.mrb[0].mxu0
  %v3331 = vadd.f32 %v3170, %v3330
  %v3332 = vpop.f32.mrb[0].mxu0
  %3333 = vmatprep.mubr.bf16.mxu0 %v2571
  %3334 = vmatmul.mubr.bf16.gmra.mrb[0].mxu0 %v2570
  %v3335 = vpop.f32.mrb[0].mxu0
  %v3336 = vadd.f32 %v3175, %v3335
  %v3337 = vpop.f32.mrb[0].mxu0
  %v3338 = vpop.f32.mrb[0].mxu0
  %v3339 = vadd.f32 %v3178, %v3338
  %v3340 = vpop.f32.mrb[0].mxu0
  %3341 = vmatprep.mubr.bf16.mxu0 %v2583
  %3342 = vmatmul.mubr.bf16.gmra.mrb[0].mxu0 %v2582
  %v3343 = vpop.f32.mrb[0].mxu0
  %v3344 = vadd.f32 %v3183, %v3343
  %v3345 = vpop.f32.mrb[0].mxu0
  %v3346 = vpop.f32.mrb[0].mxu0
  %v3347 = vadd.f32 %v3186, %v3346
  %v3348 = vpop.f32.mrb[0].mxu0
  %3349 = vmatprep.mubr.bf16.mxu0 %v2595
  %3350 = vmatmul.mubr.bf16.gmra.mrb[0].mxu0 %v2594
  %v3351 = vpop.f32.mrb[0].mxu0
  %v3352 = vadd.f32 %v3191, %v3351
  %v3353 = vpop.f32.mrb[0].mxu0
  %v3354 = vpop.f32.mrb[0].mxu0
  %v3355 = vadd.f32 %v3194, %v3354
  %v3356 = vpop.f32.mrb[0].mxu0
  %3357 = vmatprep.mubr.bf16.mxu0 %v2607
  %3358 = vmatmul.mubr.bf16.gmra.mrb[0].mxu0 %v2606
  %v3359 = vpop.f32.mrb[0].mxu0
  %v3360 = vadd.f32 %v3199, %v3359
  %v3361 = vpop.f32.mrb[0].mxu0
  %v3362 = vpop.f32.mrb[0].mxu0
  %v3363 = vadd.f32 %v3202, %v3362
  %v3364 = vpop.f32.mrb[0].mxu0
  %3365 = vmatprep.mubr.bf16.mxu0 %v2619
  %3366 = vmatmul.mubr.bf16.gmra.mrb[0].mxu0 %v2618
  %v3367 = vpop.f32.mrb[0].mxu0
  %v3368 = vadd.f32 %v3207, %v3367
  %v3369 = vpop.f32.mrb[0].mxu0
  %v3370 = vpop.f32.mrb[0].mxu0
  %v3371 = vadd.f32 %v3210, %v3370
  %v3372 = vpop.f32.mrb[0].mxu0
  %3373 = vmatprep.mubr.bf16.mxu0 %v2631
  %3374 = vmatmul.mubr.bf16.gmra.mrb[0].mxu0 %v2630
  %v3375 = vpop.f32.mrb[0].mxu0
  %v3376 = vadd.f32 %v3215, %v3375
  %v3377 = vpop.f32.mrb[0].mxu0
  %v3378 = vpop.f32.mrb[0].mxu0
  %v3379 = vadd.f32 %v3218, %v3378
  %v3380 = vpop.f32.mrb[0].mxu0
  %3381 = vmatprep.mubr.bf16.mxu0 %v2643
  %3382 = vmatmul.mubr.bf16.gmra.mrb[0].mxu0 %v2642
  %v3383 = vpop.f32.mrb[0].mxu0
  %v3384 = vadd.f32 %v3223, %v3383
  %v3385 = vpop.f32.mrb[0].mxu0
  %v3386 = vpop.f32.mrb[0].mxu0
  %v3387 = vadd.f32 %v3226, %v3386
  %v3388 = vpop.f32.mrb[0].mxu0
  %3389 = vmatprep.mubr.bf16.mxu0 %v2655
  %3390 = vmatmul.mubr.bf16.gmra.mrb[0].mxu0 %v2654
  %v3391 = vpop.f32.mrb[0].mxu0
  %v3392 = vadd.f32 %v3231, %v3391
  %v3393 = vpop.f32.mrb[0].mxu0
  %v3394 = vpop.f32.mrb[0].mxu0
  %v3395 = vadd.f32 %v3234, %v3394
  %v3396 = vpop.f32.mrb[0].mxu0
  %3397 = vmatprep.mubr.bf16.mxu0 %v2667
  %3398 = vmatmul.mubr.bf16.gmra.mrb[0].mxu0 %v2666
  %v3399 = vpop.f32.mrb[0].mxu0
  %v3400 = vadd.f32 %v3239, %v3399
  %v3401 = vpop.f32.mrb[0].mxu0
  %v3402 = vpop.f32.mrb[0].mxu0
  %v3403 = vadd.f32 %v3242, %v3402
  %v3404 = vpop.f32.mrb[0].mxu0
  %3405 = vmatprep.mubr.bf16.mxu0 %v2679
  %3406 = vmatmul.mubr.bf16.gmra.mrb[0].mxu0 %v2678
  %v3407 = vpop.f32.mrb[0].mxu0
  %v3408 = vadd.f32 %v3247, %v3407
  %v3409 = vpop.f32.mrb[0].mxu0
  %v3410 = vpop.f32.mrb[0].mxu0
  %v3411 = vadd.f32 %v3250, %v3410
  %v3412 = vpop.f32.mrb[0].mxu0
  %3413 = vmatprep.mubr.bf16.mxu0 %v2691
  %3414 = vmatmul.mubr.bf16.gmra.mrb[0].mxu0 %v2690
  %v3415 = vpop.f32.mrb[0].mxu0
  %v3416 = vadd.f32 %v3255, %v3415
  %v3417 = vpop.f32.mrb[0].mxu0
  %v3418 = vpop.f32.mrb[0].mxu0
  %v3419 = vadd.f32 %v3258, %v3418
  %v3420 = vpop.f32.mrb[0].mxu0
  %3421 = vmatprep.mubr.bf16.mxu0 %v2703
  %3422 = vmatmul.mubr.bf16.gmra.mrb[0].mxu0 %v2702
  %v3423 = vpop.f32.mrb[0].mxu0
  %v3424 = vadd.f32 %v3263, %v3423
  %v3425 = vpop.f32.mrb[0].mxu0
  %v3426 = vpop.f32.mrb[0].mxu0
  %v3427 = vadd.f32 %v3266, %v3426
  %v3428 = vpop.f32.mrb[0].mxu0
  %3429 = vmatprep.mubr.bf16.mxu0 %v2715
  %3430 = vmatmul.mubr.bf16.gmra.mrb[0].mxu0 %v2714
  %v3431 = vpop.f32.mrb[0].mxu0
  %v3432 = vadd.f32 %v3271, %v3431
  %v3433 = vpop.f32.mrb[0].mxu0
  %v3434 = vpop.f32.mrb[0].mxu0
  %v3435 = vadd.f32 %v3274, %v3434
  %v3436 = vpop.f32.mrb[0].mxu0
  %3437 = vmatprep.mubr.bf16.mxu0 %v2727
  %3438 = vmatmul.mubr.bf16.gmra.mrb[0].mxu0 %v2726
  %v3439 = vpop.f32.mrb[0].mxu0
  %v3440 = vadd.f32 %v3279, %v3439
  %v3441 = vpop.f32.mrb[0].mxu0
  %v3442 = vpop.f32.mrb[0].mxu0
  %v3443 = vadd.f32 %v3282, %v3442
  %v3444 = vpop.f32.mrb[0].mxu0
  %3445 = vmatprep.mubr.bf16.mxu0 %v2739
  %3446 = vmatmul.mubr.bf16.gmra.mrb[0].mxu0 %v2738
  %v3447 = vpop.f32.mrb[0].mxu0
  %v3448 = vadd.f32 %v3287, %v3447
  %v3449 = vpop.f32.mrb[0].mxu0
  %v3450 = vpop.f32.mrb[0].mxu0
  %v3451 = vadd.f32 %v3290, %v3450
  %v3452 = vpop.f32.mrb[0].mxu0
  %3453 = vdwg.mxu0
  %3454 = vmatprep.subr.bf16.mxu0 0
  %3455 = vmatpush1.bf16.msra.mxu0 %v1550
  %3456 = vmatprep.subr.bf16.mxu0 0
  %3457 = vmatpush1.bf16.msra.mxu0 %v1551
  %3458 = vmatprep.subr.bf16.mxu0 0
  %3459 = vmatpush1.bf16.msra.mxu0 %v1552
  %3460 = vmatprep.subr.bf16.mxu0 0
  %3461 = vmatpush1.bf16.msra.mxu0 %v1553
  %3462 = vmatprep.subr.bf16.mxu0 0
  %3463 = vmatpush1.bf16.msra.mxu0 %v1554
  %3464 = vmatprep.subr.bf16.mxu0 0
  %3465 = vmatpush1.bf16.msra.mxu0 %v1555
  %3466 = vmatprep.subr.bf16.mxu0 0
  %3467 = vmatpush1.bf16.msra.mxu0 %v1556
  %3468 = vmatprep.subr.bf16.mxu0 0
  %3469 = vmatpush1.bf16.msra.mxu0 %v1557
  %3470 = vmatprep.subr.bf16.mxu0 0
  %3471 = vmatpush1.bf16.msra.mxu0 %v1558
  %3472 = vmatprep.subr.bf16.mxu0 0
  %3473 = vmatpush1.bf16.msra.mxu0 %v1559
  %3474 = vmatprep.subr.bf16.mxu0 0
  %3475 = vmatpush1.bf16.msra.mxu0 %v1560
  %3476 = vmatprep.subr.bf16.mxu0 0
  %3477 = vmatpush1.bf16.msra.mxu0 %v1561
  %3478 = vmatprep.subr.bf16.mxu0 0
  %3479 = vmatpush1.bf16.msra.mxu0 %v1562
  %3480 = vmatprep.subr.bf16.mxu0 0
  %3481 = vmatpush1.bf16.msra.mxu0 %v1563
  %3482 = vmatprep.subr.bf16.mxu0 0
  %3483 = vmatpush1.bf16.msra.mxu0 %v1564
  %3484 = vmatprep.subr.bf16.mxu0 0
  %3485 = vmatpush1.bf16.msra.mxu0 %v1565
  %3486 = vmatprep.mubr.bf16.mxu0 %v2561
  %3487 = vmatmul.mubr.bf16.gmra.mrb[0].mxu0 %v2560
  %v3488 = vpop.f32.mrb[0].mxu0
  %v3489 = vadd.f32 %v3328, %v3488
  %v3490 = vpop.f32.mrb[0].mxu0
  %v3491 = vpop.f32.mrb[0].mxu0
  %v3492 = vadd.f32 %v3331, %v3491
  %v3493 = vpop.f32.mrb[0].mxu0
  %3494 = vmatprep.mubr.bf16.mxu0 %v2573
  %3495 = vmatmul.mubr.bf16.gmra.mrb[0].mxu0 %v2572
  %v3496 = vpop.f32.mrb[0].mxu0
  %v3497 = vadd.f32 %v3336, %v3496
  %v3498 = vpop.f32.mrb[0].mxu0
  %v3499 = vpop.f32.mrb[0].mxu0
  %v3500 = vadd.f32 %v3339, %v3499
  %v3501 = vpop.f32.mrb[0].mxu0
  %3502 = vmatprep.mubr.bf16.mxu0 %v2585
  %3503 = vmatmul.mubr.bf16.gmra.mrb[0].mxu0 %v2584
  %v3504 = vpop.f32.mrb[0].mxu0
  %v3505 = vadd.f32 %v3344, %v3504
  %v3506 = vpop.f32.mrb[0].mxu0
  %v3507 = vpop.f32.mrb[0].mxu0
  %v3508 = vadd.f32 %v3347, %v3507
  %v3509 = vpop.f32.mrb[0].mxu0
  %3510 = vmatprep.mubr.bf16.mxu0 %v2597
  %3511 = vmatmul.mubr.bf16.gmra.mrb[0].mxu0 %v2596
  %v3512 = vpop.f32.mrb[0].mxu0
  %v3513 = vadd.f32 %v3352, %v3512
  %v3514 = vpop.f32.mrb[0].mxu0
  %v3515 = vpop.f32.mrb[0].mxu0
  %v3516 = vadd.f32 %v3355, %v3515
  %v3517 = vpop.f32.mrb[0].mxu0
  %3518 = vmatprep.mubr.bf16.mxu0 %v2609
  %3519 = vmatmul.mubr.bf16.gmra.mrb[0].mxu0 %v2608
  %v3520 = vpop.f32.mrb[0].mxu0
  %v3521 = vadd.f32 %v3360, %v3520
  %v3522 = vpop.f32.mrb[0].mxu0
  %v3523 = vpop.f32.mrb[0].mxu0
  %v3524 = vadd.f32 %v3363, %v3523
  %v3525 = vpop.f32.mrb[0].mxu0
  %3526 = vmatprep.mubr.bf16.mxu0 %v2621
  %3527 = vmatmul.mubr.bf16.gmra.mrb[0].mxu0 %v2620
  %v3528 = vpop.f32.mrb[0].mxu0
  %v3529 = vadd.f32 %v3368, %v3528
  %v3530 = vpop.f32.mrb[0].mxu0
  %v3531 = vpop.f32.mrb[0].mxu0
  %v3532 = vadd.f32 %v3371, %v3531
  %v3533 = vpop.f32.mrb[0].mxu0
  %3534 = vmatprep.mubr.bf16.mxu0 %v2633
  %3535 = vmatmul.mubr.bf16.gmra.mrb[0].mxu0 %v2632
  %v3536 = vpop.f32.mrb[0].mxu0
  %v3537 = vadd.f32 %v3376, %v3536
  %v3538 = vpop.f32.mrb[0].mxu0
  %v3539 = vpop.f32.mrb[0].mxu0
  %v3540 = vadd.f32 %v3379, %v3539
  %v3541 = vpop.f32.mrb[0].mxu0
  %3542 = vmatprep.mubr.bf16.mxu0 %v2645
  %3543 = vmatmul.mubr.bf16.gmra.mrb[0].mxu0 %v2644
  %v3544 = vpop.f32.mrb[0].mxu0
  %v3545 = vadd.f32 %v3384, %v3544
  %v3546 = vpop.f32.mrb[0].mxu0
  %v3547 = vpop.f32.mrb[0].mxu0
  %v3548 = vadd.f32 %v3387, %v3547
  %v3549 = vpop.f32.mrb[0].mxu0
  %3550 = vmatprep.mubr.bf16.mxu0 %v2657
  %3551 = vmatmul.mubr.bf16.gmra.mrb[0].mxu0 %v2656
  %v3552 = vpop.f32.mrb[0].mxu0
  %v3553 = vadd.f32 %v3392, %v3552
  %v3554 = vpop.f32.mrb[0].mxu0
  %v3555 = vpop.f32.mrb[0].mxu0
  %v3556 = vadd.f32 %v3395, %v3555
  %v3557 = vpop.f32.mrb[0].mxu0
  %3558 = vmatprep.mubr.bf16.mxu0 %v2669
  %3559 = vmatmul.mubr.bf16.gmra.mrb[0].mxu0 %v2668
  %v3560 = vpop.f32.mrb[0].mxu0
  %v3561 = vadd.f32 %v3400, %v3560
  %v3562 = vpop.f32.mrb[0].mxu0
  %v3563 = vpop.f32.mrb[0].mxu0
  %v3564 = vadd.f32 %v3403, %v3563
  %v3565 = vpop.f32.mrb[0].mxu0
  %3566 = vmatprep.mubr.bf16.mxu0 %v2681
  %3567 = vmatmul.mubr.bf16.gmra.mrb[0].mxu0 %v2680
  %v3568 = vpop.f32.mrb[0].mxu0
  %v3569 = vadd.f32 %v3408, %v3568
  %v3570 = vpop.f32.mrb[0].mxu0
  %v3571 = vpop.f32.mrb[0].mxu0
  %v3572 = vadd.f32 %v3411, %v3571
  %v3573 = vpop.f32.mrb[0].mxu0
  %3574 = vmatprep.mubr.bf16.mxu0 %v2693
  %3575 = vmatmul.mubr.bf16.gmra.mrb[0].mxu0 %v2692
  %v3576 = vpop.f32.mrb[0].mxu0
  %v3577 = vadd.f32 %v3416, %v3576
  %v3578 = vpop.f32.mrb[0].mxu0
  %v3579 = vpop.f32.mrb[0].mxu0
  %v3580 = vadd.f32 %v3419, %v3579
  %v3581 = vpop.f32.mrb[0].mxu0
  %3582 = vmatprep.mubr.bf16.mxu0 %v2705
  %3583 = vmatmul.mubr.bf16.gmra.mrb[0].mxu0 %v2704
  %v3584 = vpop.f32.mrb[0].mxu0
  %v3585 = vadd.f32 %v3424, %v3584
  %v3586 = vpop.f32.mrb[0].mxu0
  %v3587 = vpop.f32.mrb[0].mxu0
  %v3588 = vadd.f32 %v3427, %v3587
  %v3589 = vpop.f32.mrb[0].mxu0
  %3590 = vmatprep.mubr.bf16.mxu0 %v2717
  %3591 = vmatmul.mubr.bf16.gmra.mrb[0].mxu0 %v2716
  %v3592 = vpop.f32.mrb[0].mxu0
  %v3593 = vadd.f32 %v3432, %v3592
  %v3594 = vpop.f32.mrb[0].mxu0
  %v3595 = vpop.f32.mrb[0].mxu0
  %v3596 = vadd.f32 %v3435, %v3595
  %v3597 = vpop.f32.mrb[0].mxu0
  %3598 = vmatprep.mubr.bf16.mxu0 %v2729
  %3599 = vmatmul.mubr.bf16.gmra.mrb[0].mxu0 %v2728
  %v3600 = vpop.f32.mrb[0].mxu0
  %v3601 = vadd.f32 %v3440, %v3600
  %v3602 = vpop.f32.mrb[0].mxu0
  %v3603 = vpop.f32.mrb[0].mxu0
  %v3604 = vadd.f32 %v3443, %v3603
  %v3605 = vpop.f32.mrb[0].mxu0
  %3606 = vmatprep.mubr.bf16.mxu0 %v2741
  %3607 = vmatmul.mubr.bf16.gmra.mrb[0].mxu0 %v2740
  %v3608 = vpop.f32.mrb[0].mxu0
  %v3609 = vadd.f32 %v3448, %v3608
  %v3610 = vpop.f32.mrb[0].mxu0
  %v3611 = vpop.f32.mrb[0].mxu0
  %v3612 = vadd.f32 %v3451, %v3611
  %v3613 = vpop.f32.mrb[0].mxu0
  %3614 = vdwg.mxu0
  %3615 = vmatprep.subr.bf16.mxu0 0
  %3616 = vmatpush1.bf16.msra.mxu0 %v1566
  %3617 = vmatprep.subr.bf16.mxu0 0
  %3618 = vmatpush1.bf16.msra.mxu0 %v1567
  %3619 = vmatprep.subr.bf16.mxu0 0
  %3620 = vmatpush1.bf16.msra.mxu0 %v1568
  %3621 = vmatprep.subr.bf16.mxu0 0
  %3622 = vmatpush1.bf16.msra.mxu0 %v1569
  %3623 = vmatprep.subr.bf16.mxu0 0
  %3624 = vmatpush1.bf16.msra.mxu0 %v1570
  %3625 = vmatprep.subr.bf16.mxu0 0
  %3626 = vmatpush1.bf16.msra.mxu0 %v1571
  %3627 = vmatprep.subr.bf16.mxu0 0
  %3628 = vmatpush1.bf16.msra.mxu0 %v1572
  %3629 = vmatprep.subr.bf16.mxu0 0
  %3630 = vmatpush1.bf16.msra.mxu0 %v1573
  %3631 = vmatprep.subr.bf16.mxu0 0
  %3632 = vmatpush1.bf16.msra.mxu0 %v1574
  %3633 = vmatprep.subr.bf16.mxu0 0
  %3634 = vmatpush1.bf16.msra.mxu0 %v1575
  %3635 = vmatprep.subr.bf16.mxu0 0
  %3636 = vmatpush1.bf16.msra.mxu0 %v1576
  %3637 = vmatprep.subr.bf16.mxu0 0
  %3638 = vmatpush1.bf16.msra.mxu0 %v1577
  %3639 = vmatprep.subr.bf16.mxu0 0
  %3640 = vmatpush1.bf16.msra.mxu0 %v1578
  %3641 = vmatprep.subr.bf16.mxu0 0
  %3642 = vmatpush1.bf16.msra.mxu0 %v1579
  %3643 = vmatprep.subr.bf16.mxu0 0
  %3644 = vmatpush1.bf16.msra.mxu0 %v1580
  %3645 = vmatprep.subr.bf16.mxu0 0
  %3646 = vmatpush1.bf16.msra.mxu0 %v1581
  %3647 = vmatprep.mubr.bf16.mxu0 %v2563
  %3648 = vmatmul.mubr.bf16.gmra.mrb[0].mxu0 %v2562
  %v3649 = vpop.f32.mrb[0].mxu0
  %v3650 = vadd.f32 %v3489, %v3649
  %v3651 = vpop.f32.mrb[0].mxu0
  %v3652 = vpop.f32.mrb[0].mxu0
  %v3653 = vadd.f32 %v3492, %v3652
  %v3654 = vpop.f32.mrb[0].mxu0
  %3655 = vmatprep.mubr.bf16.mxu0 %v2575
  %3656 = vmatmul.mubr.bf16.gmra.mrb[0].mxu0 %v2574
  %v3657 = vpop.f32.mrb[0].mxu0
  %v3658 = vadd.f32 %v3497, %v3657
  %v3659 = vpop.f32.mrb[0].mxu0
  %v3660 = vpop.f32.mrb[0].mxu0
  %v3661 = vadd.f32 %v3500, %v3660
  %v3662 = vpop.f32.mrb[0].mxu0
  %3663 = vmatprep.mubr.bf16.mxu0 %v2587
  %3664 = vmatmul.mubr.bf16.gmra.mrb[0].mxu0 %v2586
  %v3665 = vpop.f32.mrb[0].mxu0
  %v3666 = vadd.f32 %v3505, %v3665
  %v3667 = vpop.f32.mrb[0].mxu0
  %v3668 = vpop.f32.mrb[0].mxu0
  %v3669 = vadd.f32 %v3508, %v3668
  %v3670 = vpop.f32.mrb[0].mxu0
  %3671 = vmatprep.mubr.bf16.mxu0 %v2599
  %3672 = vmatmul.mubr.bf16.gmra.mrb[0].mxu0 %v2598
  %v3673 = vpop.f32.mrb[0].mxu0
  %v3674 = vadd.f32 %v3513, %v3673
  %v3675 = vpop.f32.mrb[0].mxu0
  %v3676 = vpop.f32.mrb[0].mxu0
  %v3677 = vadd.f32 %v3516, %v3676
  %v3678 = vpop.f32.mrb[0].mxu0
  %3679 = vmatprep.mubr.bf16.mxu0 %v2611
  %3680 = vmatmul.mubr.bf16.gmra.mrb[0].mxu0 %v2610
  %v3681 = vpop.f32.mrb[0].mxu0
  %v3682 = vadd.f32 %v3521, %v3681
  %v3683 = vpop.f32.mrb[0].mxu0
  %v3684 = vpop.f32.mrb[0].mxu0
  %v3685 = vadd.f32 %v3524, %v3684
  %v3686 = vpop.f32.mrb[0].mxu0
  %3687 = vmatprep.mubr.bf16.mxu0 %v2623
  %3688 = vmatmul.mubr.bf16.gmra.mrb[0].mxu0 %v2622
  %v3689 = vpop.f32.mrb[0].mxu0
  %v3690 = vadd.f32 %v3529, %v3689
  %v3691 = vpop.f32.mrb[0].mxu0
  %v3692 = vpop.f32.mrb[0].mxu0
  %v3693 = vadd.f32 %v3532, %v3692
  %v3694 = vpop.f32.mrb[0].mxu0
  %3695 = vmatprep.mubr.bf16.mxu0 %v2635
  %3696 = vmatmul.mubr.bf16.gmra.mrb[0].mxu0 %v2634
  %v3697 = vpop.f32.mrb[0].mxu0
  %v3698 = vadd.f32 %v3537, %v3697
  %v3699 = vpop.f32.mrb[0].mxu0
  %v3700 = vpop.f32.mrb[0].mxu0
  %v3701 = vadd.f32 %v3540, %v3700
  %v3702 = vpop.f32.mrb[0].mxu0
  %3703 = vmatprep.mubr.bf16.mxu0 %v2647
  %3704 = vmatmul.mubr.bf16.gmra.mrb[0].mxu0 %v2646
  %v3705 = vpop.f32.mrb[0].mxu0
  %v3706 = vadd.f32 %v3545, %v3705
  %v3707 = vpop.f32.mrb[0].mxu0
  %v3708 = vpop.f32.mrb[0].mxu0
  %v3709 = vadd.f32 %v3548, %v3708
  %v3710 = vpop.f32.mrb[0].mxu0
  %3711 = vmatprep.mubr.bf16.mxu0 %v2659
  %3712 = vmatmul.mubr.bf16.gmra.mrb[0].mxu0 %v2658
  %v3713 = vpop.f32.mrb[0].mxu0
  %v3714 = vadd.f32 %v3553, %v3713
  %v3715 = vpop.f32.mrb[0].mxu0
  %v3716 = vpop.f32.mrb[0].mxu0
  %v3717 = vadd.f32 %v3556, %v3716
  %v3718 = vpop.f32.mrb[0].mxu0
  %3719 = vmatprep.mubr.bf16.mxu0 %v2671
  %3720 = vmatmul.mubr.bf16.gmra.mrb[0].mxu0 %v2670
  %v3721 = vpop.f32.mrb[0].mxu0
  %v3722 = vadd.f32 %v3561, %v3721
  %v3723 = vpop.f32.mrb[0].mxu0
  %v3724 = vpop.f32.mrb[0].mxu0
  %v3725 = vadd.f32 %v3564, %v3724
  %v3726 = vpop.f32.mrb[0].mxu0
  %3727 = vmatprep.mubr.bf16.mxu0 %v2683
  %3728 = vmatmul.mubr.bf16.gmra.mrb[0].mxu0 %v2682
  %v3729 = vpop.f32.mrb[0].mxu0
  %v3730 = vadd.f32 %v3569, %v3729
  %v3731 = vpop.f32.mrb[0].mxu0
  %v3732 = vpop.f32.mrb[0].mxu0
  %v3733 = vadd.f32 %v3572, %v3732
  %v3734 = vpop.f32.mrb[0].mxu0
  %3735 = vmatprep.mubr.bf16.mxu0 %v2695
  %3736 = vmatmul.mubr.bf16.gmra.mrb[0].mxu0 %v2694
  %v3737 = vpop.f32.mrb[0].mxu0
  %v3738 = vadd.f32 %v3577, %v3737
  %v3739 = vpop.f32.mrb[0].mxu0
  %v3740 = vpop.f32.mrb[0].mxu0
  %v3741 = vadd.f32 %v3580, %v3740
  %v3742 = vpop.f32.mrb[0].mxu0
  %3743 = vmatprep.mubr.bf16.mxu0 %v2707
  %3744 = vmatmul.mubr.bf16.gmra.mrb[0].mxu0 %v2706
  %v3745 = vpop.f32.mrb[0].mxu0
  %v3746 = vadd.f32 %v3585, %v3745
  %v3747 = vpop.f32.mrb[0].mxu0
  %v3748 = vpop.f32.mrb[0].mxu0
  %v3749 = vadd.f32 %v3588, %v3748
  %v3750 = vpop.f32.mrb[0].mxu0
  %3751 = vmatprep.mubr.bf16.mxu0 %v2719
  %3752 = vmatmul.mubr.bf16.gmra.mrb[0].mxu0 %v2718
  %v3753 = vpop.f32.mrb[0].mxu0
  %v3754 = vadd.f32 %v3593, %v3753
  %v3755 = vpop.f32.mrb[0].mxu0
  %v3756 = vpop.f32.mrb[0].mxu0
  %v3757 = vadd.f32 %v3596, %v3756
  %v3758 = vpop.f32.mrb[0].mxu0
  %3759 = vmatprep.mubr.bf16.mxu0 %v2731
  %3760 = vmatmul.mubr.bf16.gmra.mrb[0].mxu0 %v2730
  %v3761 = vpop.f32.mrb[0].mxu0
  %v3762 = vadd.f32 %v3601, %v3761
  %v3763 = vpop.f32.mrb[0].mxu0
  %v3764 = vpop.f32.mrb[0].mxu0
  %v3765 = vadd.f32 %v3604, %v3764
  %v3766 = vpop.f32.mrb[0].mxu0
  %3767 = vmatprep.mubr.bf16.mxu0 %v2743
  %3768 = vmatmul.mubr.bf16.gmra.mrb[0].mxu0 %v2742
  %v3769 = vpop.f32.mrb[0].mxu0
  %v3770 = vadd.f32 %v3609, %v3769
  %v3771 = vpop.f32.mrb[0].mxu0
  %v3772 = vpop.f32.mrb[0].mxu0
  %v3773 = vadd.f32 %v3612, %v3772
  %v3774 = vpop.f32.mrb[0].mxu0
  %3775 = vdwg.mxu0
  %3776 = vmatprep.subr.bf16.mxu0 0
  %3777 = vmatpush1.bf16.msra.mxu0 %v1582
  %3778 = vmatprep.subr.bf16.mxu0 0
  %3779 = vmatpush1.bf16.msra.mxu0 %v1583
  %3780 = vmatprep.subr.bf16.mxu0 0
  %3781 = vmatpush1.bf16.msra.mxu0 %v1584
  %3782 = vmatprep.subr.bf16.mxu0 0
  %3783 = vmatpush1.bf16.msra.mxu0 %v1585
  %3784 = vmatprep.subr.bf16.mxu0 0
  %3785 = vmatpush1.bf16.msra.mxu0 %v1586
  %3786 = vmatprep.subr.bf16.mxu0 0
  %3787 = vmatpush1.bf16.msra.mxu0 %v1587
  %3788 = vmatprep.subr.bf16.mxu0 0
  %3789 = vmatpush1.bf16.msra.mxu0 %v1588
  %3790 = vmatprep.subr.bf16.mxu0 0
  %3791 = vmatpush1.bf16.msra.mxu0 %v1589
  %3792 = vmatprep.subr.bf16.mxu0 0
  %3793 = vmatpush1.bf16.msra.mxu0 %v1590
  %3794 = vmatprep.subr.bf16.mxu0 0
  %3795 = vmatpush1.bf16.msra.mxu0 %v1591
  %3796 = vmatprep.subr.bf16.mxu0 0
  %3797 = vmatpush1.bf16.msra.mxu0 %v1592
  %3798 = vmatprep.subr.bf16.mxu0 0
  %3799 = vmatpush1.bf16.msra.mxu0 %v1593
  %3800 = vmatprep.subr.bf16.mxu0 0
  %3801 = vmatpush1.bf16.msra.mxu0 0
  %3802 = vmatprep.subr.bf16.mxu0 0
  %3803 = vmatpush1.bf16.msra.mxu0 0
  %3804 = vmatprep.subr.bf16.mxu0 0
  %3805 = vmatpush1.bf16.msra.mxu0 0
  %3806 = vmatprep.subr.bf16.mxu0 0
  %3807 = vmatpush1.bf16.msra.mxu0 0
  %3808 = vmatprep.mubr.bf16.mxu0 %v2924
  %3809 = vmatmul.mubr.bf16.gmra.mrb[0].mxu0 %v2564
  %v3810 = vpop.f32.mrb[0].mxu0
  %v3811 = vadd.f32 %v3650, %v3810
  %v3812 = vpop.f32.mrb[0].mxu0
  %v3813 = vpop.f32.mrb[0].mxu0
  %v3814 = vadd.f32 %v3653, %v3813
  %v3815 = vpop.f32.mrb[0].mxu0
  %3816 = vmatprep.mubr.bf16.mxu0 %v2927
  %3817 = vmatmul.mubr.bf16.gmra.mrb[0].mxu0 %v2576
  %v3818 = vpop.f32.mrb[0].mxu0
  %v3819 = vadd.f32 %v3658, %v3818
  %v3820 = vpop.f32.mrb[0].mxu0
  %v3821 = vpop.f32.mrb[0].mxu0
  %v3822 = vadd.f32 %v3661, %v3821
  %v3823 = vpop.f32.mrb[0].mxu0
  %3824 = vmatprep.mubr.bf16.mxu0 %v2930
  %3825 = vmatmul.mubr.bf16.gmra.mrb[0].mxu0 %v2588
  %v3826 = vpop.f32.mrb[0].mxu0
  %v3827 = vadd.f32 %v3666, %v3826
  %v3828 = vpop.f32.mrb[0].mxu0
  %v3829 = vpop.f32.mrb[0].mxu0
  %v3830 = vadd.f32 %v3669, %v3829
  %v3831 = vpop.f32.mrb[0].mxu0
  %3832 = vmatprep.mubr.bf16.mxu0 %v2933
  %3833 = vmatmul.mubr.bf16.gmra.mrb[0].mxu0 %v2600
  %v3834 = vpop.f32.mrb[0].mxu0
  %v3835 = vadd.f32 %v3674, %v3834
  %v3836 = vpop.f32.mrb[0].mxu0
  %v3837 = vpop.f32.mrb[0].mxu0
  %v3838 = vadd.f32 %v3677, %v3837
  %v3839 = vpop.f32.mrb[0].mxu0
  %3840 = vmatprep.mubr.bf16.mxu0 %v2936
  %3841 = vmatmul.mubr.bf16.gmra.mrb[0].mxu0 %v2612
  %v3842 = vpop.f32.mrb[0].mxu0
  %v3843 = vadd.f32 %v3682, %v3842
  %v3844 = vpop.f32.mrb[0].mxu0
  %v3845 = vpop.f32.mrb[0].mxu0
  %v3846 = vadd.f32 %v3685, %v3845
  %v3847 = vpop.f32.mrb[0].mxu0
  %3848 = vmatprep.mubr.bf16.mxu0 %v2939
  %3849 = vmatmul.mubr.bf16.gmra.mrb[0].mxu0 %v2624
  %v3850 = vpop.f32.mrb[0].mxu0
  %v3851 = vadd.f32 %v3690, %v3850
  %v3852 = vpop.f32.mrb[0].mxu0
  %v3853 = vpop.f32.mrb[0].mxu0
  %v3854 = vadd.f32 %v3693, %v3853
  %v3855 = vpop.f32.mrb[0].mxu0
  %3856 = vmatprep.mubr.bf16.mxu0 %v2942
  %3857 = vmatmul.mubr.bf16.gmra.mrb[0].mxu0 %v2636
  %v3858 = vpop.f32.mrb[0].mxu0
  %v3859 = vadd.f32 %v3698, %v3858
  %v3860 = vpop.f32.mrb[0].mxu0
  %v3861 = vpop.f32.mrb[0].mxu0
  %v3862 = vadd.f32 %v3701, %v3861
  %v3863 = vpop.f32.mrb[0].mxu0
  %3864 = vmatprep.mubr.bf16.mxu0 %v2945
  %3865 = vmatmul.mubr.bf16.gmra.mrb[0].mxu0 %v2648
  %v3866 = vpop.f32.mrb[0].mxu0
  %v3867 = vadd.f32 %v3706, %v3866
  %v3868 = vpop.f32.mrb[0].mxu0
  %v3869 = vpop.f32.mrb[0].mxu0
  %v3870 = vadd.f32 %v3709, %v3869
  %v3871 = vpop.f32.mrb[0].mxu0
  %3872 = vmatprep.mubr.bf16.mxu0 %v2948
  %3873 = vmatmul.mubr.bf16.gmra.mrb[0].mxu0 %v2660
  %v3874 = vpop.f32.mrb[0].mxu0
  %v3875 = vadd.f32 %v3714, %v3874
  %v3876 = vpop.f32.mrb[0].mxu0
  %v3877 = vpop.f32.mrb[0].mxu0
  %v3878 = vadd.f32 %v3717, %v3877
  %v3879 = vpop.f32.mrb[0].mxu0
  %3880 = vmatprep.mubr.bf16.mxu0 %v2951
  %3881 = vmatmul.mubr.bf16.gmra.mrb[0].mxu0 %v2672
  %v3882 = vpop.f32.mrb[0].mxu0
  %v3883 = vadd.f32 %v3722, %v3882
  %v3884 = vpop.f32.mrb[0].mxu0
  %v3885 = vpop.f32.mrb[0].mxu0
  %v3886 = vadd.f32 %v3725, %v3885
  %v3887 = vpop.f32.mrb[0].mxu0
  %3888 = vmatprep.mubr.bf16.mxu0 %v2954
  %3889 = vmatmul.mubr.bf16.gmra.mrb[0].mxu0 %v2684
  %v3890 = vpop.f32.mrb[0].mxu0
  %v3891 = vadd.f32 %v3730, %v3890
  %v3892 = vpop.f32.mrb[0].mxu0
  %v3893 = vpop.f32.mrb[0].mxu0
  %v3894 = vadd.f32 %v3733, %v3893
  %v3895 = vpop.f32.mrb[0].mxu0
  %3896 = vmatprep.mubr.bf16.mxu0 %v2957
  %3897 = vmatmul.mubr.bf16.gmra.mrb[0].mxu0 %v2696
  %v3898 = vpop.f32.mrb[0].mxu0
  %v3899 = vadd.f32 %v3738, %v3898
  %v3900 = vpop.f32.mrb[0].mxu0
  %v3901 = vpop.f32.mrb[0].mxu0
  %v3902 = vadd.f32 %v3741, %v3901
  %v3903 = vpop.f32.mrb[0].mxu0
  %3904 = vmatprep.mubr.bf16.mxu0 %v2960
  %3905 = vmatmul.mubr.bf16.gmra.mrb[0].mxu0 %v2708
  %v3906 = vpop.f32.mrb[0].mxu0
  %v3907 = vadd.f32 %v3746, %v3906
  %v3908 = vpop.f32.mrb[0].mxu0
  %v3909 = vpop.f32.mrb[0].mxu0
  %v3910 = vadd.f32 %v3749, %v3909
  %v3911 = vpop.f32.mrb[0].mxu0
  %3912 = vmatprep.mubr.bf16.mxu0 %v2963
  %3913 = vmatmul.mubr.bf16.gmra.mrb[0].mxu0 %v2720
  %v3914 = vpop.f32.mrb[0].mxu0
  %v3915 = vadd.f32 %v3754, %v3914
  %v3916 = vpop.f32.mrb[0].mxu0
  %v3917 = vpop.f32.mrb[0].mxu0
  %v3918 = vadd.f32 %v3757, %v3917
  %v3919 = vpop.f32.mrb[0].mxu0
  %3920 = vmatprep.mubr.bf16.mxu0 %v2966
  %3921 = vmatmul.mubr.bf16.gmra.mrb[0].mxu0 %v2732
  %v3922 = vpop.f32.mrb[0].mxu0
  %v3923 = vadd.f32 %v3762, %v3922
  %v3924 = vpop.f32.mrb[0].mxu0
  %v3925 = vpop.f32.mrb[0].mxu0
  %v3926 = vadd.f32 %v3765, %v3925
  %v3927 = vpop.f32.mrb[0].mxu0
  %3928 = vmatprep.mubr.bf16.mxu0 %v2969
  %3929 = vmatmul.mubr.bf16.gmra.mrb[0].mxu0 %v2744
  %v3930 = vpop.f32.mrb[0].mxu0
  %v3931 = vadd.f32 %v3770, %v3930
  %v3932 = vpop.f32.mrb[0].mxu0
  %v3933 = vpop.f32.mrb[0].mxu0
  %v3934 = vadd.f32 %v3773, %v3933
  %v3935 = vpop.f32.mrb[0].mxu0
  %3936 = vdwg.mxu0
  %v3937 = vmax.f32 %v3811, 0.0
  %v3938 = vmax.f32 %v3814, 0.0
  %v3939 = vmax.f32 %v3819, 0.0
  %v3940 = vmax.f32 %v3822, 0.0
  %v3941 = vmax.f32 %v3827, 0.0
  %v3942 = vmax.f32 %v3830, 0.0
  %v3943 = vmax.f32 %v3835, 0.0
  %v3944 = vmax.f32 %v3838, 0.0
  %v3945 = vmax.f32 %v3843, 0.0
  %v3946 = vmax.f32 %v3846, 0.0
  %v3947 = vmax.f32 %v3851, 0.0
  %v3948 = vmax.f32 %v3854, 0.0
  %v3949 = vmax.f32 %v3859, 0.0
  %v3950 = vmax.f32 %v3862, 0.0
  %v3951 = vmax.f32 %v3867, 0.0
  %v3952 = vmax.f32 %v3870, 0.0
  %v3953 = vmax.f32 %v3875, 0.0
  %v3954 = vmax.f32 %v3878, 0.0
  %v3955 = vmax.f32 %v3883, 0.0
  %v3956 = vmax.f32 %v3886, 0.0
  %v3957 = vmax.f32 %v3891, 0.0
  %v3958 = vmax.f32 %v3894, 0.0
  %v3959 = vmax.f32 %v3899, 0.0
  %v3960 = vmax.f32 %v3902, 0.0
  %v3961 = vmax.f32 %v3907, 0.0
  %v3962 = vmax.f32 %v3910, 0.0
  %v3963 = vmax.f32 %v3915, 0.0
  %v3964 = vmax.f32 %v3918, 0.0
  %v3965 = vmax.f32 %v3923, 0.0
  %v3966 = vmax.f32 %v3926, 0.0
  %v3967 = vmax.f32 %v3931, 0.0
  %v3968 = vmax.f32 %v3934, 0.0
  %v3969 = vpack.c.bf16 %v3938, %v3937
  %v3970 = vpack.c.bf16 %v3940, %v3939
  %v3971 = vpack.c.bf16 %v3942, %v3941
  %v3972 = vpack.c.bf16 %v3944, %v3943
  %v3973 = vpack.c.bf16 %v3946, %v3945
  %v3974 = vpack.c.bf16 %v3948, %v3947
  %v3975 = vpack.c.bf16 %v3950, %v3949
  %v3976 = vpack.c.bf16 %v3952, %v3951
  %v3977 = vpack.c.bf16 %v3954, %v3953
  %v3978 = vpack.c.bf16 %v3956, %v3955
  %v3979 = vpack.c.bf16 %v3958, %v3957
  %v3980 = vpack.c.bf16 %v3960, %v3959
  %v3981 = vpack.c.bf16 %v3962, %v3961
  %v3982 = vpack.c.bf16 %v3964, %v3963
  %v3983 = vpack.c.bf16 %v3966, %v3965
  %v3984 = vpack.c.bf16 %v3968, %v3967
  %v3985 = vld [vmem:[%s4] sm:$0xff]
  %v3986 = vld [vmem:[%s4 + $0x8] sm:$0xff]
  %v3987 = vld [vmem:[%s4 + $0x10] sm:$0xff]
  %v3988 = vld [vmem:[%s4 + $0x18] sm:$0xff]
  %v3989 = vld [vmem:[%s4 + $0x20] sm:$0xff]
  %v3990 = vld [vmem:[%s4 + $0x28] sm:$0xff]
  %v3991 = vld [vmem:[%s4 + $0x30] sm:$0xff]
  %v3992 = vld [vmem:[%s4 + $0x38] sm:$0xff]
  %v3993 = vld [vmem:[%s4 + $0x40] sm:$0xff]
  %v3994 = vld [vmem:[%s4 + $0x48] sm:$0xff]
  %v3995 = vld [vmem:[%s4 + $0x50] sm:$0xff]
  %v3996 = vld [vmem:[%s4 + $0x58] sm:$0xff]
  %v3997 = vld [vmem:[%s4 + $0x60] sm:$0xff]
  %v3998 = vld [vmem:[%s4 + $0x68] sm:$0xff]
  %v3999 = vld [vmem:[%s4 + $0x70] sm:$0xff]
  %v4000 = vld [vmem:[%s4 + $0x78] sm:$0xff]
  %v4001 = vld [vmem:[%s4 + $0x80] sm:$0xff]
  %v4002 = vld [vmem:[%s4 + $0x88] sm:$0xff]
  %v4003 = vld [vmem:[%s4 + $0x90] sm:$0xff]
  %v4004 = vld [vmem:[%s4 + $0x98] sm:$0xff]
  %v4005 = vld [vmem:[%s4 + $0xa0] sm:$0xff]
  %v4006 = vld [vmem:[%s4 + $0xa8] sm:$0xff]
  %v4007 = vld [vmem:[%s4 + $0xb0] sm:$0xff]
  %v4008 = vld [vmem:[%s4 + $0xb8] sm:$0xff]
  %v4009 = vld [vmem:[%s4 + $0xc0] sm:$0xff]
  %v4010 = vld [vmem:[%s4 + $0xc8] sm:$0xff]
  %v4011 = vld [vmem:[%s4 + $0xd0] sm:$0xff]
  %v4012 = vld [vmem:[%s4 + $0xd8] sm:$0xff]
  %v4013 = vld [vmem:[%s4 + $0xe0] sm:$0xff]
  %v4014 = vld [vmem:[%s4 + $0xe8] sm:$0xff]
  %v4015 = vld [vmem:[%s4 + $0xf0] sm:$0xff]
  %v4016 = vld [vmem:[%s4 + $0xf8] sm:$0xff]
  %v4017 = vld [vmem:[%s5] sm:$0xff]
  %v4018 = vld [vmem:[%s5 + $0x8] sm:$0xff]
  %v4019 = vld [vmem:[%s5 + $0x10] sm:$0xff]
  %v4020 = vld [vmem:[%s5 + $0x18] sm:$0xff]
  %v4021 = vld [vmem:[%s5 + $0x20] sm:$0xff]
  %v4022 = vld [vmem:[%s5 + $0x28] sm:$0xff]
  %v4023 = vld [vmem:[%s5 + $0x30] sm:$0xff]
  %v4024 = vld [vmem:[%s5 + $0x38] sm:$0xff]
  %v4025 = vld [vmem:[%s5 + $0x40] sm:$0xff]
  %v4026 = vld [vmem:[%s5 + $0x48] sm:$0xff]
  %v4027 = vld [vmem:[%s5 + $0x50] sm:$0xff]
  %v4028 = vld [vmem:[%s5 + $0x58] sm:$0xff]
  %v4029 = vld [vmem:[%s5 + $0x60] sm:$0xff]
  %v4030 = vld [vmem:[%s5 + $0x68] sm:$0xff]
  %v4031 = vld [vmem:[%s5 + $0x70] sm:$0xff]
  %v4032 = vld [vmem:[%s5 + $0x78] sm:$0xff]
  %v4033 = vld [vmem:[%s5 + $0x80] sm:$0xff]
  %v4034 = vld [vmem:[%s5 + $0x88] sm:$0xff]
  %v4035 = vld [vmem:[%s5 + $0x90] sm:$0xff]
  %v4036 = vld [vmem:[%s5 + $0x98] sm:$0xff]
  %v4037 = vld [vmem:[%s5 + $0xa0] sm:$0xff]
  %v4038 = vld [vmem:[%s5 + $0xa8] sm:$0xff]
  %v4039 = vld [vmem:[%s5 + $0xb0] sm:$0xff]
  %v4040 = vld [vmem:[%s5 + $0xb8] sm:$0xff]
  %v4041 = vld [vmem:[%s5 + $0xc0] sm:$0xff]
  %v4042 = vld [vmem:[%s5 + $0xc8] sm:$0xff]
  %v4043 = vld [vmem:[%s5 + $0xd0] sm:$0xff]
  %v4044 = vld [vmem:[%s5 + $0xd8] sm:$0xff]
  %v4045 = vld [vmem:[%s5 + $0xe0] sm:$0xff]
  %v4046 = vld [vmem:[%s5 + $0xe8] sm:$0xff]
  %v4047 = vld [vmem:[%s5 + $0xf0] sm:$0xff]
  %v4048 = vld [vmem:[%s5 + $0xf8] sm:$0xff]
  %4050 = vset.pattern.permute.xlu0 0
  %4051 = vperm.xlu0 %4050, %v4017
  %v4052 = vpop.permute.xlu0 %4051
  %4055 = vset.pattern.permute.xlu0 0
  %4056 = vperm.xlu0 %4055, %v4018
  %v4057 = vpop.permute.xlu0 %4056
  %4060 = vset.pattern.permute.xlu0 0
  %4061 = vperm.xlu0 %4060, %v4019
  %v4062 = vpop.permute.xlu0 %4061
  %4065 = vset.pattern.permute.xlu0 0
  %4066 = vperm.xlu0 %4065, %v4020
  %v4067 = vpop.permute.xlu0 %4066
  %4070 = vset.pattern.permute.xlu0 0
  %4071 = vperm.xlu0 %4070, %v4021
  %v4072 = vpop.permute.xlu0 %4071
  %4075 = vset.pattern.permute.xlu0 0
  %4076 = vperm.xlu0 %4075, %v4022
  %v4077 = vpop.permute.xlu0 %4076
  %4080 = vset.pattern.permute.xlu0 0
  %4081 = vperm.xlu0 %4080, %v4023
  %v4082 = vpop.permute.xlu0 %4081
  %4085 = vset.pattern.permute.xlu0 0
  %4086 = vperm.xlu0 %4085, %v4024
  %v4087 = vpop.permute.xlu0 %4086
  %4090 = vset.pattern.permute.xlu0 0
  %4091 = vperm.xlu0 %4090, %v4025
  %v4092 = vpop.permute.xlu0 %4091
  %4095 = vset.pattern.permute.xlu0 0
  %4096 = vperm.xlu0 %4095, %v4026
  %v4097 = vpop.permute.xlu0 %4096
  %4100 = vset.pattern.permute.xlu0 0
  %4101 = vperm.xlu0 %4100, %v4027
  %v4102 = vpop.permute.xlu0 %4101
  %4105 = vset.pattern.permute.xlu0 0
  %4106 = vperm.xlu0 %4105, %v4028
  %v4107 = vpop.permute.xlu0 %4106
  %4110 = vset.pattern.permute.xlu0 0
  %4111 = vperm.xlu0 %4110, %v4029
  %v4112 = vpop.permute.xlu0 %4111
  %4115 = vset.pattern.permute.xlu0 0
  %4116 = vperm.xlu0 %4115, %v4030
  %v4117 = vpop.permute.xlu0 %4116
  %4120 = vset.pattern.permute.xlu0 0
  %4121 = vperm.xlu0 %4120, %v4031
  %v4122 = vpop.permute.xlu0 %4121
  %4125 = vset.pattern.permute.xlu0 0
  %4126 = vperm.xlu0 %4125, %v4032
  %v4127 = vpop.permute.xlu0 %4126
  %4130 = vset.pattern.permute.xlu0 0
  %4131 = vperm.xlu0 %4130, %v4033
  %v4132 = vpop.permute.xlu0 %4131
  %4135 = vset.pattern.permute.xlu0 0
  %4136 = vperm.xlu0 %4135, %v4034
  %v4137 = vpop.permute.xlu0 %4136
  %4140 = vset.pattern.permute.xlu0 0
  %4141 = vperm.xlu0 %4140, %v4035
  %v4142 = vpop.permute.xlu0 %4141
  %4145 = vset.pattern.permute.xlu0 0
  %4146 = vperm.xlu0 %4145, %v4036
  %v4147 = vpop.permute.xlu0 %4146
  %4150 = vset.pattern.permute.xlu0 0
  %4151 = vperm.xlu0 %4150, %v4037
  %v4152 = vpop.permute.xlu0 %4151
  %4155 = vset.pattern.permute.xlu0 0
  %4156 = vperm.xlu0 %4155, %v4038
  %v4157 = vpop.permute.xlu0 %4156
  %4160 = vset.pattern.permute.xlu0 0
  %4161 = vperm.xlu0 %4160, %v4039
  %v4162 = vpop.permute.xlu0 %4161
  %4165 = vset.pattern.permute.xlu0 0
  %4166 = vperm.xlu0 %4165, %v4040
  %v4167 = vpop.permute.xlu0 %4166
  %4170 = vset.pattern.permute.xlu0 0
  %4171 = vperm.xlu0 %4170, %v4041
  %v4172 = vpop.permute.xlu0 %4171
  %4175 = vset.pattern.permute.xlu0 0
  %4176 = vperm.xlu0 %4175, %v4042
  %v4177 = vpop.permute.xlu0 %4176
  %4180 = vset.pattern.permute.xlu0 0
  %4181 = vperm.xlu0 %4180, %v4043
  %v4182 = vpop.permute.xlu0 %4181
  %4185 = vset.pattern.permute.xlu0 0
  %4186 = vperm.xlu0 %4185, %v4044
  %v4187 = vpop.permute.xlu0 %4186
  %4190 = vset.pattern.permute.xlu0 0
  %4191 = vperm.xlu0 %4190, %v4045
  %v4192 = vpop.permute.xlu0 %4191
  %4195 = vset.pattern.permute.xlu0 0
  %4196 = vperm.xlu0 %4195, %v4046
  %v4197 = vpop.permute.xlu0 %4196
  %4200 = vset.pattern.permute.xlu0 0
  %4201 = vperm.xlu0 %4200, %v4047
  %v4202 = vpop.permute.xlu0 %4201
  %4205 = vset.pattern.permute.xlu0 0
  %4206 = vperm.xlu0 %4205, %v4048
  %v4207 = vpop.permute.xlu0 %4206
  %v4241 = vunpack.c.l.b16 %v3985
  %v4242 = vunpack.c.h.b16 %v3985
  %v4243 = vunpack.c.l.b16 %v3986
  %v4244 = vunpack.c.h.b16 %v3986
  %v4245 = vunpack.c.l.b16 %v3987
  %v4246 = vunpack.c.h.b16 %v3987
  %v4247 = vunpack.c.l.b16 %v3988
  %v4248 = vunpack.c.h.b16 %v3988
  %v4249 = vunpack.c.l.b16 %v3989
  %v4250 = vunpack.c.h.b16 %v3989
  %v4251 = vunpack.c.l.b16 %v3990
  %v4252 = vunpack.c.h.b16 %v3990
  %v4253 = vunpack.c.l.b16 %v3991
  %v4254 = vunpack.c.h.b16 %v3991
  %v4255 = vunpack.c.l.b16 %v3992
  %v4256 = vunpack.c.h.b16 %v3992
  %v4257 = vunpack.c.l.b16 %v3993
  %v4258 = vunpack.c.h.b16 %v3993
  %v4259 = vunpack.c.l.b16 %v3994
  %v4260 = vunpack.c.h.b16 %v3994
  %v4261 = vunpack.c.l.b16 %v3995
  %v4262 = vunpack.c.h.b16 %v3995
  %v4263 = vunpack.c.l.b16 %v3996
  %v4264 = vunpack.c.h.b16 %v3996
  %v4265 = vunpack.c.l.b16 %v3997
  %v4266 = vunpack.c.h.b16 %v3997
  %v4267 = vunpack.c.l.b16 %v3998
  %v4268 = vunpack.c.h.b16 %v3998
  %v4269 = vunpack.c.l.b16 %v3999
  %v4270 = vunpack.c.h.b16 %v3999
  %v4271 = vunpack.c.l.b16 %v4000
  %v4272 = vunpack.c.h.b16 %v4000
  %v4273 = vunpack.c.l.b16 %v4001
  %v4274 = vunpack.c.h.b16 %v4001
  %v4275 = vunpack.c.l.b16 %v4002
  %v4276 = vunpack.c.h.b16 %v4002
  %v4277 = vunpack.c.l.b16 %v4003
  %v4278 = vunpack.c.h.b16 %v4003
  %v4279 = vunpack.c.l.b16 %v4004
  %v4280 = vunpack.c.h.b16 %v4004
  %v4281 = vunpack.c.l.b16 %v4005
  %v4282 = vunpack.c.h.b16 %v4005
  %v4283 = vunpack.c.l.b16 %v4006
  %v4284 = vunpack.c.h.b16 %v4006
  %v4285 = vunpack.c.l.b16 %v4007
  %v4286 = vunpack.c.h.b16 %v4007
  %v4287 = vunpack.c.l.b16 %v4008
  %v4288 = vunpack.c.h.b16 %v4008
  %v4289 = vunpack.c.l.b16 %v4009
  %v4290 = vunpack.c.h.b16 %v4009
  %v4291 = vunpack.c.l.b16 %v4010
  %v4292 = vunpack.c.h.b16 %v4010
  %v4293 = vunpack.c.l.b16 %v4011
  %v4294 = vunpack.c.h.b16 %v4011
  %v4295 = vunpack.c.l.b16 %v4012
  %v4296 = vunpack.c.h.b16 %v4012
  %v4297 = vunpack.c.l.b16 %v4013
  %v4298 = vunpack.c.h.b16 %v4013
  %v4299 = vunpack.c.l.b16 %v4014
  %v4300 = vunpack.c.h.b16 %v4014
  %v4301 = vunpack.c.l.b16 %v4015
  %v4302 = vunpack.c.h.b16 %v4015
  %v4303 = vunpack.c.l.b16 %v4016
  %v4304 = vunpack.c.h.b16 %v4016
  %v4305 = vpack.c.b16 %v4243, %v4241
  %v4306 = vpack.c.b16 %v4244, %v4242
  %v4307 = vpack.c.b16 %v4247, %v4245
  %v4308 = vpack.c.b16 %v4248, %v4246
  %v4309 = vpack.c.b16 %v4251, %v4249
  %v4310 = vpack.c.b16 %v4252, %v4250
  %v4311 = vpack.c.b16 %v4255, %v4253
  %v4312 = vpack.c.b16 %v4256, %v4254
  %v4313 = vpack.c.b16 %v4259, %v4257
  %v4314 = vpack.c.b16 %v4260, %v4258
  %v4315 = vpack.c.b16 %v4263, %v4261
  %v4316 = vpack.c.b16 %v4264, %v4262
  %v4317 = vpack.c.b16 %v4267, %v4265
  %v4318 = vpack.c.b16 %v4268, %v4266
  %v4319 = vpack.c.b16 %v4271, %v4269
  %v4320 = vpack.c.b16 %v4272, %v4270
  %v4321 = vpack.c.b16 %v4275, %v4273
  %v4322 = vpack.c.b16 %v4276, %v4274
  %v4323 = vpack.c.b16 %v4279, %v4277
  %v4324 = vpack.c.b16 %v4280, %v4278
  %v4325 = vpack.c.b16 %v4283, %v4281
  %v4326 = vpack.c.b16 %v4284, %v4282
  %v4327 = vpack.c.b16 %v4287, %v4285
  %v4328 = vpack.c.b16 %v4288, %v4286
  %v4329 = vpack.c.b16 %v4291, %v4289
  %v4330 = vpack.c.b16 %v4292, %v4290
  %v4331 = vpack.c.b16 %v4295, %v4293
  %v4332 = vpack.c.b16 %v4296, %v4294
  %v4333 = vpack.c.b16 %v4299, %v4297
  %v4334 = vpack.c.b16 %v4300, %v4298
  %v4335 = vpack.c.b16 %v4303, %v4301
  %v4336 = vpack.c.b16 %v4304, %v4302
  %4369 = vmatprep.subr.bf16.mxu0 0
  %4370 = vmatpush1.bf16.msra.mxu0 %v3969
  %4371 = vmatprep.subr.bf16.mxu0 0
  %4372 = vmatpush1.bf16.msra.mxu0 %v3970
  %4373 = vmatprep.subr.bf16.mxu0 0
  %4374 = vmatpush1.bf16.msra.mxu0 %v3971
  %4375 = vmatprep.subr.bf16.mxu0 0
  %4376 = vmatpush1.bf16.msra.mxu0 %v3972
  %4377 = vmatprep.subr.bf16.mxu0 0
  %4378 = vmatpush1.bf16.msra.mxu0 %v3973
  %4379 = vmatprep.subr.bf16.mxu0 0
  %4380 = vmatpush1.bf16.msra.mxu0 %v3974
  %4381 = vmatprep.subr.bf16.mxu0 0
  %4382 = vmatpush1.bf16.msra.mxu0 %v3975
  %4383 = vmatprep.subr.bf16.mxu0 0
  %4384 = vmatpush1.bf16.msra.mxu0 %v3976
  %4385 = vmatprep.subr.bf16.mxu0 0
  %4386 = vmatpush1.bf16.msra.mxu0 %v3977
  %4387 = vmatprep.subr.bf16.mxu0 0
  %4388 = vmatpush1.bf16.msra.mxu0 %v3978
  %4389 = vmatprep.subr.bf16.mxu0 0
  %4390 = vmatpush1.bf16.msra.mxu0 %v3979
  %4391 = vmatprep.subr.bf16.mxu0 0
  %4392 = vmatpush1.bf16.msra.mxu0 %v3980
  %4393 = vmatprep.subr.bf16.mxu0 0
  %4394 = vmatpush1.bf16.msra.mxu0 %v3981
  %4395 = vmatprep.subr.bf16.mxu0 0
  %4396 = vmatpush1.bf16.msra.mxu0 %v3982
  %4397 = vmatprep.subr.bf16.mxu0 0
  %4398 = vmatpush1.bf16.msra.mxu0 %v3983
  %4399 = vmatprep.subr.bf16.mxu0 0
  %4400 = vmatpush1.bf16.msra.mxu0 %v3984
  %4401 = vmatprep.mubr.bf16.mxu0 %v4306
  %4402 = vmatmul.mubr.bf16.gmra.mrb[0].mxu0 %v4305
  %v4403 = vpop.f32.mrb[0].mxu0
  %v4404 = vadd.f32 %v4052, %v4403
  %v4405 = vpop.f32.mrb[0].mxu0
  %v4406 = vpop.f32.mrb[0].mxu0
  %v4407 = vadd.f32 %v4057, %v4406
  %v4408 = vpop.f32.mrb[0].mxu0
  %4409 = vmatprep.mubr.bf16.mxu0 %v4308
  %4410 = vmatmul.mubr.bf16.gmra.mrb[0].mxu0 %v4307
  %v4411 = vpop.f32.mrb[0].mxu0
  %v4412 = vadd.f32 %v4062, %v4411
  %v4413 = vpop.f32.mrb[0].mxu0
  %v4414 = vpop.f32.mrb[0].mxu0
  %v4415 = vadd.f32 %v4067, %v4414
  %v4416 = vpop.f32.mrb[0].mxu0
  %4417 = vmatprep.mubr.bf16.mxu0 %v4310
  %4418 = vmatmul.mubr.bf16.gmra.mrb[0].mxu0 %v4309
  %v4419 = vpop.f32.mrb[0].mxu0
  %v4420 = vadd.f32 %v4072, %v4419
  %v4421 = vpop.f32.mrb[0].mxu0
  %v4422 = vpop.f32.mrb[0].mxu0
  %v4423 = vadd.f32 %v4077, %v4422
  %v4424 = vpop.f32.mrb[0].mxu0
  %4425 = vmatprep.mubr.bf16.mxu0 %v4312
  %4426 = vmatmul.mubr.bf16.gmra.mrb[0].mxu0 %v4311
  %v4427 = vpop.f32.mrb[0].mxu0
  %v4428 = vadd.f32 %v4082, %v4427
  %v4429 = vpop.f32.mrb[0].mxu0
  %v4430 = vpop.f32.mrb[0].mxu0
  %v4431 = vadd.f32 %v4087, %v4430
  %v4432 = vpop.f32.mrb[0].mxu0
  %4433 = vmatprep.mubr.bf16.mxu0 %v4314
  %4434 = vmatmul.mubr.bf16.gmra.mrb[0].mxu0 %v4313
  %v4435 = vpop.f32.mrb[0].mxu0
  %v4436 = vadd.f32 %v4092, %v4435
  %v4437 = vpop.f32.mrb[0].mxu0
  %v4438 = vpop.f32.mrb[0].mxu0
  %v4439 = vadd.f32 %v4097, %v4438
  %v4440 = vpop.f32.mrb[0].mxu0
  %4441 = vmatprep.mubr.bf16.mxu0 %v4316
  %4442 = vmatmul.mubr.bf16.gmra.mrb[0].mxu0 %v4315
  %v4443 = vpop.f32.mrb[0].mxu0
  %v4444 = vadd.f32 %v4102, %v4443
  %v4445 = vpop.f32.mrb[0].mxu0
  %v4446 = vpop.f32.mrb[0].mxu0
  %v4447 = vadd.f32 %v4107, %v4446
  %v4448 = vpop.f32.mrb[0].mxu0
  %4449 = vmatprep.mubr.bf16.mxu0 %v4318
  %4450 = vmatmul.mubr.bf16.gmra.mrb[0].mxu0 %v4317
  %v4451 = vpop.f32.mrb[0].mxu0
  %v4452 = vadd.f32 %v4112, %v4451
  %v4453 = vpop.f32.mrb[0].mxu0
  %v4454 = vpop.f32.mrb[0].mxu0
  %v4455 = vadd.f32 %v4117, %v4454
  %v4456 = vpop.f32.mrb[0].mxu0
  %4457 = vmatprep.mubr.bf16.mxu0 %v4320
  %4458 = vmatmul.mubr.bf16.gmra.mrb[0].mxu0 %v4319
  %v4459 = vpop.f32.mrb[0].mxu0
  %v4460 = vadd.f32 %v4122, %v4459
  %v4461 = vpop.f32.mrb[0].mxu0
  %v4462 = vpop.f32.mrb[0].mxu0
  %v4463 = vadd.f32 %v4127, %v4462
  %v4464 = vpop.f32.mrb[0].mxu0
  %4465 = vmatprep.mubr.bf16.mxu0 %v4322
  %4466 = vmatmul.mubr.bf16.gmra.mrb[0].mxu0 %v4321
  %v4467 = vpop.f32.mrb[0].mxu0
  %v4468 = vadd.f32 %v4132, %v4467
  %v4469 = vpop.f32.mrb[0].mxu0
  %v4470 = vpop.f32.mrb[0].mxu0
  %v4471 = vadd.f32 %v4137, %v4470
  %v4472 = vpop.f32.mrb[0].mxu0
  %4473 = vmatprep.mubr.bf16.mxu0 %v4324
  %4474 = vmatmul.mubr.bf16.gmra.mrb[0].mxu0 %v4323
  %v4475 = vpop.f32.mrb[0].mxu0
  %v4476 = vadd.f32 %v4142, %v4475
  %v4477 = vpop.f32.mrb[0].mxu0
  %v4478 = vpop.f32.mrb[0].mxu0
  %v4479 = vadd.f32 %v4147, %v4478
  %v4480 = vpop.f32.mrb[0].mxu0
  %4481 = vmatprep.mubr.bf16.mxu0 %v4326
  %4482 = vmatmul.mubr.bf16.gmra.mrb[0].mxu0 %v4325
  %v4483 = vpop.f32.mrb[0].mxu0
  %v4484 = vadd.f32 %v4152, %v4483
  %v4485 = vpop.f32.mrb[0].mxu0
  %v4486 = vpop.f32.mrb[0].mxu0
  %v4487 = vadd.f32 %v4157, %v4486
  %v4488 = vpop.f32.mrb[0].mxu0
  %4489 = vmatprep.mubr.bf16.mxu0 %v4328
  %4490 = vmatmul.mubr.bf16.gmra.mrb[0].mxu0 %v4327
  %v4491 = vpop.f32.mrb[0].mxu0
  %v4492 = vadd.f32 %v4162, %v4491
  %v4493 = vpop.f32.mrb[0].mxu0
  %v4494 = vpop.f32.mrb[0].mxu0
  %v4495 = vadd.f32 %v4167, %v4494
  %v4496 = vpop.f32.mrb[0].mxu0
  %4497 = vmatprep.mubr.bf16.mxu0 %v4330
  %4498 = vmatmul.mubr.bf16.gmra.mrb[0].mxu0 %v4329
  %v4499 = vpop.f32.mrb[0].mxu0
  %v4500 = vadd.f32 %v4172, %v4499
  %v4501 = vpop.f32.mrb[0].mxu0
  %v4502 = vpop.f32.mrb[0].mxu0
  %v4503 = vadd.f32 %v4177, %v4502
  %v4504 = vpop.f32.mrb[0].mxu0
  %4505 = vmatprep.mubr.bf16.mxu0 %v4332
  %4506 = vmatmul.mubr.bf16.gmra.mrb[0].mxu0 %v4331
  %v4507 = vpop.f32.mrb[0].mxu0
  %v4508 = vadd.f32 %v4182, %v4507
  %v4509 = vpop.f32.mrb[0].mxu0
  %v4510 = vpop.f32.mrb[0].mxu0
  %v4511 = vadd.f32 %v4187, %v4510
  %v4512 = vpop.f32.mrb[0].mxu0
  %4513 = vmatprep.mubr.bf16.mxu0 %v4334
  %4514 = vmatmul.mubr.bf16.gmra.mrb[0].mxu0 %v4333
  %v4515 = vpop.f32.mrb[0].mxu0
  %v4516 = vadd.f32 %v4192, %v4515
  %v4517 = vpop.f32.mrb[0].mxu0
  %v4518 = vpop.f32.mrb[0].mxu0
  %v4519 = vadd.f32 %v4197, %v4518
  %v4520 = vpop.f32.mrb[0].mxu0
  %4521 = vmatprep.mubr.bf16.mxu0 %v4336
  %4522 = vmatmul.mubr.bf16.gmra.mrb[0].mxu0 %v4335
  %v4523 = vpop.f32.mrb[0].mxu0
  %v4524 = vadd.f32 %v4202, %v4523
  %v4525 = vpop.f32.mrb[0].mxu0
  %v4526 = vpop.f32.mrb[0].mxu0
  %v4527 = vadd.f32 %v4207, %v4526
  %v4528 = vpop.f32.mrb[0].mxu0
  %4529 = vdwg.mxu0
  %v4530 = vmax.f32 %v4404, 0.0
  %v4531 = vmax.f32 %v4407, 0.0
  %v4532 = vmax.f32 %v4412, 0.0
  %v4533 = vmax.f32 %v4415, 0.0
  %v4534 = vmax.f32 %v4420, 0.0
  %v4535 = vmax.f32 %v4423, 0.0
  %v4536 = vmax.f32 %v4428, 0.0
  %v4537 = vmax.f32 %v4431, 0.0
  %v4538 = vmax.f32 %v4436, 0.0
  %v4539 = vmax.f32 %v4439, 0.0
  %v4540 = vmax.f32 %v4444, 0.0
  %v4541 = vmax.f32 %v4447, 0.0
  %v4542 = vmax.f32 %v4452, 0.0
  %v4543 = vmax.f32 %v4455, 0.0
  %v4544 = vmax.f32 %v4460, 0.0
  %v4545 = vmax.f32 %v4463, 0.0
  %v4546 = vmax.f32 %v4468, 0.0
  %v4547 = vmax.f32 %v4471, 0.0
  %v4548 = vmax.f32 %v4476, 0.0
  %v4549 = vmax.f32 %v4479, 0.0
  %v4550 = vmax.f32 %v4484, 0.0
  %v4551 = vmax.f32 %v4487, 0.0
  %v4552 = vmax.f32 %v4492, 0.0
  %v4553 = vmax.f32 %v4495, 0.0
  %v4554 = vmax.f32 %v4500, 0.0
  %v4555 = vmax.f32 %v4503, 0.0
  %v4556 = vmax.f32 %v4508, 0.0
  %v4557 = vmax.f32 %v4511, 0.0
  %v4558 = vmax.f32 %v4516, 0.0
  %v4559 = vmax.f32 %v4519, 0.0
  %v4560 = vmax.f32 %v4524, 0.0
  %v4561 = vmax.f32 %v4527, 0.0
  %v4562 = vpack.c.bf16 %v4531, %v4530
  %v4563 = vpack.c.bf16 %v4533, %v4532
  %v4564 = vpack.c.bf16 %v4535, %v4534
  %v4565 = vpack.c.bf16 %v4537, %v4536
  %v4566 = vpack.c.bf16 %v4539, %v4538
  %v4567 = vpack.c.bf16 %v4541, %v4540
  %v4568 = vpack.c.bf16 %v4543, %v4542
  %v4569 = vpack.c.bf16 %v4545, %v4544
  %v4570 = vpack.c.bf16 %v4547, %v4546
  %v4571 = vpack.c.bf16 %v4549, %v4548
  %v4572 = vpack.c.bf16 %v4551, %v4550
  %v4573 = vpack.c.bf16 %v4553, %v4552
  %v4574 = vpack.c.bf16 %v4555, %v4554
  %v4575 = vpack.c.bf16 %v4557, %v4556
  %v4576 = vpack.c.bf16 %v4559, %v4558
  %v4577 = vpack.c.bf16 %v4561, %v4560
  %v4578 = vld [vmem:[%s6] sm:$0xff]
  %v4579 = vld [vmem:[%s6 + $0x8] sm:$0xff]
  %v4580 = vld [vmem:[%s6 + $0x10] sm:$0x77]
  %v4581 = vld [vmem:[%s7] sm:$0xff]
  %v4582 = vld [vmem:[%s7 + $0x8] sm:$0xff]
  %v4583 = vld [vmem:[%s7 + $0x10] sm:$0x1f]
  %4585 = vset.pattern.permute.xlu0 0
  %4586 = vperm.xlu0 %4585, %v4581
  %v4587 = vpop.permute.xlu0 %4586
  %4590 = vset.pattern.permute.xlu0 0
  %4591 = vperm.xlu0 %4590, %v4582
  %v4592 = vpop.permute.xlu0 %4591
  %4595 = vset.pattern.permute.xlu0 0
  %4596 = vperm.xlu0 %4595, %v4583
  %v4597 = vpop.permute.xlu0 %4596
  %v4602 = vunpack.c.l.b16 %v4578
  %v4603 = vunpack.c.h.b16 %v4578
  %v4604 = vunpack.c.l.b16 %v4579
  %v4605 = vunpack.c.h.b16 %v4579
  %v4606 = vunpack.c.l.b16 %v4580
  %v4607 = vunpack.c.h.b16 %v4580
  %v4608 = vpack.c.b16 %v4604, %v4602
  %v4609 = vpack.c.b16 %v4605, %v4603
  %v4610 = vpack.c.b16 %v4606, %v4606
  %v4611 = vpack.c.b16 %v4607, %v4607
  %4616 = vmatprep.subr.bf16.mxu0 0
  %4617 = vmatpush1.bf16.msra.mxu0 %v4562
  %4618 = vmatprep.subr.bf16.mxu0 0
  %4619 = vmatpush1.bf16.msra.mxu0 %v4563
  %4620 = vmatprep.subr.bf16.mxu0 0
  %4621 = vmatpush1.bf16.msra.mxu0 %v4564
  %4622 = vmatprep.subr.bf16.mxu0 0
  %4623 = vmatpush1.bf16.msra.mxu0 %v4565
  %4624 = vmatprep.subr.bf16.mxu0 0
  %4625 = vmatpush1.bf16.msra.mxu0 %v4566
  %4626 = vmatprep.subr.bf16.mxu0 0
  %4627 = vmatpush1.bf16.msra.mxu0 %v4567
  %4628 = vmatprep.subr.bf16.mxu0 0
  %4629 = vmatpush1.bf16.msra.mxu0 %v4568
  %4630 = vmatprep.subr.bf16.mxu0 0
  %4631 = vmatpush1.bf16.msra.mxu0 %v4569
  %4632 = vmatprep.subr.bf16.mxu0 0
  %4633 = vmatpush1.bf16.msra.mxu0 %v4570
  %4634 = vmatprep.subr.bf16.mxu0 0
  %4635 = vmatpush1.bf16.msra.mxu0 %v4571
  %4636 = vmatprep.subr.bf16.mxu0 0
  %4637 = vmatpush1.bf16.msra.mxu0 %v4572
  %4638 = vmatprep.subr.bf16.mxu0 0
  %4639 = vmatpush1.bf16.msra.mxu0 %v4573
  %4640 = vmatprep.subr.bf16.mxu0 0
  %4641 = vmatpush1.bf16.msra.mxu0 %v4574
  %4642 = vmatprep.subr.bf16.mxu0 0
  %4643 = vmatpush1.bf16.msra.mxu0 %v4575
  %4644 = vmatprep.subr.bf16.mxu0 0
  %4645 = vmatpush1.bf16.msra.mxu0 %v4576
  %4646 = vmatprep.subr.bf16.mxu0 0
  %4647 = vmatpush1.bf16.msra.mxu0 %v4577
  %4648 = vmatprep.mubr.bf16.mxu0 %v4609
  %4649 = vmatmul.mubr.bf16.gmra.mrb[0].mxu0 %v4608
  %v4650 = vpop.f32.mrb[0].mxu0
  %v4651 = vadd.f32 %v4587, %v4650
  %v4652 = vpop.f32.mrb[0].mxu0
  %v4653 = vpop.f32.mrb[0].mxu0
  %v4654 = vadd.f32 %v4592, %v4653
  %v4655 = vpop.f32.mrb[0].mxu0
  %4656 = vmatprep.mubr.bf16.mxu0 %v4611
  %4657 = vmatmul.mubr.bf16.gmra.mrb[0].mxu0 %v4610
  %v4658 = vpop.f32.mrb[0].mxu0
  %v4659 = vadd.f32 %v4597, %v4658
  %v4660 = vpop.f32.mrb[0].mxu0
  %v4661 = vpop.f32.mrb[0].mxu0
  %v4662 = vpop.f32.mrb[0].mxu0
  %4663 = vdwg.mxu0
  %4664 = vst [vmem:[%s8] sm:$0xff] %v4651
  %4665 = vst [vmem:[%s8 + $0x8] sm:$0xff] %v4654
  %4666 = vst [vmem:[%s8 + $0x10] sm:$0x1f] %v4659
  // Predicated region
  $region34: #{tpu_custom_call.1} parent=0 // pred_check
    _
  $region35: #{tpu_custom_call.1} parent=0 // pred_check_branch
    %4668 = sbr.rel (0) target = $region37
  $region36: #{tpu_custom_call.1} parent=0 // pred_region
    _
  $region37: #{tpu_custom_call.1} parent=0 // pred_fallthru
    _
  // Predicated region
  $region38: #{tpu_custom_call.1} parent=0 // pred_check
    _
  $region39: #{tpu_custom_call.1} parent=0 // pred_check_branch
    %4670 = sbr.rel (0) target = $region41
  $region40: #{tpu_custom_call.1} parent=0 // pred_region
    _
  $region41: #{tpu_custom_call.1} parent=0 // pred_fallthru
    _

</llo_original>
